<compile_context>
chip_gen: v5e
topology: v5e:2x2
jax: 0.10.0
libtpu: 0.0.40
codegen_flags: <defaults>
</compile_context>

<pallas_src>
import jax
import jax.numpy as jnp
from jax.experimental import pallas as pl
from jax.experimental.pallas import tpu as pltpu


# ---------------------------------------------------------------------------
# Fused forward kernel: one grid step per batch element.
# ---------------------------------------------------------------------------
def _make_kernel(H, W, C):
    WC = W * C

    def kernel(x_ref, bands_ref, bias_ref, bsa_ref,
               gpix_ref, gpixt_ref, gch_ref, gcht_ref,
               wfc_ref, bfc_ref, wf0_ref, bf0_ref, wf1_ref, bf1_ref,
               alpha_ref, o_ref, xp_scr, mp_scr):
        # Zero the padded scratch buffers every step (scratch persists across
        # grid steps and the grid may be split across cores, so no
        # program_id==0 guard).  Pad rows stay zero; interior rows are
        # overwritten before every use.
        xp_scr[...] = jnp.zeros_like(xp_scr)
        mp_scr[...] = jnp.zeros_like(mp_scr)

        def conv3x3(act, idx):
            """'same' 3x3 conv in lane-dense (H, W*C) layout.

            Three banded (W*C, W*C) bf16 MXU matmuls (one per kernel row);
            the band matrix encodes the kw shifts + zero padding in W, the
            scratch rows 0 / H+1 give the zero padding in H.
            """
            xp_scr[1:H + 1, :] = act.astype(jnp.bfloat16)
            acc = jnp.zeros((H, WC), jnp.float32)
            for kh in range(3):
                acc = acc + jnp.dot(
                    xp_scr[kh:kh + H, :],
                    bands_ref[idx, kh],
                    preferred_element_type=jnp.float32)
            return acc + bias_ref[idx]

        def prelu(v, a):
            return jnp.where(v >= 0, v, a * v)

        x_row = x_ref[0]                                        # (H, W*C) f32

        # ---- EGRAB body: conv3x3 -> PReLU -> conv3x3 ----
        h = conv3x3(prelu(conv3x3(x_row, 0), alpha_ref[0]), 1)

        # ---- recon_trunk = ResidualBlock_noBN: h + conv(prelu(conv(h))) ----
        out = h + conv3x3(prelu(conv3x3(h, 2), alpha_ref[1]), 3)

        # ---- edge branches + concat + conv_reduce (folded into one conv) ----
        feas0 = conv3x3(h, 4)

        # ---- SpatialAttention: channel mean / max -> 7x7 conv -> sigmoid ----
        # per-pixel channel mean via MXU (0/1 group matrix scaled by 1/C)
        avg = jnp.dot(feas0, gpix_ref[...],
                      preferred_element_type=jnp.float32)       # (H, W)
        mp_scr[3:3 + H, 0:W] = avg
        # per-pixel channel max: one 16-lane group reduce per output column
        for w in range(W):
            mp_scr[3:3 + H, W + w:W + w + 1] = jnp.max(
                feas0[:, w * C:(w + 1) * C], axis=-1, keepdims=True)
        # 7x7 conv on the 2-channel [avg | max] map as 7 banded matmuls
        sa = jnp.zeros((H, W), jnp.float32)
        for kh in range(7):
            sa = sa + jnp.dot(mp_scr[kh:kh + H, :], bsa_ref[kh],
                              preferred_element_type=jnp.float32)
        att_map = jax.nn.sigmoid(sa)                            # (H, W)
        feas = feas0 * jnp.dot(att_map, gpixt_ref[...],
                               preferred_element_type=jnp.float32)

        # ---- SK channel attention over {out, feas} + EGRAB skip (res += x) --
        u_sum = jnp.sum(out + feas, axis=0, keepdims=True)      # (1, W*C)
        s = jnp.dot(u_sum, gch_ref[...],
                    preferred_element_type=jnp.float32) * (1.0 / (H * W))
        z = jnp.dot(s, wfc_ref[...],
                    preferred_element_type=jnp.float32) + bfc_ref[...]
        a0 = jnp.dot(z, wf0_ref[...],
                     preferred_element_type=jnp.float32) + bf0_ref[...]
        a1 = jnp.dot(z, wf1_ref[...],
                     preferred_element_type=jnp.float32) + bf1_ref[...]
        m = jnp.maximum(a0, a1)                                 # softmax, M=2
        e0 = jnp.exp(a0 - m)
        e1 = jnp.exp(a1 - m)
        inv = pl.reciprocal(e0 + e1, approx=True)               # EUP, not VPU
        att0 = jnp.dot(e0 * inv, gcht_ref[...],
                       preferred_element_type=jnp.float32)      # (1, W*C)
        att1 = jnp.dot(e1 * inv, gcht_ref[...],
                       preferred_element_type=jnp.float32)
        o_ref[0] = (out * att0 + feas * att1 + x_row).astype(o_ref.dtype)

    return kernel


# ---------------------------------------------------------------------------
# Wrapper-side (tiny) parameter preprocessing: banded matmul weights, edge
# folding, constant gather/broadcast matrices.
# ---------------------------------------------------------------------------
def _band3(w3, W):
    """(3,3,Cin,Cout) HWIO 3x3 conv -> per-kh banded (W*Cin, W*Cout) matrices."""
    kw = jnp.arange(3)[:, None, None]
    wp = jnp.arange(W)[None, :, None]
    wo = jnp.arange(W)[None, None, :]
    sel = (wp == wo + kw - 1).astype(w3.dtype)            # (3, W, W)
    band = jnp.einsum('kpw,hkio->hpiwo', sel, w3)         # (3, W, Cin, W, Cout)
    return band.reshape(3, W * w3.shape[2], W * w3.shape[3])


def _band_sa(wsa, W):
    """(7,7,2) SA conv weight -> per-kh banded (2W, W) matrices."""
    kw = jnp.arange(7)[:, None, None]
    wp = jnp.arange(W)[None, :, None]
    wo = jnp.arange(W)[None, None, :]
    sel = (wp == wo + kw - 3).astype(wsa.dtype)           # (7, W, W)
    band = jnp.einsum('kpw,hkc->hcpw', sel, wsa)          # (7, 2, W, W)
    return band.reshape(7, 2 * W, W)


@jax.jit
def egrab_forward(x, p):
    """x: (N, H, W, C) NHWC float32 -> (N, H, W, C)."""
    N, H, W, C = x.shape
    WC = W * C
    d = p['wfc'].shape[1]

    # ---- fold the 3 edge branches + concat + 1x1 conv_reduce (exact) ----
    wr2 = p['wr'].reshape(3 * C, C)
    w_eq = jnp.zeros((3, 3, C, C), jnp.float32)
    b_eq = p['br']
    for i in range(3):
        wr_i = wr2[i * C:(i + 1) * C]                     # (C, C)
        w_eq = w_eq + jnp.einsum('im,hwm,mo->hwio',
                                 p['ec_k0'][i], p['ec_weff'][i], wr_i)
        b_eq = b_eq + p['ec_b'][i] @ wr_i

    # ---- banded per-kh matmul weights (bf16 MXU operands, f32 accum) ----
    conv_ws = [p['w_b0'], p['w_b1'], p['rt_w1'], p['rt_w2'], w_eq]
    conv_bs = [p['b_b0'], p['b_b1'], p['rt_b1'], p['rt_b2'], b_eq]
    bands = jnp.stack([_band3(w, W) for w in conv_ws]).astype(jnp.bfloat16)
    biases = jnp.stack([jnp.tile(b, W) for b in conv_bs]).reshape(5, 1, WC)
    bsa = _band_sa(p['w_sa'], W)

    # ---- constant pixel/channel gather & broadcast matrices ----
    lane = jnp.arange(WC)
    pix, ch = lane // C, lane % C
    gpix = (pix[:, None] == jnp.arange(W)[None, :]).astype(jnp.float32) / C
    gpixt = (jnp.arange(W)[:, None] == pix[None, :]).astype(jnp.float32)
    gch = (ch[:, None] == jnp.arange(C)[None, :]).astype(jnp.float32)
    gcht = (jnp.arange(C)[:, None] == ch[None, :]).astype(jnp.float32)

    x_row = x.reshape(N, H, WC)                           # lane-dense rows

    def full(shape):
        return pl.BlockSpec(shape, lambda n, _s=shape: (0,) * len(_s))

    y = pl.pallas_call(
        _make_kernel(H, W, C),
        out_shape=jax.ShapeDtypeStruct((N, H, WC), jnp.float32),
        grid=(N,),
        in_specs=[
            pl.BlockSpec((1, H, WC), lambda n: (n, 0, 0)),       # x
            full((5, 3, WC, WC)),                                # conv bands
            full((5, 1, WC)),                                    # tiled biases
            full((7, 2 * W, W)),                                 # SA bands
            full((WC, W)), full((W, WC)),                        # gpix, gpixT
            full((WC, C)), full((C, WC)),                        # gch, gchT
            full((C, d)), full((1, d)),                          # fc
            full((d, C)), full((1, C)),                          # fcs[0]
            full((d, C)), full((1, C)),                          # fcs[1]
            pl.BlockSpec(memory_space=pltpu.MemorySpace.SMEM),   # prelu alphas
        ],
        out_specs=pl.BlockSpec((1, H, WC), lambda n: (n, 0, 0)),
        scratch_shapes=[pltpu.VMEM((H + 2, WC), jnp.bfloat16),   # H-padded act
                        pltpu.VMEM((H + 6, 2 * W), jnp.float32)],  # SA map
        compiler_params=pltpu.CompilerParams(
            dimension_semantics=("parallel",)),                  # v7x: 2 TCs
    )(x_row, bands, biases, bsa, gpix, gpixt, gch, gcht,
      p['wfc'], p['bfc'].reshape(1, d),
      p['wf0'], p['bf0'].reshape(1, C),
      p['wf1'], p['bf1'].reshape(1, C),
      p['alpha'])
    return y.reshape(N, H, W, C)


# ---------------------------------------------------------------------------
# Deterministic synthetic parameter initialization (raw module parameters).
# ---------------------------------------------------------------------------
EDGE_MASKS = {
    'sobelx': jnp.array([[1., 0., -1.], [2., 0., -2.], [1., 0., -1.]], jnp.float32),
    'sobely': jnp.array([[1., 2., 1.], [0., 0., 0.], [-1., -2., -1.]], jnp.float32),
    'laplacian': jnp.array([[0., 1., 0.], [1., -4., 1.], [0., 1., 0.]], jnp.float32),
}


def init_params(key, C, d):
    keys = iter(jax.random.split(key, 40))

    def nrm(shape, scale=0.05):
        return (scale * jax.random.normal(next(keys), shape)).astype(jnp.float32)

    p = {}
    # EGRAB body convs (kernel_size = 3, HWIO layout)
    p['w_b0'] = nrm((3, 3, C, C)); p['b_b0'] = nrm((C,))
    p['w_b1'] = nrm((3, 3, C, C)); p['b_b1'] = nrm((C,))
    # recon_trunk (ResidualBlock_noBN)
    p['rt_w1'] = nrm((3, 3, C, C)); p['rt_b1'] = nrm((C,))
    p['rt_w2'] = nrm((3, 3, C, C)); p['rt_b2'] = nrm((C,))
    # edge convs (sobelx / sobely / laplacian): 1x1 weight, per-ch scale, bias
    p['ec_k0'], p['ec_weff'], p['ec_b'] = [], [], []
    for name in ('sobelx', 'sobely', 'laplacian'):
        k0 = nrm((C, C))
        scale = nrm((C,), scale=0.1)
        bias = nrm((C,), scale=0.1)
        p['ec_k0'].append(k0)
        p['ec_weff'].append(scale[None, None, :] * EDGE_MASKS[name][:, :, None])
        p['ec_b'].append(bias)
    # conv_reduce 1x1 : 3C -> C
    p['wr'] = nrm((1, 1, 3 * C, C)); p['br'] = nrm((C,))
    # spatial attention 7x7, 2->1 (channel 0 = avg map, channel 1 = max map)
    p['w_sa'] = nrm((7, 7, 2))
    # channel attention:  fc (C -> d), fcs[0], fcs[1] (d -> C)
    p['wfc'] = nrm((C, d)); p['bfc'] = nrm((d,))
    p['wf0'] = nrm((d, C)); p['bf0'] = nrm((C,))
    p['wf1'] = nrm((d, C)); p['bf1'] = nrm((C,))
    # PReLU slopes: [body act, recon_trunk act] (nn.PReLU() default init 0.25)
    p['alpha'] = jnp.array([0.25, 0.25], jnp.float32)
    return p


if __name__ == "__main__":
    N, C, H, W = 2, 16, 16, 16                 # n_feat = 16, kernel_size = 3
    d = max(C // 2, 32)                        # CoreModule: r=2, L=32 -> d=32

    key = jax.random.PRNGKey(0)
    pkey, xkey = jax.random.split(key)
    params = init_params(pkey, C, d)

    x_nchw = jax.random.normal(xkey, (N, C, H, W), jnp.float32)  # PyTorch layout
    x = jnp.transpose(x_nchw, (0, 2, 3, 1))                      # NHWC for kernel

    y = jax.block_until_ready(egrab_forward(x, params))
    assert y.shape == (N, H, W, C) and y.dtype == jnp.float32
    assert bool(jnp.all(jnp.isfinite(y)))
    print("KERNEL_OK")
</pallas_src>

<mosaic_0001>
module attributes {stable_mosaic.version = 11 : i64} {
  func.func @kernel(%arg0: i32, %arg1: memref<1x16x256xf32, #tpu.memory_space<vmem>>, %arg2: memref<5x3x256x256xbf16, #tpu.memory_space<vmem>>, %arg3: memref<5x1x256xf32, #tpu.memory_space<vmem>>, %arg4: memref<7x32x16xf32, #tpu.memory_space<vmem>>, %arg5: memref<256x16xf32, #tpu.memory_space<vmem>>, %arg6: memref<16x256xf32, #tpu.memory_space<vmem>>, %arg7: memref<256x16xf32, #tpu.memory_space<vmem>>, %arg8: memref<16x256xf32, #tpu.memory_space<vmem>>, %arg9: memref<16x32xf32, #tpu.memory_space<vmem>>, %arg10: memref<1x32xf32, #tpu.memory_space<vmem>>, %arg11: memref<32x16xf32, #tpu.memory_space<vmem>>, %arg12: memref<1x16xf32, #tpu.memory_space<vmem>>, %arg13: memref<32x16xf32, #tpu.memory_space<vmem>>, %arg14: memref<1x16xf32, #tpu.memory_space<vmem>>, %arg15: memref<2xf32, #tpu.memory_space<smem>>, %arg16: memref<1x16x256xf32, #tpu.memory_space<vmem>>, %arg17: memref<18x256xbf16, #tpu.memory_space<vmem>>, %arg18: memref<22x32xf32, #tpu.memory_space<vmem>>) attributes {dimension_semantics = [#tpu.dimension_semantics<parallel>], iteration_bounds = array<i64: 2>, scalar_prefetch = 0 : i64, scratch_operands = 2 : i64, tpu.core_type = #tpu.core_type<tc>, window_params = [{transform_indices = @transform_0, window_bounds = array<i64: 1, 16, 256>}, {pipeline_mode = #tpu.pipeline_mode<synchronous>, transform_indices = @transform_1, window_bounds = array<i64: 5, 3, 256, 256>}, {pipeline_mode = #tpu.pipeline_mode<synchronous>, transform_indices = @transform_2, window_bounds = array<i64: 5, 1, 256>}, {pipeline_mode = #tpu.pipeline_mode<synchronous>, transform_indices = @transform_3, window_bounds = array<i64: 7, 32, 16>}, {pipeline_mode = #tpu.pipeline_mode<synchronous>, transform_indices = @transform_4, window_bounds = array<i64: 256, 16>}, {pipeline_mode = #tpu.pipeline_mode<synchronous>, transform_indices = @transform_5, window_bounds = array<i64: 16, 256>}, {pipeline_mode = #tpu.pipeline_mode<synchronous>, transform_indices = @transform_6, window_bounds = array<i64: 256, 16>}, {pipeline_mode = #tpu.pipeline_mode<synchronous>, transform_indices = @transform_7, window_bounds = array<i64: 16, 256>}, {pipeline_mode = #tpu.pipeline_mode<synchronous>, transform_indices = @transform_8, window_bounds = array<i64: 16, 32>}, {pipeline_mode = #tpu.pipeline_mode<synchronous>, transform_indices = @transform_9, window_bounds = array<i64: 1, 32>}, {pipeline_mode = #tpu.pipeline_mode<synchronous>, transform_indices = @transform_10, window_bounds = array<i64: 32, 16>}, {pipeline_mode = #tpu.pipeline_mode<synchronous>, transform_indices = @transform_11, window_bounds = array<i64: 1, 16>}, {pipeline_mode = #tpu.pipeline_mode<synchronous>, transform_indices = @transform_12, window_bounds = array<i64: 32, 16>}, {pipeline_mode = #tpu.pipeline_mode<synchronous>, transform_indices = @transform_13, window_bounds = array<i64: 1, 16>}, {transform_indices = @transform_14, window_bounds = array<i64: 2>}, {transform_indices = @transform_15, window_bounds = array<i64: 1, 16, 256>}]} {
    %cst = arith.constant 0.000000e+00 : bf16
    %0 = vector.broadcast %cst : bf16 to vector<18x256xbf16>
    %c0 = arith.constant 0 : index
    %c0_0 = arith.constant 0 : index
    %1 = vector.load %arg17[%c0, %c0_0] : memref<18x256xbf16, #tpu.memory_space<vmem>>, vector<18x256xbf16>
    tpu.vector_store %arg17[%c0, %c0_0], %0 {strides = array<i32>} : memref<18x256xbf16, #tpu.memory_space<vmem>>, vector<18x256xbf16>,
    %cst_1 = arith.constant 0.000000e+00 : f32
    %2 = vector.broadcast %cst_1 : f32 to vector<22x32xf32>
    %c0_2 = arith.constant 0 : index
    %c0_3 = arith.constant 0 : index
    %3 = vector.load %arg18[%c0_2, %c0_3] : memref<22x32xf32, #tpu.memory_space<vmem>>, vector<22x32xf32>
    tpu.vector_store %arg18[%c0_2, %c0_3], %2 {strides = array<i32>} : memref<22x32xf32, #tpu.memory_space<vmem>>, vector<22x32xf32>,
    %c0_4 = arith.constant 0 : index
    %c0_5 = arith.constant 0 : index
    %c0_6 = arith.constant 0 : index
    %4 = vector.load %arg1[%c0_4, %c0_5, %c0_6] : memref<1x16x256xf32, #tpu.memory_space<vmem>>, vector<1x16x256xf32>
    %5 = vector.shape_cast %4 : vector<1x16x256xf32> to vector<16x256xf32>
    %6 = arith.truncf %5 : vector<16x256xf32> to vector<16x256xbf16>
    %c1 = arith.constant 1 : index
    %c0_7 = arith.constant 0 : index
    %7 = vector.load %arg17[%c1, %c0_7] : memref<18x256xbf16, #tpu.memory_space<vmem>>, vector<16x256xbf16>
    tpu.vector_store %arg17[%c1, %c0_7], %6 {strides = array<i32>} : memref<18x256xbf16, #tpu.memory_space<vmem>>, vector<16x256xbf16>,
    %cst_8 = arith.constant 0.000000e+00 : f32
    %8 = vector.broadcast %cst_8 : f32 to vector<16x256xf32>
    %c0_9 = arith.constant 0 : index
    %c0_10 = arith.constant 0 : index
    %9 = vector.load %arg17[%c0_9, %c0_10] : memref<18x256xbf16, #tpu.memory_space<vmem>>, vector<16x256xbf16>
    %c0_11 = arith.constant 0 : index
    %c0_12 = arith.constant 0 : index
    %c0_13 = arith.constant 0 : index
    %c0_14 = arith.constant 0 : index
    %10 = vector.load %arg2[%c0_11, %c0_12, %c0_13, %c0_14] : memref<5x3x256x256xbf16, #tpu.memory_space<vmem>>, vector<1x1x256x256xbf16>
    %11 = vector.shape_cast %10 : vector<1x1x256x256xbf16> to vector<256x256xbf16>
    %cst_15 = arith.constant dense<0.000000e+00> : vector<16x256xf32>
    %12 = tpu.matmul %9, %11, %cst_15 {dimension_numbers = #tpu.dot_dimension_numbers<[1], [0], [0], [1], [0, 0, 1, 1], [], []>} : vector<16x256xbf16>, vector<256x256xbf16>, vector<16x256xf32> -> vector<16x256xf32>
    %13 = arith.addf %8, %12 : vector<16x256xf32>
    %c1_16 = arith.constant 1 : index
    %c0_17 = arith.constant 0 : index
    %14 = vector.load %arg17[%c1_16, %c0_17] : memref<18x256xbf16, #tpu.memory_space<vmem>>, vector<16x256xbf16>
    %c0_18 = arith.constant 0 : index
    %c1_19 = arith.constant 1 : index
    %c0_20 = arith.constant 0 : index
    %c0_21 = arith.constant 0 : index
    %15 = vector.load %arg2[%c0_18, %c1_19, %c0_20, %c0_21] : memref<5x3x256x256xbf16, #tpu.memory_space<vmem>>, vector<1x1x256x256xbf16>
    %16 = vector.shape_cast %15 : vector<1x1x256x256xbf16> to vector<256x256xbf16>
    %cst_22 = arith.constant dense<0.000000e+00> : vector<16x256xf32>
    %17 = tpu.matmul %14, %16, %cst_22 {dimension_numbers = #tpu.dot_dimension_numbers<[1], [0], [0], [1], [0, 0, 1, 1], [], []>} : vector<16x256xbf16>, vector<256x256xbf16>, vector<16x256xf32> -> vector<16x256xf32>
    %18 = arith.addf %13, %17 : vector<16x256xf32>
    %c2 = arith.constant 2 : index
    %c0_23 = arith.constant 0 : index
    %19 = vector.load %arg17[%c2, %c0_23] : memref<18x256xbf16, #tpu.memory_space<vmem>>, vector<16x256xbf16>
    %c0_24 = arith.constant 0 : index
    %c2_25 = arith.constant 2 : index
    %c0_26 = arith.constant 0 : index
    %c0_27 = arith.constant 0 : index
    %20 = vector.load %arg2[%c0_24, %c2_25, %c0_26, %c0_27] : memref<5x3x256x256xbf16, #tpu.memory_space<vmem>>, vector<1x1x256x256xbf16>
    %21 = vector.shape_cast %20 : vector<1x1x256x256xbf16> to vector<256x256xbf16>
    %cst_28 = arith.constant dense<0.000000e+00> : vector<16x256xf32>
    %22 = tpu.matmul %19, %21, %cst_28 {dimension_numbers = #tpu.dot_dimension_numbers<[1], [0], [0], [1], [0, 0, 1, 1], [], []>} : vector<16x256xbf16>, vector<256x256xbf16>, vector<16x256xf32> -> vector<16x256xf32>
    %23 = arith.addf %18, %22 : vector<16x256xf32>
    %c0_29 = arith.constant 0 : index
    %c0_30 = arith.constant 0 : index
    %c0_31 = arith.constant 0 : index
    %24 = vector.load %arg3[%c0_29, %c0_30, %c0_31] : memref<5x1x256xf32, #tpu.memory_space<vmem>>, vector<1x1x256xf32>
    %25 = vector.shape_cast %24 : vector<1x1x256xf32> to vector<1x256xf32>
    %26 = vector.broadcast %25 : vector<1x256xf32> to vector<16x256xf32>
    %27 = arith.addf %23, %26 : vector<16x256xf32>
    %c0_32 = arith.constant 0 : index
    %28 = memref.load %arg15[%c0_32] : memref<2xf32, #tpu.memory_space<smem>>
    %cst_33 = arith.constant 0.000000e+00 : f32
    %29 = vector.broadcast %cst_33 : f32 to vector<16x256xf32>
    %30 = arith.cmpf oge, %27, %29 : vector<16x256xf32>
    %31 = vector.broadcast %28 : f32 to vector<16x256xf32>
    %32 = arith.mulf %31, %27 : vector<16x256xf32>
    %33 = arith.select %30, %27, %32 : vector<16x256xi1>, vector<16x256xf32>
    %34 = arith.truncf %33 : vector<16x256xf32> to vector<16x256xbf16>
    %c1_34 = arith.constant 1 : index
    %c0_35 = arith.constant 0 : index
    %35 = vector.load %arg17[%c1_34, %c0_35] : memref<18x256xbf16, #tpu.memory_space<vmem>>, vector<16x256xbf16>
    tpu.vector_store %arg17[%c1_34, %c0_35], %34 {strides = array<i32>} : memref<18x256xbf16, #tpu.memory_space<vmem>>, vector<16x256xbf16>,
    %cst_36 = arith.constant 0.000000e+00 : f32
    %36 = vector.broadcast %cst_36 : f32 to vector<16x256xf32>
    %c0_37 = arith.constant 0 : index
    %c0_38 = arith.constant 0 : index
    %37 = vector.load %arg17[%c0_37, %c0_38] : memref<18x256xbf16, #tpu.memory_space<vmem>>, vector<16x256xbf16>
    %c1_39 = arith.constant 1 : index
    %c0_40 = arith.constant 0 : index
    %c0_41 = arith.constant 0 : index
    %c0_42 = arith.constant 0 : index
    %38 = vector.load %arg2[%c1_39, %c0_40, %c0_41, %c0_42] : memref<5x3x256x256xbf16, #tpu.memory_space<vmem>>, vector<1x1x256x256xbf16>
    %39 = vector.shape_cast %38 : vector<1x1x256x256xbf16> to vector<256x256xbf16>
    %cst_43 = arith.constant dense<0.000000e+00> : vector<16x256xf32>
    %40 = tpu.matmul %37, %39, %cst_43 {dimension_numbers = #tpu.dot_dimension_numbers<[1], [0], [0], [1], [0, 0, 1, 1], [], []>} : vector<16x256xbf16>, vector<256x256xbf16>, vector<16x256xf32> -> vector<16x256xf32>
    %41 = arith.addf %36, %40 : vector<16x256xf32>
    %c1_44 = arith.constant 1 : index
    %c0_45 = arith.constant 0 : index
    %42 = vector.load %arg17[%c1_44, %c0_45] : memref<18x256xbf16, #tpu.memory_space<vmem>>, vector<16x256xbf16>
    %c1_46 = arith.constant 1 : index
    %c1_47 = arith.constant 1 : index
    %c0_48 = arith.constant 0 : index
    %c0_49 = arith.constant 0 : index
    %43 = vector.load %arg2[%c1_46, %c1_47, %c0_48, %c0_49] : memref<5x3x256x256xbf16, #tpu.memory_space<vmem>>, vector<1x1x256x256xbf16>
    %44 = vector.shape_cast %43 : vector<1x1x256x256xbf16> to vector<256x256xbf16>
    %cst_50 = arith.constant dense<0.000000e+00> : vector<16x256xf32>
    %45 = tpu.matmul %42, %44, %cst_50 {dimension_numbers = #tpu.dot_dimension_numbers<[1], [0], [0], [1], [0, 0, 1, 1], [], []>} : vector<16x256xbf16>, vector<256x256xbf16>, vector<16x256xf32> -> vector<16x256xf32>
    %46 = arith.addf %41, %45 : vector<16x256xf32>
    %c2_51 = arith.constant 2 : index
    %c0_52 = arith.constant 0 : index
    %47 = vector.load %arg17[%c2_51, %c0_52] : memref<18x256xbf16, #tpu.memory_space<vmem>>, vector<16x256xbf16>
    %c1_53 = arith.constant 1 : index
    %c2_54 = arith.constant 2 : index
    %c0_55 = arith.constant 0 : index
    %c0_56 = arith.constant 0 : index
    %48 = vector.load %arg2[%c1_53, %c2_54, %c0_55, %c0_56] : memref<5x3x256x256xbf16, #tpu.memory_space<vmem>>, vector<1x1x256x256xbf16>
    %49 = vector.shape_cast %48 : vector<1x1x256x256xbf16> to vector<256x256xbf16>
    %cst_57 = arith.constant dense<0.000000e+00> : vector<16x256xf32>
    %50 = tpu.matmul %47, %49, %cst_57 {dimension_numbers = #tpu.dot_dimension_numbers<[1], [0], [0], [1], [0, 0, 1, 1], [], []>} : vector<16x256xbf16>, vector<256x256xbf16>, vector<16x256xf32> -> vector<16x256xf32>
    %51 = arith.addf %46, %50 : vector<16x256xf32>
    %c1_58 = arith.constant 1 : index
    %c0_59 = arith.constant 0 : index
    %c0_60 = arith.constant 0 : index
    %52 = vector.load %arg3[%c1_58, %c0_59, %c0_60] : memref<5x1x256xf32, #tpu.memory_space<vmem>>, vector<1x1x256xf32>
    %53 = vector.shape_cast %52 : vector<1x1x256xf32> to vector<1x256xf32>
    %54 = vector.broadcast %53 : vector<1x256xf32> to vector<16x256xf32>
    %55 = arith.addf %51, %54 : vector<16x256xf32>
    %56 = arith.truncf %55 : vector<16x256xf32> to vector<16x256xbf16>
    %c1_61 = arith.constant 1 : index
    %c0_62 = arith.constant 0 : index
    %57 = vector.load %arg17[%c1_61, %c0_62] : memref<18x256xbf16, #tpu.memory_space<vmem>>, vector<16x256xbf16>
    tpu.vector_store %arg17[%c1_61, %c0_62], %56 {strides = array<i32>} : memref<18x256xbf16, #tpu.memory_space<vmem>>, vector<16x256xbf16>,
    %cst_63 = arith.constant 0.000000e+00 : f32
    %58 = vector.broadcast %cst_63 : f32 to vector<16x256xf32>
    %c0_64 = arith.constant 0 : index
    %c0_65 = arith.constant 0 : index
    %59 = vector.load %arg17[%c0_64, %c0_65] : memref<18x256xbf16, #tpu.memory_space<vmem>>, vector<16x256xbf16>
    %c2_66 = arith.constant 2 : index
    %c0_67 = arith.constant 0 : index
    %c0_68 = arith.constant 0 : index
    %c0_69 = arith.constant 0 : index
    %60 = vector.load %arg2[%c2_66, %c0_67, %c0_68, %c0_69] : memref<5x3x256x256xbf16, #tpu.memory_space<vmem>>, vector<1x1x256x256xbf16>
    %61 = vector.shape_cast %60 : vector<1x1x256x256xbf16> to vector<256x256xbf16>
    %cst_70 = arith.constant dense<0.000000e+00> : vector<16x256xf32>
    %62 = tpu.matmul %59, %61, %cst_70 {dimension_numbers = #tpu.dot_dimension_numbers<[1], [0], [0], [1], [0, 0, 1, 1], [], []>} : vector<16x256xbf16>, vector<256x256xbf16>, vector<16x256xf32> -> vector<16x256xf32>
    %63 = arith.addf %58, %62 : vector<16x256xf32>
    %c1_71 = arith.constant 1 : index
    %c0_72 = arith.constant 0 : index
    %64 = vector.load %arg17[%c1_71, %c0_72] : memref<18x256xbf16, #tpu.memory_space<vmem>>, vector<16x256xbf16>
    %c2_73 = arith.constant 2 : index
    %c1_74 = arith.constant 1 : index
    %c0_75 = arith.constant 0 : index
    %c0_76 = arith.constant 0 : index
    %65 = vector.load %arg2[%c2_73, %c1_74, %c0_75, %c0_76] : memref<5x3x256x256xbf16, #tpu.memory_space<vmem>>, vector<1x1x256x256xbf16>
    %66 = vector.shape_cast %65 : vector<1x1x256x256xbf16> to vector<256x256xbf16>
    %cst_77 = arith.constant dense<0.000000e+00> : vector<16x256xf32>
    %67 = tpu.matmul %64, %66, %cst_77 {dimension_numbers = #tpu.dot_dimension_numbers<[1], [0], [0], [1], [0, 0, 1, 1], [], []>} : vector<16x256xbf16>, vector<256x256xbf16>, vector<16x256xf32> -> vector<16x256xf32>
    %68 = arith.addf %63, %67 : vector<16x256xf32>
    %c2_78 = arith.constant 2 : index
    %c0_79 = arith.constant 0 : index
    %69 = vector.load %arg17[%c2_78, %c0_79] : memref<18x256xbf16, #tpu.memory_space<vmem>>, vector<16x256xbf16>
    %c2_80 = arith.constant 2 : index
    %c2_81 = arith.constant 2 : index
    %c0_82 = arith.constant 0 : index
    %c0_83 = arith.constant 0 : index
    %70 = vector.load %arg2[%c2_80, %c2_81, %c0_82, %c0_83] : memref<5x3x256x256xbf16, #tpu.memory_space<vmem>>, vector<1x1x256x256xbf16>
    %71 = vector.shape_cast %70 : vector<1x1x256x256xbf16> to vector<256x256xbf16>
    %cst_84 = arith.constant dense<0.000000e+00> : vector<16x256xf32>
    %72 = tpu.matmul %69, %71, %cst_84 {dimension_numbers = #tpu.dot_dimension_numbers<[1], [0], [0], [1], [0, 0, 1, 1], [], []>} : vector<16x256xbf16>, vector<256x256xbf16>, vector<16x256xf32> -> vector<16x256xf32>
    %73 = arith.addf %68, %72 : vector<16x256xf32>
    %c2_85 = arith.constant 2 : index
    %c0_86 = arith.constant 0 : index
    %c0_87 = arith.constant 0 : index
    %74 = vector.load %arg3[%c2_85, %c0_86, %c0_87] : memref<5x1x256xf32, #tpu.memory_space<vmem>>, vector<1x1x256xf32>
    %75 = vector.shape_cast %74 : vector<1x1x256xf32> to vector<1x256xf32>
    %76 = vector.broadcast %75 : vector<1x256xf32> to vector<16x256xf32>
    %77 = arith.addf %73, %76 : vector<16x256xf32>
    %c1_88 = arith.constant 1 : index
    %78 = memref.load %arg15[%c1_88] : memref<2xf32, #tpu.memory_space<smem>>
    %cst_89 = arith.constant 0.000000e+00 : f32
    %79 = vector.broadcast %cst_89 : f32 to vector<16x256xf32>
    %80 = arith.cmpf oge, %77, %79 : vector<16x256xf32>
    %81 = vector.broadcast %78 : f32 to vector<16x256xf32>
    %82 = arith.mulf %81, %77 : vector<16x256xf32>
    %83 = arith.select %80, %77, %82 : vector<16x256xi1>, vector<16x256xf32>
    %84 = arith.truncf %83 : vector<16x256xf32> to vector<16x256xbf16>
    %c1_90 = arith.constant 1 : index
    %c0_91 = arith.constant 0 : index
    %85 = vector.load %arg17[%c1_90, %c0_91] : memref<18x256xbf16, #tpu.memory_space<vmem>>, vector<16x256xbf16>
    tpu.vector_store %arg17[%c1_90, %c0_91], %84 {strides = array<i32>} : memref<18x256xbf16, #tpu.memory_space<vmem>>, vector<16x256xbf16>,
    %cst_92 = arith.constant 0.000000e+00 : f32
    %86 = vector.broadcast %cst_92 : f32 to vector<16x256xf32>
    %c0_93 = arith.constant 0 : index
    %c0_94 = arith.constant 0 : index
    %87 = vector.load %arg17[%c0_93, %c0_94] : memref<18x256xbf16, #tpu.memory_space<vmem>>, vector<16x256xbf16>
    %c3 = arith.constant 3 : index
    %c0_95 = arith.constant 0 : index
    %c0_96 = arith.constant 0 : index
    %c0_97 = arith.constant 0 : index
    %88 = vector.load %arg2[%c3, %c0_95, %c0_96, %c0_97] : memref<5x3x256x256xbf16, #tpu.memory_space<vmem>>, vector<1x1x256x256xbf16>
    %89 = vector.shape_cast %88 : vector<1x1x256x256xbf16> to vector<256x256xbf16>
    %cst_98 = arith.constant dense<0.000000e+00> : vector<16x256xf32>
    %90 = tpu.matmul %87, %89, %cst_98 {dimension_numbers = #tpu.dot_dimension_numbers<[1], [0], [0], [1], [0, 0, 1, 1], [], []>} : vector<16x256xbf16>, vector<256x256xbf16>, vector<16x256xf32> -> vector<16x256xf32>
    %91 = arith.addf %86, %90 : vector<16x256xf32>
    %c1_99 = arith.constant 1 : index
    %c0_100 = arith.constant 0 : index
    %92 = vector.load %arg17[%c1_99, %c0_100] : memref<18x256xbf16, #tpu.memory_space<vmem>>, vector<16x256xbf16>
    %c3_101 = arith.constant 3 : index
    %c1_102 = arith.constant 1 : index
    %c0_103 = arith.constant 0 : index
    %c0_104 = arith.constant 0 : index
    %93 = vector.load %arg2[%c3_101, %c1_102, %c0_103, %c0_104] : memref<5x3x256x256xbf16, #tpu.memory_space<vmem>>, vector<1x1x256x256xbf16>
    %94 = vector.shape_cast %93 : vector<1x1x256x256xbf16> to vector<256x256xbf16>
    %cst_105 = arith.constant dense<0.000000e+00> : vector<16x256xf32>
    %95 = tpu.matmul %92, %94, %cst_105 {dimension_numbers = #tpu.dot_dimension_numbers<[1], [0], [0], [1], [0, 0, 1, 1], [], []>} : vector<16x256xbf16>, vector<256x256xbf16>, vector<16x256xf32> -> vector<16x256xf32>
    %96 = arith.addf %91, %95 : vector<16x256xf32>
    %c2_106 = arith.constant 2 : index
    %c0_107 = arith.constant 0 : index
    %97 = vector.load %arg17[%c2_106, %c0_107] : memref<18x256xbf16, #tpu.memory_space<vmem>>, vector<16x256xbf16>
    %c3_108 = arith.constant 3 : index
    %c2_109 = arith.constant 2 : index
    %c0_110 = arith.constant 0 : index
    %c0_111 = arith.constant 0 : index
    %98 = vector.load %arg2[%c3_108, %c2_109, %c0_110, %c0_111] : memref<5x3x256x256xbf16, #tpu.memory_space<vmem>>, vector<1x1x256x256xbf16>
    %99 = vector.shape_cast %98 : vector<1x1x256x256xbf16> to vector<256x256xbf16>
    %cst_112 = arith.constant dense<0.000000e+00> : vector<16x256xf32>
    %100 = tpu.matmul %97, %99, %cst_112 {dimension_numbers = #tpu.dot_dimension_numbers<[1], [0], [0], [1], [0, 0, 1, 1], [], []>} : vector<16x256xbf16>, vector<256x256xbf16>, vector<16x256xf32> -> vector<16x256xf32>
    %101 = arith.addf %96, %100 : vector<16x256xf32>
    %c3_113 = arith.constant 3 : index
    %c0_114 = arith.constant 0 : index
    %c0_115 = arith.constant 0 : index
    %102 = vector.load %arg3[%c3_113, %c0_114, %c0_115] : memref<5x1x256xf32, #tpu.memory_space<vmem>>, vector<1x1x256xf32>
    %103 = vector.shape_cast %102 : vector<1x1x256xf32> to vector<1x256xf32>
    %104 = vector.broadcast %103 : vector<1x256xf32> to vector<16x256xf32>
    %105 = arith.addf %101, %104 : vector<16x256xf32>
    %106 = arith.addf %55, %105 : vector<16x256xf32>
    %107 = arith.truncf %55 : vector<16x256xf32> to vector<16x256xbf16>
    %c1_116 = arith.constant 1 : index
    %c0_117 = arith.constant 0 : index
    %108 = vector.load %arg17[%c1_116, %c0_117] : memref<18x256xbf16, #tpu.memory_space<vmem>>, vector<16x256xbf16>
    tpu.vector_store %arg17[%c1_116, %c0_117], %107 {strides = array<i32>} : memref<18x256xbf16, #tpu.memory_space<vmem>>, vector<16x256xbf16>,
    %cst_118 = arith.constant 0.000000e+00 : f32
    %109 = vector.broadcast %cst_118 : f32 to vector<16x256xf32>
    %c0_119 = arith.constant 0 : index
    %c0_120 = arith.constant 0 : index
    %110 = vector.load %arg17[%c0_119, %c0_120] : memref<18x256xbf16, #tpu.memory_space<vmem>>, vector<16x256xbf16>
    %c4 = arith.constant 4 : index
    %c0_121 = arith.constant 0 : index
    %c0_122 = arith.constant 0 : index
    %c0_123 = arith.constant 0 : index
    %111 = vector.load %arg2[%c4, %c0_121, %c0_122, %c0_123] : memref<5x3x256x256xbf16, #tpu.memory_space<vmem>>, vector<1x1x256x256xbf16>
    %112 = vector.shape_cast %111 : vector<1x1x256x256xbf16> to vector<256x256xbf16>
    %cst_124 = arith.constant dense<0.000000e+00> : vector<16x256xf32>
    %113 = tpu.matmul %110, %112, %cst_124 {dimension_numbers = #tpu.dot_dimension_numbers<[1], [0], [0], [1], [0, 0, 1, 1], [], []>} : vector<16x256xbf16>, vector<256x256xbf16>, vector<16x256xf32> -> vector<16x256xf32>
    %114 = arith.addf %109, %113 : vector<16x256xf32>
    %c1_125 = arith.constant 1 : index
    %c0_126 = arith.constant 0 : index
    %115 = vector.load %arg17[%c1_125, %c0_126] : memref<18x256xbf16, #tpu.memory_space<vmem>>, vector<16x256xbf16>
    %c4_127 = arith.constant 4 : index
    %c1_128 = arith.constant 1 : index
    %c0_129 = arith.constant 0 : index
    %c0_130 = arith.constant 0 : index
    %116 = vector.load %arg2[%c4_127, %c1_128, %c0_129, %c0_130] : memref<5x3x256x256xbf16, #tpu.memory_space<vmem>>, vector<1x1x256x256xbf16>
    %117 = vector.shape_cast %116 : vector<1x1x256x256xbf16> to vector<256x256xbf16>
    %cst_131 = arith.constant dense<0.000000e+00> : vector<16x256xf32>
    %118 = tpu.matmul %115, %117, %cst_131 {dimension_numbers = #tpu.dot_dimension_numbers<[1], [0], [0], [1], [0, 0, 1, 1], [], []>} : vector<16x256xbf16>, vector<256x256xbf16>, vector<16x256xf32> -> vector<16x256xf32>
    %119 = arith.addf %114, %118 : vector<16x256xf32>
    %c2_132 = arith.constant 2 : index
    %c0_133 = arith.constant 0 : index
    %120 = vector.load %arg17[%c2_132, %c0_133] : memref<18x256xbf16, #tpu.memory_space<vmem>>, vector<16x256xbf16>
    %c4_134 = arith.constant 4 : index
    %c2_135 = arith.constant 2 : index
    %c0_136 = arith.constant 0 : index
    %c0_137 = arith.constant 0 : index
    %121 = vector.load %arg2[%c4_134, %c2_135, %c0_136, %c0_137] : memref<5x3x256x256xbf16, #tpu.memory_space<vmem>>, vector<1x1x256x256xbf16>
    %122 = vector.shape_cast %121 : vector<1x1x256x256xbf16> to vector<256x256xbf16>
    %cst_138 = arith.constant dense<0.000000e+00> : vector<16x256xf32>
    %123 = tpu.matmul %120, %122, %cst_138 {dimension_numbers = #tpu.dot_dimension_numbers<[1], [0], [0], [1], [0, 0, 1, 1], [], []>} : vector<16x256xbf16>, vector<256x256xbf16>, vector<16x256xf32> -> vector<16x256xf32>
    %124 = arith.addf %119, %123 : vector<16x256xf32>
    %c4_139 = arith.constant 4 : index
    %c0_140 = arith.constant 0 : index
    %c0_141 = arith.constant 0 : index
    %125 = vector.load %arg3[%c4_139, %c0_140, %c0_141] : memref<5x1x256xf32, #tpu.memory_space<vmem>>, vector<1x1x256xf32>
    %126 = vector.shape_cast %125 : vector<1x1x256xf32> to vector<1x256xf32>
    %127 = vector.broadcast %126 : vector<1x256xf32> to vector<16x256xf32>
    %128 = arith.addf %124, %127 : vector<16x256xf32>
    %c0_142 = arith.constant 0 : index
    %c0_143 = arith.constant 0 : index
    %129 = vector.load %arg5[%c0_142, %c0_143] : memref<256x16xf32, #tpu.memory_space<vmem>>, vector<256x16xf32>
    %cst_144 = arith.constant dense<0.000000e+00> : vector<16x16xf32>
    %130 = tpu.matmul %128, %129, %cst_144 {dimension_numbers = #tpu.dot_dimension_numbers<[1], [0], [0], [1], [0, 0, 1, 1], [], []>} : vector<16x256xf32>, vector<256x16xf32>, vector<16x16xf32> -> vector<16x16xf32>
    %c3_145 = arith.constant 3 : index
    %c0_146 = arith.constant 0 : index
    %131 = vector.load %arg18[%c3_145, %c0_146] : memref<22x32xf32, #tpu.memory_space<vmem>>, vector<16x16xf32>
    tpu.vector_store %arg18[%c3_145, %c0_146], %130 {strides = array<i32>} : memref<22x32xf32, #tpu.memory_space<vmem>>, vector<16x16xf32>,
    %132 = vector.extract_strided_slice %128 {offsets = [0, 0], sizes = [16, 16], strides = [1, 1]} : vector<16x256xf32> to vector<16x16xf32>
    %cst_147 = arith.constant dense<0xFF800000> : vector<16xf32>
    %133 = vector.multi_reduction <maximumf>, %132, %cst_147 [1] : vector<16x16xf32> to vector<16xf32>
    %134 = vector.shape_cast %133 : vector<16xf32> to vector<16x1xf32>
    %c3_148 = arith.constant 3 : index
    %c16 = arith.constant 16 : index
    %135 = vector.load %arg18[%c3_148, %c16] : memref<22x32xf32, #tpu.memory_space<vmem>>, vector<16x1xf32>
    tpu.vector_store %arg18[%c3_148, %c16], %134 {strides = array<i32>} : memref<22x32xf32, #tpu.memory_space<vmem>>, vector<16x1xf32>,
    %136 = vector.extract_strided_slice %128 {offsets = [0, 16], sizes = [16, 16], strides = [1, 1]} : vector<16x256xf32> to vector<16x16xf32>
    %cst_149 = arith.constant dense<0xFF800000> : vector<16xf32>
    %137 = vector.multi_reduction <maximumf>, %136, %cst_149 [1] : vector<16x16xf32> to vector<16xf32>
    %138 = vector.shape_cast %137 : vector<16xf32> to vector<16x1xf32>
    %c3_150 = arith.constant 3 : index
    %c17 = arith.constant 17 : index
    %139 = vector.load %arg18[%c3_150, %c17] : memref<22x32xf32, #tpu.memory_space<vmem>>, vector<16x1xf32>
    tpu.vector_store %arg18[%c3_150, %c17], %138 {strides = array<i32>} : memref<22x32xf32, #tpu.memory_space<vmem>>, vector<16x1xf32>,
    %140 = vector.extract_strided_slice %128 {offsets = [0, 32], sizes = [16, 16], strides = [1, 1]} : vector<16x256xf32> to vector<16x16xf32>
    %cst_151 = arith.constant dense<0xFF800000> : vector<16xf32>
    %141 = vector.multi_reduction <maximumf>, %140, %cst_151 [1] : vector<16x16xf32> to vector<16xf32>
    %142 = vector.shape_cast %141 : vector<16xf32> to vector<16x1xf32>
    %c3_152 = arith.constant 3 : index
    %c18 = arith.constant 18 : index
    %143 = vector.load %arg18[%c3_152, %c18] : memref<22x32xf32, #tpu.memory_space<vmem>>, vector<16x1xf32>
    tpu.vector_store %arg18[%c3_152, %c18], %142 {strides = array<i32>} : memref<22x32xf32, #tpu.memory_space<vmem>>, vector<16x1xf32>,
    %144 = vector.extract_strided_slice %128 {offsets = [0, 48], sizes = [16, 16], strides = [1, 1]} : vector<16x256xf32> to vector<16x16xf32>
    %cst_153 = arith.constant dense<0xFF800000> : vector<16xf32>
    %145 = vector.multi_reduction <maximumf>, %144, %cst_153 [1] : vector<16x16xf32> to vector<16xf32>
    %146 = vector.shape_cast %145 : vector<16xf32> to vector<16x1xf32>
    %c3_154 = arith.constant 3 : index
    %c19 = arith.constant 19 : index
    %147 = vector.load %arg18[%c3_154, %c19] : memref<22x32xf32, #tpu.memory_space<vmem>>, vector<16x1xf32>
    tpu.vector_store %arg18[%c3_154, %c19], %146 {strides = array<i32>} : memref<22x32xf32, #tpu.memory_space<vmem>>, vector<16x1xf32>,
    %148 = vector.extract_strided_slice %128 {offsets = [0, 64], sizes = [16, 16], strides = [1, 1]} : vector<16x256xf32> to vector<16x16xf32>
    %cst_155 = arith.constant dense<0xFF800000> : vector<16xf32>
    %149 = vector.multi_reduction <maximumf>, %148, %cst_155 [1] : vector<16x16xf32> to vector<16xf32>
    %150 = vector.shape_cast %149 : vector<16xf32> to vector<16x1xf32>
    %c3_156 = arith.constant 3 : index
    %c20 = arith.constant 20 : index
    %151 = vector.load %arg18[%c3_156, %c20] : memref<22x32xf32, #tpu.memory_space<vmem>>, vector<16x1xf32>
    tpu.vector_store %arg18[%c3_156, %c20], %150 {strides = array<i32>} : memref<22x32xf32, #tpu.memory_space<vmem>>, vector<16x1xf32>,
    %152 = vector.extract_strided_slice %128 {offsets = [0, 80], sizes = [16, 16], strides = [1, 1]} : vector<16x256xf32> to vector<16x16xf32>
    %cst_157 = arith.constant dense<0xFF800000> : vector<16xf32>
    %153 = vector.multi_reduction <maximumf>, %152, %cst_157 [1] : vector<16x16xf32> to vector<16xf32>
    %154 = vector.shape_cast %153 : vector<16xf32> to vector<16x1xf32>
    %c3_158 = arith.constant 3 : index
    %c21 = arith.constant 21 : index
    %155 = vector.load %arg18[%c3_158, %c21] : memref<22x32xf32, #tpu.memory_space<vmem>>, vector<16x1xf32>
    tpu.vector_store %arg18[%c3_158, %c21], %154 {strides = array<i32>} : memref<22x32xf32, #tpu.memory_space<vmem>>, vector<16x1xf32>,
    %156 = vector.extract_strided_slice %128 {offsets = [0, 96], sizes = [16, 16], strides = [1, 1]} : vector<16x256xf32> to vector<16x16xf32>
    %cst_159 = arith.constant dense<0xFF800000> : vector<16xf32>
    %157 = vector.multi_reduction <maximumf>, %156, %cst_159 [1] : vector<16x16xf32> to vector<16xf32>
    %158 = vector.shape_cast %157 : vector<16xf32> to vector<16x1xf32>
    %c3_160 = arith.constant 3 : index
    %c22 = arith.constant 22 : index
    %159 = vector.load %arg18[%c3_160, %c22] : memref<22x32xf32, #tpu.memory_space<vmem>>, vector<16x1xf32>
    tpu.vector_store %arg18[%c3_160, %c22], %158 {strides = array<i32>} : memref<22x32xf32, #tpu.memory_space<vmem>>, vector<16x1xf32>,
    %160 = vector.extract_strided_slice %128 {offsets = [0, 112], sizes = [16, 16], strides = [1, 1]} : vector<16x256xf32> to vector<16x16xf32>
    %cst_161 = arith.constant dense<0xFF800000> : vector<16xf32>
    %161 = vector.multi_reduction <maximumf>, %160, %cst_161 [1] : vector<16x16xf32> to vector<16xf32>
    %162 = vector.shape_cast %161 : vector<16xf32> to vector<16x1xf32>
    %c3_162 = arith.constant 3 : index
    %c23 = arith.constant 23 : index
    %163 = vector.load %arg18[%c3_162, %c23] : memref<22x32xf32, #tpu.memory_space<vmem>>, vector<16x1xf32>
    tpu.vector_store %arg18[%c3_162, %c23], %162 {strides = array<i32>} : memref<22x32xf32, #tpu.memory_space<vmem>>, vector<16x1xf32>,
    %164 = vector.extract_strided_slice %128 {offsets = [0, 128], sizes = [16, 16], strides = [1, 1]} : vector<16x256xf32> to vector<16x16xf32>
    %cst_163 = arith.constant dense<0xFF800000> : vector<16xf32>
    %165 = vector.multi_reduction <maximumf>, %164, %cst_163 [1] : vector<16x16xf32> to vector<16xf32>
    %166 = vector.shape_cast %165 : vector<16xf32> to vector<16x1xf32>
    %c3_164 = arith.constant 3 : index
    %c24 = arith.constant 24 : index
    %167 = vector.load %arg18[%c3_164, %c24] : memref<22x32xf32, #tpu.memory_space<vmem>>, vector<16x1xf32>
    tpu.vector_store %arg18[%c3_164, %c24], %166 {strides = array<i32>} : memref<22x32xf32, #tpu.memory_space<vmem>>, vector<16x1xf32>,
    %168 = vector.extract_strided_slice %128 {offsets = [0, 144], sizes = [16, 16], strides = [1, 1]} : vector<16x256xf32> to vector<16x16xf32>
    %cst_165 = arith.constant dense<0xFF800000> : vector<16xf32>
    %169 = vector.multi_reduction <maximumf>, %168, %cst_165 [1] : vector<16x16xf32> to vector<16xf32>
    %170 = vector.shape_cast %169 : vector<16xf32> to vector<16x1xf32>
    %c3_166 = arith.constant 3 : index
    %c25 = arith.constant 25 : index
    %171 = vector.load %arg18[%c3_166, %c25] : memref<22x32xf32, #tpu.memory_space<vmem>>, vector<16x1xf32>
    tpu.vector_store %arg18[%c3_166, %c25], %170 {strides = array<i32>} : memref<22x32xf32, #tpu.memory_space<vmem>>, vector<16x1xf32>,
    %172 = vector.extract_strided_slice %128 {offsets = [0, 160], sizes = [16, 16], strides = [1, 1]} : vector<16x256xf32> to vector<16x16xf32>
    %cst_167 = arith.constant dense<0xFF800000> : vector<16xf32>
    %173 = vector.multi_reduction <maximumf>, %172, %cst_167 [1] : vector<16x16xf32> to vector<16xf32>
    %174 = vector.shape_cast %173 : vector<16xf32> to vector<16x1xf32>
    %c3_168 = arith.constant 3 : index
    %c26 = arith.constant 26 : index
    %175 = vector.load %arg18[%c3_168, %c26] : memref<22x32xf32, #tpu.memory_space<vmem>>, vector<16x1xf32>
    tpu.vector_store %arg18[%c3_168, %c26], %174 {strides = array<i32>} : memref<22x32xf32, #tpu.memory_space<vmem>>, vector<16x1xf32>,
    %176 = vector.extract_strided_slice %128 {offsets = [0, 176], sizes = [16, 16], strides = [1, 1]} : vector<16x256xf32> to vector<16x16xf32>
    %cst_169 = arith.constant dense<0xFF800000> : vector<16xf32>
    %177 = vector.multi_reduction <maximumf>, %176, %cst_169 [1] : vector<16x16xf32> to vector<16xf32>
    %178 = vector.shape_cast %177 : vector<16xf32> to vector<16x1xf32>
    %c3_170 = arith.constant 3 : index
    %c27 = arith.constant 27 : index
    %179 = vector.load %arg18[%c3_170, %c27] : memref<22x32xf32, #tpu.memory_space<vmem>>, vector<16x1xf32>
    tpu.vector_store %arg18[%c3_170, %c27], %178 {strides = array<i32>} : memref<22x32xf32, #tpu.memory_space<vmem>>, vector<16x1xf32>,
    %180 = vector.extract_strided_slice %128 {offsets = [0, 192], sizes = [16, 16], strides = [1, 1]} : vector<16x256xf32> to vector<16x16xf32>
    %cst_171 = arith.constant dense<0xFF800000> : vector<16xf32>
    %181 = vector.multi_reduction <maximumf>, %180, %cst_171 [1] : vector<16x16xf32> to vector<16xf32>
    %182 = vector.shape_cast %181 : vector<16xf32> to vector<16x1xf32>
    %c3_172 = arith.constant 3 : index
    %c28 = arith.constant 28 : index
    %183 = vector.load %arg18[%c3_172, %c28] : memref<22x32xf32, #tpu.memory_space<vmem>>, vector<16x1xf32>
    tpu.vector_store %arg18[%c3_172, %c28], %182 {strides = array<i32>} : memref<22x32xf32, #tpu.memory_space<vmem>>, vector<16x1xf32>,
    %184 = vector.extract_strided_slice %128 {offsets = [0, 208], sizes = [16, 16], strides = [1, 1]} : vector<16x256xf32> to vector<16x16xf32>
    %cst_173 = arith.constant dense<0xFF800000> : vector<16xf32>
    %185 = vector.multi_reduction <maximumf>, %184, %cst_173 [1] : vector<16x16xf32> to vector<16xf32>
    %186 = vector.shape_cast %185 : vector<16xf32> to vector<16x1xf32>
    %c3_174 = arith.constant 3 : index
    %c29 = arith.constant 29 : index
    %187 = vector.load %arg18[%c3_174, %c29] : memref<22x32xf32, #tpu.memory_space<vmem>>, vector<16x1xf32>
    tpu.vector_store %arg18[%c3_174, %c29], %186 {strides = array<i32>} : memref<22x32xf32, #tpu.memory_space<vmem>>, vector<16x1xf32>,
    %188 = vector.extract_strided_slice %128 {offsets = [0, 224], sizes = [16, 16], strides = [1, 1]} : vector<16x256xf32> to vector<16x16xf32>
    %cst_175 = arith.constant dense<0xFF800000> : vector<16xf32>
    %189 = vector.multi_reduction <maximumf>, %188, %cst_175 [1] : vector<16x16xf32> to vector<16xf32>
    %190 = vector.shape_cast %189 : vector<16xf32> to vector<16x1xf32>
    %c3_176 = arith.constant 3 : index
    %c30 = arith.constant 30 : index
    %191 = vector.load %arg18[%c3_176, %c30] : memref<22x32xf32, #tpu.memory_space<vmem>>, vector<16x1xf32>
    tpu.vector_store %arg18[%c3_176, %c30], %190 {strides = array<i32>} : memref<22x32xf32, #tpu.memory_space<vmem>>, vector<16x1xf32>,
    %192 = vector.extract_strided_slice %128 {offsets = [0, 240], sizes = [16, 16], strides = [1, 1]} : vector<16x256xf32> to vector<16x16xf32>
    %cst_177 = arith.constant dense<0xFF800000> : vector<16xf32>
    %193 = vector.multi_reduction <maximumf>, %192, %cst_177 [1] : vector<16x16xf32> to vector<16xf32>
    %194 = vector.shape_cast %193 : vector<16xf32> to vector<16x1xf32>
    %c3_178 = arith.constant 3 : index
    %c31 = arith.constant 31 : index
    %195 = vector.load %arg18[%c3_178, %c31] : memref<22x32xf32, #tpu.memory_space<vmem>>, vector<16x1xf32>
    tpu.vector_store %arg18[%c3_178, %c31], %194 {strides = array<i32>} : memref<22x32xf32, #tpu.memory_space<vmem>>, vector<16x1xf32>,
    %cst_179 = arith.constant 0.000000e+00 : f32
    %196 = vector.broadcast %cst_179 : f32 to vector<16x16xf32>
    %c0_180 = arith.constant 0 : index
    %c0_181 = arith.constant 0 : index
    %197 = vector.load %arg18[%c0_180, %c0_181] : memref<22x32xf32, #tpu.memory_space<vmem>>, vector<16x32xf32>
    %c0_182 = arith.constant 0 : index
    %c0_183 = arith.constant 0 : index
    %c0_184 = arith.constant 0 : index
    %198 = vector.load %arg4[%c0_182, %c0_183, %c0_184] : memref<7x32x16xf32, #tpu.memory_space<vmem>>, vector<1x32x16xf32>
    %199 = vector.shape_cast %198 : vector<1x32x16xf32> to vector<32x16xf32>
    %cst_185 = arith.constant dense<0.000000e+00> : vector<16x16xf32>
    %200 = tpu.matmul %197, %199, %cst_185 {dimension_numbers = #tpu.dot_dimension_numbers<[1], [0], [0], [1], [0, 0, 1, 1], [], []>} : vector<16x32xf32>, vector<32x16xf32>, vector<16x16xf32> -> vector<16x16xf32>
    %201 = arith.addf %196, %200 : vector<16x16xf32>
    %c1_186 = arith.constant 1 : index
    %c0_187 = arith.constant 0 : index
    %202 = vector.load %arg18[%c1_186, %c0_187] : memref<22x32xf32, #tpu.memory_space<vmem>>, vector<16x32xf32>
    %c1_188 = arith.constant 1 : index
    %c0_189 = arith.constant 0 : index
    %c0_190 = arith.constant 0 : index
    %203 = vector.load %arg4[%c1_188, %c0_189, %c0_190] : memref<7x32x16xf32, #tpu.memory_space<vmem>>, vector<1x32x16xf32>
    %204 = vector.shape_cast %203 : vector<1x32x16xf32> to vector<32x16xf32>
    %cst_191 = arith.constant dense<0.000000e+00> : vector<16x16xf32>
    %205 = tpu.matmul %202, %204, %cst_191 {dimension_numbers = #tpu.dot_dimension_numbers<[1], [0], [0], [1], [0, 0, 1, 1], [], []>} : vector<16x32xf32>, vector<32x16xf32>, vector<16x16xf32> -> vector<16x16xf32>
    %206 = arith.addf %201, %205 : vector<16x16xf32>
    %c2_192 = arith.constant 2 : index
    %c0_193 = arith.constant 0 : index
    %207 = vector.load %arg18[%c2_192, %c0_193] : memref<22x32xf32, #tpu.memory_space<vmem>>, vector<16x32xf32>
    %c2_194 = arith.constant 2 : index
    %c0_195 = arith.constant 0 : index
    %c0_196 = arith.constant 0 : index
    %208 = vector.load %arg4[%c2_194, %c0_195, %c0_196] : memref<7x32x16xf32, #tpu.memory_space<vmem>>, vector<1x32x16xf32>
    %209 = vector.shape_cast %208 : vector<1x32x16xf32> to vector<32x16xf32>
    %cst_197 = arith.constant dense<0.000000e+00> : vector<16x16xf32>
    %210 = tpu.matmul %207, %209, %cst_197 {dimension_numbers = #tpu.dot_dimension_numbers<[1], [0], [0], [1], [0, 0, 1, 1], [], []>} : vector<16x32xf32>, vector<32x16xf32>, vector<16x16xf32> -> vector<16x16xf32>
    %211 = arith.addf %206, %210 : vector<16x16xf32>
    %c3_198 = arith.constant 3 : index
    %c0_199 = arith.constant 0 : index
    %212 = vector.load %arg18[%c3_198, %c0_199] : memref<22x32xf32, #tpu.memory_space<vmem>>, vector<16x32xf32>
    %c3_200 = arith.constant 3 : index
    %c0_201 = arith.constant 0 : index
    %c0_202 = arith.constant 0 : index
    %213 = vector.load %arg4[%c3_200, %c0_201, %c0_202] : memref<7x32x16xf32, #tpu.memory_space<vmem>>, vector<1x32x16xf32>
    %214 = vector.shape_cast %213 : vector<1x32x16xf32> to vector<32x16xf32>
    %cst_203 = arith.constant dense<0.000000e+00> : vector<16x16xf32>
    %215 = tpu.matmul %212, %214, %cst_203 {dimension_numbers = #tpu.dot_dimension_numbers<[1], [0], [0], [1], [0, 0, 1, 1], [], []>} : vector<16x32xf32>, vector<32x16xf32>, vector<16x16xf32> -> vector<16x16xf32>
    %216 = arith.addf %211, %215 : vector<16x16xf32>
    %c4_204 = arith.constant 4 : index
    %c0_205 = arith.constant 0 : index
    %217 = vector.load %arg18[%c4_204, %c0_205] : memref<22x32xf32, #tpu.memory_space<vmem>>, vector<16x32xf32>
    %c4_206 = arith.constant 4 : index
    %c0_207 = arith.constant 0 : index
    %c0_208 = arith.constant 0 : index
    %218 = vector.load %arg4[%c4_206, %c0_207, %c0_208] : memref<7x32x16xf32, #tpu.memory_space<vmem>>, vector<1x32x16xf32>
    %219 = vector.shape_cast %218 : vector<1x32x16xf32> to vector<32x16xf32>
    %cst_209 = arith.constant dense<0.000000e+00> : vector<16x16xf32>
    %220 = tpu.matmul %217, %219, %cst_209 {dimension_numbers = #tpu.dot_dimension_numbers<[1], [0], [0], [1], [0, 0, 1, 1], [], []>} : vector<16x32xf32>, vector<32x16xf32>, vector<16x16xf32> -> vector<16x16xf32>
    %221 = arith.addf %216, %220 : vector<16x16xf32>
    %c5 = arith.constant 5 : index
    %c0_210 = arith.constant 0 : index
    %222 = vector.load %arg18[%c5, %c0_210] : memref<22x32xf32, #tpu.memory_space<vmem>>, vector<16x32xf32>
    %c5_211 = arith.constant 5 : index
    %c0_212 = arith.constant 0 : index
    %c0_213 = arith.constant 0 : index
    %223 = vector.load %arg4[%c5_211, %c0_212, %c0_213] : memref<7x32x16xf32, #tpu.memory_space<vmem>>, vector<1x32x16xf32>
    %224 = vector.shape_cast %223 : vector<1x32x16xf32> to vector<32x16xf32>
    %cst_214 = arith.constant dense<0.000000e+00> : vector<16x16xf32>
    %225 = tpu.matmul %222, %224, %cst_214 {dimension_numbers = #tpu.dot_dimension_numbers<[1], [0], [0], [1], [0, 0, 1, 1], [], []>} : vector<16x32xf32>, vector<32x16xf32>, vector<16x16xf32> -> vector<16x16xf32>
    %226 = arith.addf %221, %225 : vector<16x16xf32>
    %c6 = arith.constant 6 : index
    %c0_215 = arith.constant 0 : index
    %227 = vector.load %arg18[%c6, %c0_215] : memref<22x32xf32, #tpu.memory_space<vmem>>, vector<16x32xf32>
    %c6_216 = arith.constant 6 : index
    %c0_217 = arith.constant 0 : index
    %c0_218 = arith.constant 0 : index
    %228 = vector.load %arg4[%c6_216, %c0_217, %c0_218] : memref<7x32x16xf32, #tpu.memory_space<vmem>>, vector<1x32x16xf32>
    %229 = vector.shape_cast %228 : vector<1x32x16xf32> to vector<32x16xf32>
    %cst_219 = arith.constant dense<0.000000e+00> : vector<16x16xf32>
    %230 = tpu.matmul %227, %229, %cst_219 {dimension_numbers = #tpu.dot_dimension_numbers<[1], [0], [0], [1], [0, 0, 1, 1], [], []>} : vector<16x32xf32>, vector<32x16xf32>, vector<16x16xf32> -> vector<16x16xf32>
    %231 = arith.addf %226, %230 : vector<16x16xf32>
    %232 = arith.negf %231 : vector<16x16xf32>
    %233 = math.exp %232 : vector<16x16xf32>
    %cst_220 = arith.constant 1.000000e+00 : f32
    %234 = vector.broadcast %cst_220 : f32 to vector<16x16xf32>
    %235 = arith.addf %234, %233 : vector<16x16xf32>
    %236 = arith.divf %234, %235 : vector<16x16xf32>
    %c0_221 = arith.constant 0 : index
    %c0_222 = arith.constant 0 : index
    %237 = vector.load %arg6[%c0_221, %c0_222] : memref<16x256xf32, #tpu.memory_space<vmem>>, vector<16x256xf32>
    %cst_223 = arith.constant dense<0.000000e+00> : vector<16x256xf32>
    %238 = tpu.matmul %236, %237, %cst_223 {dimension_numbers = #tpu.dot_dimension_numbers<[1], [0], [0], [1], [0, 0, 1, 1], [], []>} : vector<16x16xf32>, vector<16x256xf32>, vector<16x256xf32> -> vector<16x256xf32>
    %239 = arith.mulf %128, %238 : vector<16x256xf32>
    %240 = arith.addf %106, %239 : vector<16x256xf32>
    %cst_224 = arith.constant dense<0.000000e+00> : vector<256xf32>
    %241 = vector.multi_reduction <add>, %240, %cst_224 [0] : vector<16x256xf32> to vector<256xf32>
    %242 = vector.shape_cast %241 : vector<256xf32> to vector<1x256xf32>
    %c0_225 = arith.constant 0 : index
    %c0_226 = arith.constant 0 : index
    %243 = vector.load %arg7[%c0_225, %c0_226] : memref<256x16xf32, #tpu.memory_space<vmem>>, vector<256x16xf32>
    %cst_227 = arith.constant dense<0.000000e+00> : vector<1x16xf32>
    %244 = tpu.matmul %242, %243, %cst_227 {dimension_numbers = #tpu.dot_dimension_numbers<[1], [0], [0], [1], [0, 0, 1, 1], [], []>} : vector<1x256xf32>, vector<256x16xf32>, vector<1x16xf32> -> vector<1x16xf32>
    %cst_228 = arith.constant 3.906250e-03 : f32
    %245 = vector.broadcast %cst_228 : f32 to vector<1x16xf32>
    %246 = arith.mulf %244, %245 : vector<1x16xf32>
    %c0_229 = arith.constant 0 : index
    %c0_230 = arith.constant 0 : index
    %247 = vector.load %arg9[%c0_229, %c0_230] : memref<16x32xf32, #tpu.memory_space<vmem>>, vector<16x32xf32>
    %cst_231 = arith.constant dense<0.000000e+00> : vector<1x32xf32>
    %248 = tpu.matmul %246, %247, %cst_231 {dimension_numbers = #tpu.dot_dimension_numbers<[1], [0], [0], [1], [0, 0, 1, 1], [], []>} : vector<1x16xf32>, vector<16x32xf32>, vector<1x32xf32> -> vector<1x32xf32>
    %c0_232 = arith.constant 0 : index
    %c0_233 = arith.constant 0 : index
    %249 = vector.load %arg10[%c0_232, %c0_233] : memref<1x32xf32, #tpu.memory_space<vmem>>, vector<1x32xf32>
    %250 = arith.addf %248, %249 : vector<1x32xf32>
    %c0_234 = arith.constant 0 : index
    %c0_235 = arith.constant 0 : index
    %251 = vector.load %arg11[%c0_234, %c0_235] : memref<32x16xf32, #tpu.memory_space<vmem>>, vector<32x16xf32>
    %cst_236 = arith.constant dense<0.000000e+00> : vector<1x16xf32>
    %252 = tpu.matmul %250, %251, %cst_236 {dimension_numbers = #tpu.dot_dimension_numbers<[1], [0], [0], [1], [0, 0, 1, 1], [], []>} : vector<1x32xf32>, vector<32x16xf32>, vector<1x16xf32> -> vector<1x16xf32>
    %c0_237 = arith.constant 0 : index
    %c0_238 = arith.constant 0 : index
    %253 = vector.load %arg12[%c0_237, %c0_238] : memref<1x16xf32, #tpu.memory_space<vmem>>, vector<1x16xf32>
    %254 = arith.addf %252, %253 : vector<1x16xf32>
    %c0_239 = arith.constant 0 : index
    %c0_240 = arith.constant 0 : index
    %255 = vector.load %arg13[%c0_239, %c0_240] : memref<32x16xf32, #tpu.memory_space<vmem>>, vector<32x16xf32>
    %cst_241 = arith.constant dense<0.000000e+00> : vector<1x16xf32>
    %256 = tpu.matmul %250, %255, %cst_241 {dimension_numbers = #tpu.dot_dimension_numbers<[1], [0], [0], [1], [0, 0, 1, 1], [], []>} : vector<1x32xf32>, vector<32x16xf32>, vector<1x16xf32> -> vector<1x16xf32>
    %c0_242 = arith.constant 0 : index
    %c0_243 = arith.constant 0 : index
    %257 = vector.load %arg14[%c0_242, %c0_243] : memref<1x16xf32, #tpu.memory_space<vmem>>, vector<1x16xf32>
    %258 = arith.addf %256, %257 : vector<1x16xf32>
    %259 = arith.maximumf %254, %258 : vector<1x16xf32>
    %260 = arith.subf %254, %259 : vector<1x16xf32>
    %261 = math.exp %260 : vector<1x16xf32>
    %262 = arith.subf %258, %259 : vector<1x16xf32>
    %263 = math.exp %262 : vector<1x16xf32>
    %264 = arith.addf %261, %263 : vector<1x16xf32>
    %265 = tpu.reciprocal %264 {approx = true} : vector<1x16xf32> -> vector<1x16xf32>
    %266 = arith.mulf %261, %265 : vector<1x16xf32>
    %c0_244 = arith.constant 0 : index
    %c0_245 = arith.constant 0 : index
    %267 = vector.load %arg8[%c0_244, %c0_245] : memref<16x256xf32, #tpu.memory_space<vmem>>, vector<16x256xf32>
    %cst_246 = arith.constant dense<0.000000e+00> : vector<1x256xf32>
    %268 = tpu.matmul %266, %267, %cst_246 {dimension_numbers = #tpu.dot_dimension_numbers<[1], [0], [0], [1], [0, 0, 1, 1], [], []>} : vector<1x16xf32>, vector<16x256xf32>, vector<1x256xf32> -> vector<1x256xf32>
    %269 = arith.mulf %263, %265 : vector<1x16xf32>
    %c0_247 = arith.constant 0 : index
    %c0_248 = arith.constant 0 : index
    %270 = vector.load %arg8[%c0_247, %c0_248] : memref<16x256xf32, #tpu.memory_space<vmem>>, vector<16x256xf32>
    %cst_249 = arith.constant dense<0.000000e+00> : vector<1x256xf32>
    %271 = tpu.matmul %269, %270, %cst_249 {dimension_numbers = #tpu.dot_dimension_numbers<[1], [0], [0], [1], [0, 0, 1, 1], [], []>} : vector<1x16xf32>, vector<16x256xf32>, vector<1x256xf32> -> vector<1x256xf32>
    %272 = vector.broadcast %268 : vector<1x256xf32> to vector<16x256xf32>
    %273 = arith.mulf %106, %272 : vector<16x256xf32>
    %274 = vector.broadcast %271 : vector<1x256xf32> to vector<16x256xf32>
    %275 = arith.mulf %239, %274 : vector<16x256xf32>
    %276 = arith.addf %273, %275 : vector<16x256xf32>
    %277 = arith.addf %276, %5 : vector<16x256xf32>
    %c0_250 = arith.constant 0 : index
    %c0_251 = arith.constant 0 : index
    %c0_252 = arith.constant 0 : index
    %278 = vector.load %arg16[%c0_250, %c0_251, %c0_252] : memref<1x16x256xf32, #tpu.memory_space<vmem>>, vector<1x16x256xf32>
    %279 = vector.shape_cast %278 : vector<1x16x256xf32> to vector<16x256xf32>
    %280 = vector.shape_cast %277 : vector<16x256xf32> to vector<1x16x256xf32>
    tpu.vector_store %arg16[%c0_250, %c0_251, %c0_252], %280 {strides = array<i32>} : memref<1x16x256xf32, #tpu.memory_space<vmem>>, vector<1x16x256xf32>,
    return
  }
  func.func @transform_0(%arg0: i32) -> (i32, i32, i32) {
    %c0_i32 = arith.constant 0 : i32
    %c0_i32_0 = arith.constant 0 : i32
    %c0_i32_1 = arith.constant 0 : i32
    return %arg0, %c0_i32, %c0_i32_0 : i32, i32, i32
  }
  func.func @transform_1(%arg0: i32) -> (i32, i32, i32, i32) {
    %c0_i32 = arith.constant 0 : i32
    %c0_i32_0 = arith.constant 0 : i32
    %c0_i32_1 = arith.constant 0 : i32
    %c0_i32_2 = arith.constant 0 : i32
    %c0_i32_3 = arith.constant 0 : i32
    return %c0_i32, %c0_i32_0, %c0_i32_1, %c0_i32_2 : i32, i32, i32, i32
  }
  func.func @transform_2(%arg0: i32) -> (i32, i32, i32) {
    %c0_i32 = arith.constant 0 : i32
    %c0_i32_0 = arith.constant 0 : i32
    %c0_i32_1 = arith.constant 0 : i32
    %c0_i32_2 = arith.constant 0 : i32
    return %c0_i32, %c0_i32_0, %c0_i32_1 : i32, i32, i32
  }
  func.func @transform_3(%arg0: i32) -> (i32, i32, i32) {
    %c0_i32 = arith.constant 0 : i32
    %c0_i32_0 = arith.constant 0 : i32
    %c0_i32_1 = arith.constant 0 : i32
    %c0_i32_2 = arith.constant 0 : i32
    return %c0_i32, %c0_i32_0, %c0_i32_1 : i32, i32, i32
  }
  func.func @transform_4(%arg0: i32) -> (i32, i32) {
    %c0_i32 = arith.constant 0 : i32
    %c0_i32_0 = arith.constant 0 : i32
    %c0_i32_1 = arith.constant 0 : i32
    return %c0_i32, %c0_i32_0 : i32, i32
  }
  func.func @transform_5(%arg0: i32) -> (i32, i32) {
    %c0_i32 = arith.constant 0 : i32
    %c0_i32_0 = arith.constant 0 : i32
    %c0_i32_1 = arith.constant 0 : i32
    return %c0_i32, %c0_i32_0 : i32, i32
  }
  func.func @transform_6(%arg0: i32) -> (i32, i32) {
    %c0_i32 = arith.constant 0 : i32
    %c0_i32_0 = arith.constant 0 : i32
    %c0_i32_1 = arith.constant 0 : i32
    return %c0_i32, %c0_i32_0 : i32, i32
  }
  func.func @transform_7(%arg0: i32) -> (i32, i32) {
    %c0_i32 = arith.constant 0 : i32
    %c0_i32_0 = arith.constant 0 : i32
    %c0_i32_1 = arith.constant 0 : i32
    return %c0_i32, %c0_i32_0 : i32, i32
  }
  func.func @transform_8(%arg0: i32) -> (i32, i32) {
    %c0_i32 = arith.constant 0 : i32
    %c0_i32_0 = arith.constant 0 : i32
    %c0_i32_1 = arith.constant 0 : i32
    return %c0_i32, %c0_i32_0 : i32, i32
  }
  func.func @transform_9(%arg0: i32) -> (i32, i32) {
    %c0_i32 = arith.constant 0 : i32
    %c0_i32_0 = arith.constant 0 : i32
    %c0_i32_1 = arith.constant 0 : i32
    return %c0_i32, %c0_i32_0 : i32, i32
  }
  func.func @transform_10(%arg0: i32) -> (i32, i32) {
    %c0_i32 = arith.constant 0 : i32
    %c0_i32_0 = arith.constant 0 : i32
    %c0_i32_1 = arith.constant 0 : i32
    return %c0_i32, %c0_i32_0 : i32, i32
  }
  func.func @transform_11(%arg0: i32) -> (i32, i32) {
    %c0_i32 = arith.constant 0 : i32
    %c0_i32_0 = arith.constant 0 : i32
    %c0_i32_1 = arith.constant 0 : i32
    return %c0_i32, %c0_i32_0 : i32, i32
  }
  func.func @transform_12(%arg0: i32) -> (i32, i32) {
    %c0_i32 = arith.constant 0 : i32
    %c0_i32_0 = arith.constant 0 : i32
    %c0_i32_1 = arith.constant 0 : i32
    return %c0_i32, %c0_i32_0 : i32, i32
  }
  func.func @transform_13(%arg0: i32) -> (i32, i32) {
    %c0_i32 = arith.constant 0 : i32
    %c0_i32_0 = arith.constant 0 : i32
    %c0_i32_1 = arith.constant 0 : i32
    return %c0_i32, %c0_i32_0 : i32, i32
  }
  func.func @transform_14(%arg0: i32) -> i32 {
    %c0_i32 = arith.constant 0 : i32
    %c0_i32_0 = arith.constant 0 : i32
    return %c0_i32 : i32
  }
  func.func @transform_15(%arg0: i32) -> (i32, i32, i32) {
    %c0_i32 = arith.constant 0 : i32
    %c0_i32_0 = arith.constant 0 : i32
    %c0_i32_1 = arith.constant 0 : i32
    return %arg0, %c0_i32, %c0_i32_0 : i32, i32, i32
  }
}

</mosaic_0001>

<llo_original>
// kernel: tile.44
$region0: #{tile.44}
  #allocation0 [shape = 's32[1]{0}', space=sflag, size = 0x4, scoped, tag = 'scoped memory for tile.44']
  %s0 = inlined_call_operand.vmem [shape: f32[16], index: 0, kind: input, shape index: {}]
  %s1 = inlined_call_operand.vmem [shape: f32[16,16], index: 1, kind: output, shape index: {}]
  // Predicated region
  $region2: #{tile.44} parent=0 // pred_check
    _
  $region3: #{tile.44} parent=0 // pred_check_branch
    %3 = sbr.rel (0) target = $region5
  $region4: #{tile.44} parent=0 // pred_region
    _
  $region5: #{tile.44} parent=0 // pred_fallthru
    _
  %v4 = vld [vmem:[%s0] ss:$0 sm:$0xff]
  %5 = vst [vmem:[%s1] sm:$0xff] %v4
  %s6 = scalar_lea.vmem %s1, 8
  %7 = vst [vmem:[%s6] sm:$0xff] %v4

// kernel: tile.49
$region0: #{tile.49}
  %s0 = inlined_call_operand.vmem [shape: f32[16,16], index: 0, kind: input, shape index: {}]
  %s1 = inlined_call_operand.vmem [shape: f32[1,256], index: 1, kind: output, shape index: {}]
  $region1: #{tile.49} parent=0
    #allocation0 [shape = 'u8[8192]{0}', space=vmem, size = 0x2000, scoped, tag = 'scoped mem for output reshape']
    %s2 = smov 3
    %v3 = vld [vmem:[%s0] ss:$8 sm:%s2]
    %vm4 = vcmask 130048
    %5 = vst.msk [vmem:[#allocation0] ss:$8 sm:$0x3] %vm4, %v3
    %s6 = scalar_lea.vmem %s0, 7
    %s7 = smov 3
    %v8 = vld [vmem:[%s6] ss:$8 sm:%s7]
    %9 = vrot.lane.b32.xlu0 %v8, 112
    %v10 = vpop.permute.xlu0 %9
    %vm11 = vcmask 1048448
    %12 = vst.msk [vmem:[#allocation0] ss:$8 sm:$0x3] %vm11, %v10
    %s13 = scalar_lea.vmem %s0, 6
    %s14 = smov 3
    %v15 = vld [vmem:[%s13] ss:$8 sm:%s14]
    %16 = vrot.lane.b32.xlu0 %v15, 96
    %v17 = vpop.permute.xlu0 %16
    %vm18 = vcmask 917248
    %19 = vst.msk [vmem:[#allocation0] ss:$8 sm:$0x3] %vm18, %v17
    %s20 = scalar_lea.vmem %s0, 5
    %s21 = smov 3
    %v22 = vld [vmem:[%s20] ss:$8 sm:%s21]
    %23 = vrot.lane.b32.xlu0 %v22, 80
    %v24 = vpop.permute.xlu0 %23
    %vm25 = vcmask 786048
    %26 = vst.msk [vmem:[#allocation0] ss:$8 sm:$0x3] %vm25, %v24
    %s27 = scalar_lea.vmem %s0, 4
    %s28 = smov 3
    %v29 = vld [vmem:[%s27] ss:$8 sm:%s28]
    %30 = vrot.lane.b32.xlu0 %v29, 64
    %v31 = vpop.permute.xlu0 %30
    %vm32 = vcmask 654848
    %33 = vst.msk [vmem:[#allocation0] ss:$8 sm:$0x3] %vm32, %v31
    %s34 = scalar_lea.vmem %s0, 3
    %s35 = smov 3
    %v36 = vld [vmem:[%s34] ss:$8 sm:%s35]
    %37 = vrot.lane.b32.xlu0 %v36, 48
    %v38 = vpop.permute.xlu0 %37
    %vm39 = vcmask 523648
    %40 = vst.msk [vmem:[#allocation0] ss:$8 sm:$0x3] %vm39, %v38
    %s41 = scalar_lea.vmem %s0, 2
    %s42 = smov 3
    %v43 = vld [vmem:[%s41] ss:$8 sm:%s42]
    %44 = vrot.lane.b32.xlu0 %v43, 32
    %v45 = vpop.permute.xlu0 %44
    %vm46 = vcmask 392448
    %47 = vst.msk [vmem:[#allocation0] ss:$8 sm:$0x3] %vm46, %v45
    %s48 = scalar_lea.vmem %s0, 1
    %s49 = smov 3
    %v50 = vld [vmem:[%s48] ss:$8 sm:%s49]
    %51 = vrot.lane.b32.xlu0 %v50, 16
    %v52 = vpop.permute.xlu0 %51
    %vm53 = vcmask 261248
    %54 = vst.msk [vmem:[#allocation0] ss:$8 sm:$0x3] %vm53, %v52
    %s56 = ssub.s32 2, 1
    %v57 = vld [vmem:[#allocation0] sm:%s56]
    %s59 = ssub.s32 2, 1
    %60 = vst [vmem:[%s1] sm:%s59] %v57
    %s61 = scalar_lea.vmem [#allocation0], 8
    %v62 = vld [vmem:[%s61] sm:%s56]
    %s64 = ssub.s32 2, 1
    %s65 = scalar_lea.vmem %s1, 1
    %66 = vst [vmem:[%s65] sm:%s64] %v62

// kernel: egrab_forward.1
$region0: #{egrab_forward.1}
  #allocation0 [shape = 'u32[]', space=smem, size = 0x4, offset = 0x4, fixed_abs, tag = 'smem constant byte address 0x4 - core index']
  #allocation1 [shape = 'u32[72,128]{1,0:T(1,128)}', space=vmem, size = 0x9000, scoped, tag = 'internal scratch']
  #allocation2 [shape = 'bf16[18,256]{1,0:T(8,128)(2,1)}', space=vmem, size = 0x3000, scoped, tag = 'scratch operand']
  #allocation3 [shape = 'f32[22,32]{1,0:T(8,128)}', space=vmem, size = 0x3000, scoped, tag = 'scratch operand']
  %s0 = inlined_call_operand.vmem [shape: f32[2,16,256], index: 0, kind: input, shape index: {}]
  %s1 = inlined_call_operand.vmem [shape: bf16[5,3,256,256], index: 1, kind: input, shape index: {}]
  %s2 = inlined_call_operand.vmem [shape: f32[5,1,256], index: 2, kind: input, shape index: {}]
  %s3 = inlined_call_operand.vmem [shape: f32[7,32,16], index: 3, kind: input, shape index: {}]
  %s4 = inlined_call_operand.vmem [shape: f32[256,16], index: 4, kind: input, shape index: {}]
  %s5 = inlined_call_operand.vmem [shape: f32[16,256], index: 5, kind: input, shape index: {}]
  %s6 = inlined_call_operand.vmem [shape: f32[256,16], index: 6, kind: input, shape index: {}]
  %s7 = inlined_call_operand.vmem [shape: f32[16,256], index: 7, kind: input, shape index: {}]
  %s8 = inlined_call_operand.vmem [shape: f32[16,32], index: 8, kind: input, shape index: {}]
  %s9 = inlined_call_operand.vmem [shape: f32[1,32], index: 9, kind: input, shape index: {}]
  %s10 = inlined_call_operand.vmem [shape: f32[32,16], index: 10, kind: input, shape index: {}]
  %s11 = inlined_call_operand.vmem [shape: f32[1,16], index: 11, kind: input, shape index: {}]
  %s12 = inlined_call_operand.vmem [shape: f32[32,16], index: 12, kind: input, shape index: {}]
  %s13 = inlined_call_operand.vmem [shape: f32[1,16], index: 13, kind: input, shape index: {}]
  %s14 = inlined_call_operand.vmem [shape: f32[2], index: 14, kind: input, shape index: {}]
  %s15 = inlined_call_operand.vmem [shape: f32[2,16,256], index: 15, kind: output, shape index: {}]
  %s16 = sld [smem:[#allocation0]]
  $region97: #{egrab_forward.1} parent=0
    _
  %s18 = ssub.s32 1, %s16
  %s19 = scalar_select 0, %s18, %s16
  $region1: #{egrab_forward.1} parent=0
    #allocation4 [shape = 'u8[512]{0}', space=smem, size = 0x200, scoped, tag = 'input window, operand 14, single buffered']
    #allocation5 [shape = 's32[2]{0}', space=sflag, size = 0x8, scoped, tag = 'scoped memory for egrab_forward.1']
    %20 = vsyncpa [#allocation5], 0
    loop: start=0, step=1, limit=4
    $region2: #{egrab_forward.1} parent=1 // loop_pre_header
      _
    $region3: #{egrab_forward.1} parent=1 // loop_header
      %s22 = sphi 0, %s26
      %p23 = scmp.ge.s32.totalorder %s22, 4
      %s32 = sphi 0, %s34
      %s35 = sphi 0, %s32
      %s36 = sphi 0, %s35
      %s52 = sphi 0, %s36
      %s56 = sphi 0, %s56
      %s58 = sphi 0, %s56
      %s59 = sphi 0, %s58
      %s73 = sphi 0, %s59
      %s77 = sphi 0, %s77
      %s79 = sphi 0, %s77
      %s80 = sphi 0, %s79
      %s94 = sphi 0, %s80
      %s98 = sphi 0, %s98
      %s100 = sphi 0, %s98
      %s101 = sphi 0, %s100
      %s115 = sphi 0, %s101
      %s119 = sphi 0, %s119
      %s121 = sphi 0, %s119
      %s122 = sphi 0, %s121
      %s136 = sphi 0, %s122
      %s140 = sphi 0, %s140
      %s142 = sphi 0, %s140
      %s143 = sphi 0, %s142
      %s157 = sphi 0, %s143
      %s161 = sphi 0, %s161
      %s163 = sphi 0, %s161
      %s164 = sphi 0, %s163
      %s178 = sphi 0, %s164
      %s182 = sphi 0, %s182
      %s184 = sphi 0, %s182
      %s185 = sphi 0, %s184
      %s199 = sphi 0, %s185
      %s203 = sphi 0, %s203
      %s205 = sphi 0, %s203
      %s206 = sphi 0, %s205
      %s220 = sphi 0, %s206
      %s224 = sphi 0, %s224
      %s226 = sphi 0, %s224
      %s227 = sphi 0, %s226
      %s241 = sphi 0, %s227
      %s245 = sphi 0, %s245
      %s247 = sphi 0, %s245
      %s248 = sphi 0, %s247
      %s262 = sphi 0, %s248
      %s266 = sphi 0, %s266
      %s268 = sphi 0, %s266
      %s269 = sphi 0, %s268
      %s283 = sphi 0, %s269
      %s287 = sphi 0, %s287
      %s289 = sphi 0, %s287
      %s290 = sphi 0, %s289
      %s304 = sphi 0, %s290
      %s308 = sphi 0, %s308
      %s310 = sphi 0, %s308
      %s311 = sphi 0, %s310
      %s325 = sphi 0, %s311
      %s329 = sphi 0, %s329
      %s331 = sphi 0, %s329
      %s332 = sphi 0, %s331
      %s346 = sphi 0, %s332
      %s352 = sphi 0, %s354
      %s355 = sphi 0, %s352
      %s356 = sphi 0, %s355
      %s372 = sphi 0, %s356
    $region4: #{egrab_forward.1} parent=1 // loop_header_branch
      %25 = sbr.rel (%p23) target = $region8
    $region5: #{egrab_forward.1} parent=1 // loop_body
      %s27 = ssub.s32 %s22, 1
      %s28 = ssub.s32 %s22, 2
      %s29 = sadd.s32 %s22, 1
      %s30 = ssub.s32 %s22, %s29
      %p31 = scmp.eq.s32.totalorder %s30, 0
      %s33 = sadd.s32 %s32, 1
      %s34 = scalar_select %p31, %s32, %s33
      %p37 = pneg %p31
      %p38 = scmp.eq.s32.totalorder %s22, 1
      %p39 = por %p37, %p38
      %p40 = scmp.ne.s32.totalorder %s32, %s35
      %p41 = scmp.eq.s32.totalorder %s22, 0
      %p42 = por %p40, %p41
      %p43 = scmp.ne.s32.totalorder %s32, %s35
      %p44 = scmp.eq.s32.totalorder %s27, 1
      %p45 = por %p43, %p44
      %p46 = scmp.ne.s32.totalorder %s35, %s36
      %p47 = scmp.eq.s32.totalorder %s27, 0
      %p48 = por %p46, %p47
      %p49 = scmp.ne.s32.totalorder %s35, %s36
      %p50 = scmp.eq.s32.totalorder %s28, 1
      %p51 = por %p49, %p50
      %p53 = scmp.ne.s32.totalorder %s36, %s52
      %p54 = scmp.eq.s32.totalorder %s28, 0
      %p55 = por %p53, %p54
      %s57 = sadd.s32 %s56, 1
      %p60 = scmp.eq.s32.totalorder %s22, 1
      %p61 = scmp.ne.s32.totalorder %s56, %s58
      %p62 = scmp.eq.s32.totalorder %s22, 0
      %p63 = por %p61, %p62
      %p64 = scmp.ne.s32.totalorder %s56, %s58
      %p65 = scmp.eq.s32.totalorder %s27, 1
      %p66 = por %p64, %p65
      %p67 = scmp.ne.s32.totalorder %s58, %s59
      %p68 = scmp.eq.s32.totalorder %s27, 0
      %p69 = por %p67, %p68
      %p70 = scmp.ne.s32.totalorder %s58, %s59
      %p71 = scmp.eq.s32.totalorder %s28, 1
      %p72 = por %p70, %p71
      %p74 = scmp.ne.s32.totalorder %s59, %s73
      %p75 = scmp.eq.s32.totalorder %s28, 0
      %p76 = por %p74, %p75
      %s78 = sadd.s32 %s77, 1
      %p81 = scmp.eq.s32.totalorder %s22, 1
      %p82 = scmp.ne.s32.totalorder %s77, %s79
      %p83 = scmp.eq.s32.totalorder %s22, 0
      %p84 = por %p82, %p83
      %p85 = scmp.ne.s32.totalorder %s77, %s79
      %p86 = scmp.eq.s32.totalorder %s27, 1
      %p87 = por %p85, %p86
      %p88 = scmp.ne.s32.totalorder %s79, %s80
      %p89 = scmp.eq.s32.totalorder %s27, 0
      %p90 = por %p88, %p89
      %p91 = scmp.ne.s32.totalorder %s79, %s80
      %p92 = scmp.eq.s32.totalorder %s28, 1
      %p93 = por %p91, %p92
      %p95 = scmp.ne.s32.totalorder %s80, %s94
      %p96 = scmp.eq.s32.totalorder %s28, 0
      %p97 = por %p95, %p96
      %s99 = sadd.s32 %s98, 1
      %p102 = scmp.eq.s32.totalorder %s22, 1
      %p103 = scmp.ne.s32.totalorder %s98, %s100
      %p104 = scmp.eq.s32.totalorder %s22, 0
      %p105 = por %p103, %p104
      %p106 = scmp.ne.s32.totalorder %s98, %s100
      %p107 = scmp.eq.s32.totalorder %s27, 1
      %p108 = por %p106, %p107
      %p109 = scmp.ne.s32.totalorder %s100, %s101
      %p110 = scmp.eq.s32.totalorder %s27, 0
      %p111 = por %p109, %p110
      %p112 = scmp.ne.s32.totalorder %s100, %s101
      %p113 = scmp.eq.s32.totalorder %s28, 1
      %p114 = por %p112, %p113
      %p116 = scmp.ne.s32.totalorder %s101, %s115
      %p117 = scmp.eq.s32.totalorder %s28, 0
      %p118 = por %p116, %p117
      %s120 = sadd.s32 %s119, 1
      %p123 = scmp.eq.s32.totalorder %s22, 1
      %p124 = scmp.ne.s32.totalorder %s119, %s121
      %p125 = scmp.eq.s32.totalorder %s22, 0
      %p126 = por %p124, %p125
      %p127 = scmp.ne.s32.totalorder %s119, %s121
      %p128 = scmp.eq.s32.totalorder %s27, 1
      %p129 = por %p127, %p128
      %p130 = scmp.ne.s32.totalorder %s121, %s122
      %p131 = scmp.eq.s32.totalorder %s27, 0
      %p132 = por %p130, %p131
      %p133 = scmp.ne.s32.totalorder %s121, %s122
      %p134 = scmp.eq.s32.totalorder %s28, 1
      %p135 = por %p133, %p134
      %p137 = scmp.ne.s32.totalorder %s122, %s136
      %p138 = scmp.eq.s32.totalorder %s28, 0
      %p139 = por %p137, %p138
      %s141 = sadd.s32 %s140, 1
      %p144 = scmp.eq.s32.totalorder %s22, 1
      %p145 = scmp.ne.s32.totalorder %s140, %s142
      %p146 = scmp.eq.s32.totalorder %s22, 0
      %p147 = por %p145, %p146
      %p148 = scmp.ne.s32.totalorder %s140, %s142
      %p149 = scmp.eq.s32.totalorder %s27, 1
      %p150 = por %p148, %p149
      %p151 = scmp.ne.s32.totalorder %s142, %s143
      %p152 = scmp.eq.s32.totalorder %s27, 0
      %p153 = por %p151, %p152
      %p154 = scmp.ne.s32.totalorder %s142, %s143
      %p155 = scmp.eq.s32.totalorder %s28, 1
      %p156 = por %p154, %p155
      %p158 = scmp.ne.s32.totalorder %s143, %s157
      %p159 = scmp.eq.s32.totalorder %s28, 0
      %p160 = por %p158, %p159
      %s162 = sadd.s32 %s161, 1
      %p165 = scmp.eq.s32.totalorder %s22, 1
      %p166 = scmp.ne.s32.totalorder %s161, %s163
      %p167 = scmp.eq.s32.totalorder %s22, 0
      %p168 = por %p166, %p167
      %p169 = scmp.ne.s32.totalorder %s161, %s163
      %p170 = scmp.eq.s32.totalorder %s27, 1
      %p171 = por %p169, %p170
      %p172 = scmp.ne.s32.totalorder %s163, %s164
      %p173 = scmp.eq.s32.totalorder %s27, 0
      %p174 = por %p172, %p173
      %p175 = scmp.ne.s32.totalorder %s163, %s164
      %p176 = scmp.eq.s32.totalorder %s28, 1
      %p177 = por %p175, %p176
      %p179 = scmp.ne.s32.totalorder %s164, %s178
      %p180 = scmp.eq.s32.totalorder %s28, 0
      %p181 = por %p179, %p180
      %s183 = sadd.s32 %s182, 1
      %p186 = scmp.eq.s32.totalorder %s22, 1
      %p187 = scmp.ne.s32.totalorder %s182, %s184
      %p188 = scmp.eq.s32.totalorder %s22, 0
      %p189 = por %p187, %p188
      %p190 = scmp.ne.s32.totalorder %s182, %s184
      %p191 = scmp.eq.s32.totalorder %s27, 1
      %p192 = por %p190, %p191
      %p193 = scmp.ne.s32.totalorder %s184, %s185
      %p194 = scmp.eq.s32.totalorder %s27, 0
      %p195 = por %p193, %p194
      %p196 = scmp.ne.s32.totalorder %s184, %s185
      %p197 = scmp.eq.s32.totalorder %s28, 1
      %p198 = por %p196, %p197
      %p200 = scmp.ne.s32.totalorder %s185, %s199
      %p201 = scmp.eq.s32.totalorder %s28, 0
      %p202 = por %p200, %p201
      %s204 = sadd.s32 %s203, 1
      %p207 = scmp.eq.s32.totalorder %s22, 1
      %p208 = scmp.ne.s32.totalorder %s203, %s205
      %p209 = scmp.eq.s32.totalorder %s22, 0
      %p210 = por %p208, %p209
      %p211 = scmp.ne.s32.totalorder %s203, %s205
      %p212 = scmp.eq.s32.totalorder %s27, 1
      %p213 = por %p211, %p212
      %p214 = scmp.ne.s32.totalorder %s205, %s206
      %p215 = scmp.eq.s32.totalorder %s27, 0
      %p216 = por %p214, %p215
      %p217 = scmp.ne.s32.totalorder %s205, %s206
      %p218 = scmp.eq.s32.totalorder %s28, 1
      %p219 = por %p217, %p218
      %p221 = scmp.ne.s32.totalorder %s206, %s220
      %p222 = scmp.eq.s32.totalorder %s28, 0
      %p223 = por %p221, %p222
      %s225 = sadd.s32 %s224, 1
      %p228 = scmp.eq.s32.totalorder %s22, 1
      %p229 = scmp.ne.s32.totalorder %s224, %s226
      %p230 = scmp.eq.s32.totalorder %s22, 0
      %p231 = por %p229, %p230
      %p232 = scmp.ne.s32.totalorder %s224, %s226
      %p233 = scmp.eq.s32.totalorder %s27, 1
      %p234 = por %p232, %p233
      %p235 = scmp.ne.s32.totalorder %s226, %s227
      %p236 = scmp.eq.s32.totalorder %s27, 0
      %p237 = por %p235, %p236
      %p238 = scmp.ne.s32.totalorder %s226, %s227
      %p239 = scmp.eq.s32.totalorder %s28, 1
      %p240 = por %p238, %p239
      %p242 = scmp.ne.s32.totalorder %s227, %s241
      %p243 = scmp.eq.s32.totalorder %s28, 0
      %p244 = por %p242, %p243
      %s246 = sadd.s32 %s245, 1
      %p249 = scmp.eq.s32.totalorder %s22, 1
      %p250 = scmp.ne.s32.totalorder %s245, %s247
      %p251 = scmp.eq.s32.totalorder %s22, 0
      %p252 = por %p250, %p251
      %p253 = scmp.ne.s32.totalorder %s245, %s247
      %p254 = scmp.eq.s32.totalorder %s27, 1
      %p255 = por %p253, %p254
      %p256 = scmp.ne.s32.totalorder %s247, %s248
      %p257 = scmp.eq.s32.totalorder %s27, 0
      %p258 = por %p256, %p257
      %p259 = scmp.ne.s32.totalorder %s247, %s248
      %p260 = scmp.eq.s32.totalorder %s28, 1
      %p261 = por %p259, %p260
      %p263 = scmp.ne.s32.totalorder %s248, %s262
      %p264 = scmp.eq.s32.totalorder %s28, 0
      %p265 = por %p263, %p264
      %s267 = sadd.s32 %s266, 1
      %p270 = scmp.eq.s32.totalorder %s22, 1
      %p271 = scmp.ne.s32.totalorder %s266, %s268
      %p272 = scmp.eq.s32.totalorder %s22, 0
      %p273 = por %p271, %p272
      %p274 = scmp.ne.s32.totalorder %s266, %s268
      %p275 = scmp.eq.s32.totalorder %s27, 1
      %p276 = por %p274, %p275
      %p277 = scmp.ne.s32.totalorder %s268, %s269
      %p278 = scmp.eq.s32.totalorder %s27, 0
      %p279 = por %p277, %p278
      %p280 = scmp.ne.s32.totalorder %s268, %s269
      %p281 = scmp.eq.s32.totalorder %s28, 1
      %p282 = por %p280, %p281
      %p284 = scmp.ne.s32.totalorder %s269, %s283
      %p285 = scmp.eq.s32.totalorder %s28, 0
      %p286 = por %p284, %p285
      %s288 = sadd.s32 %s287, 1
      %p291 = scmp.eq.s32.totalorder %s22, 1
      %p292 = scmp.ne.s32.totalorder %s287, %s289
      %p293 = scmp.eq.s32.totalorder %s22, 0
      %p294 = por %p292, %p293
      %p295 = scmp.ne.s32.totalorder %s287, %s289
      %p296 = scmp.eq.s32.totalorder %s27, 1
      %p297 = por %p295, %p296
      %p298 = scmp.ne.s32.totalorder %s289, %s290
      %p299 = scmp.eq.s32.totalorder %s27, 0
      %p300 = por %p298, %p299
      %p301 = scmp.ne.s32.totalorder %s289, %s290
      %p302 = scmp.eq.s32.totalorder %s28, 1
      %p303 = por %p301, %p302
      %p305 = scmp.ne.s32.totalorder %s290, %s304
      %p306 = scmp.eq.s32.totalorder %s28, 0
      %p307 = por %p305, %p306
      %s309 = sadd.s32 %s308, 1
      %p312 = scmp.eq.s32.totalorder %s22, 1
      %p313 = scmp.ne.s32.totalorder %s308, %s310
      %p314 = scmp.eq.s32.totalorder %s22, 0
      %p315 = por %p313, %p314
      %p316 = scmp.ne.s32.totalorder %s308, %s310
      %p317 = scmp.eq.s32.totalorder %s27, 1
      %p318 = por %p316, %p317
      %p319 = scmp.ne.s32.totalorder %s310, %s311
      %p320 = scmp.eq.s32.totalorder %s27, 0
      %p321 = por %p319, %p320
      %p322 = scmp.ne.s32.totalorder %s310, %s311
      %p323 = scmp.eq.s32.totalorder %s28, 1
      %p324 = por %p322, %p323
      %p326 = scmp.ne.s32.totalorder %s311, %s325
      %p327 = scmp.eq.s32.totalorder %s28, 0
      %p328 = por %p326, %p327
      %s330 = sadd.s32 %s329, 1
      %p333 = scmp.eq.s32.totalorder %s22, 1
      %p334 = scmp.ne.s32.totalorder %s329, %s331
      %p335 = scmp.eq.s32.totalorder %s22, 0
      %p336 = por %p334, %p335
      %p337 = scmp.ne.s32.totalorder %s329, %s331
      %p338 = scmp.eq.s32.totalorder %s27, 1
      %p339 = por %p337, %p338
      %p340 = scmp.ne.s32.totalorder %s331, %s332
      %p341 = scmp.eq.s32.totalorder %s27, 0
      %p342 = por %p340, %p341
      %p343 = scmp.ne.s32.totalorder %s331, %s332
      %p344 = scmp.eq.s32.totalorder %s28, 1
      %p345 = por %p343, %p344
      %p347 = scmp.ne.s32.totalorder %s332, %s346
      %p348 = scmp.eq.s32.totalorder %s28, 0
      %p349 = por %p347, %p348
      %s350 = ssub.s32 %s22, %s29
      %p351 = scmp.eq.s32.totalorder %s350, 0
      %s353 = sadd.s32 %s352, 1
      %s354 = scalar_select %p351, %s352, %s353
      %p357 = pneg %p351
      %p358 = scmp.eq.s32.totalorder %s22, 1
      %p359 = por %p357, %p358
      %p360 = scmp.ne.s32.totalorder %s352, %s355
      %p361 = scmp.eq.s32.totalorder %s22, 0
      %p362 = por %p360, %p361
      %p363 = scmp.ne.s32.totalorder %s352, %s355
      %p364 = scmp.eq.s32.totalorder %s27, 1
      %p365 = por %p363, %p364
      %p366 = scmp.ne.s32.totalorder %s355, %s356
      %p367 = scmp.eq.s32.totalorder %s27, 0
      %p368 = por %p366, %p367
      %p369 = scmp.ne.s32.totalorder %s355, %s356
      %p370 = scmp.eq.s32.totalorder %s28, 1
      %p371 = por %p369, %p370
      %p373 = scmp.ne.s32.totalorder %s356, %s372
      %p374 = scmp.eq.s32.totalorder %s28, 0
      %p375 = por %p373, %p374
      %p376 = scmp.le.s32.totalorder 1, %s22
      %p377 = scmp.lt.s32.totalorder %s22, 3
      %p378 = pnand %p376, %p377
      %p379 = pneg %p378
      // Predicated region
      $region9: #{egrab_forward.1} parent=5 // pred_check
        _
      $region10: #{egrab_forward.1} parent=5 // pred_check_branch
        %381 = sbr.rel (%p378) target = $region12
      $region11: #{egrab_forward.1} parent=5 // pred_region
        %s382 = ssub.s32 %s22, 1
        // Predicated region
        $region13: #{egrab_forward.1} parent=11 // pred_check
          %p383 = pneg %p69
        $region14: #{egrab_forward.1} parent=11 // pred_check_branch
          %385 = sbr.rel (%p383) target = $region16
        $region15: #{egrab_forward.1} parent=11 // pred_region
          _
        $region16: #{egrab_forward.1} parent=11 // pred_fallthru
          _
        // Predicated region
        $region17: #{egrab_forward.1} parent=11 // pred_check
          %p386 = pneg %p90
        $region18: #{egrab_forward.1} parent=11 // pred_check_branch
          %388 = sbr.rel (%p386) target = $region20
        $region19: #{egrab_forward.1} parent=11 // pred_region
          _
        $region20: #{egrab_forward.1} parent=11 // pred_fallthru
          _
        // Predicated region
        $region21: #{egrab_forward.1} parent=11 // pred_check
          %p389 = pneg %p111
        $region22: #{egrab_forward.1} parent=11 // pred_check_branch
          %391 = sbr.rel (%p389) target = $region24
        $region23: #{egrab_forward.1} parent=11 // pred_region
          _
        $region24: #{egrab_forward.1} parent=11 // pred_fallthru
          _
        // Predicated region
        $region25: #{egrab_forward.1} parent=11 // pred_check
          %p392 = pneg %p132
        $region26: #{egrab_forward.1} parent=11 // pred_check_branch
          %394 = sbr.rel (%p392) target = $region28
        $region27: #{egrab_forward.1} parent=11 // pred_region
          _
        $region28: #{egrab_forward.1} parent=11 // pred_fallthru
          _
        // Predicated region
        $region29: #{egrab_forward.1} parent=11 // pred_check
          %p395 = pneg %p153
        $region30: #{egrab_forward.1} parent=11 // pred_check_branch
          %397 = sbr.rel (%p395) target = $region32
        $region31: #{egrab_forward.1} parent=11 // pred_region
          _
        $region32: #{egrab_forward.1} parent=11 // pred_fallthru
          _
        // Predicated region
        $region33: #{egrab_forward.1} parent=11 // pred_check
          %p398 = pneg %p174
        $region34: #{egrab_forward.1} parent=11 // pred_check_branch
          %400 = sbr.rel (%p398) target = $region36
        $region35: #{egrab_forward.1} parent=11 // pred_region
          _
        $region36: #{egrab_forward.1} parent=11 // pred_fallthru
          _
        // Predicated region
        $region37: #{egrab_forward.1} parent=11 // pred_check
          %p401 = pneg %p195
        $region38: #{egrab_forward.1} parent=11 // pred_check_branch
          %403 = sbr.rel (%p401) target = $region40
        $region39: #{egrab_forward.1} parent=11 // pred_region
          _
        $region40: #{egrab_forward.1} parent=11 // pred_fallthru
          _
        // Predicated region
        $region41: #{egrab_forward.1} parent=11 // pred_check
          %p404 = pneg %p216
        $region42: #{egrab_forward.1} parent=11 // pred_check_branch
          %406 = sbr.rel (%p404) target = $region44
        $region43: #{egrab_forward.1} parent=11 // pred_region
          _
        $region44: #{egrab_forward.1} parent=11 // pred_fallthru
          _
        // Predicated region
        $region45: #{egrab_forward.1} parent=11 // pred_check
          %p407 = pneg %p237
        $region46: #{egrab_forward.1} parent=11 // pred_check_branch
          %409 = sbr.rel (%p407) target = $region48
        $region47: #{egrab_forward.1} parent=11 // pred_region
          _
        $region48: #{egrab_forward.1} parent=11 // pred_fallthru
          _
        // Predicated region
        $region49: #{egrab_forward.1} parent=11 // pred_check
          %p410 = pneg %p258
        $region50: #{egrab_forward.1} parent=11 // pred_check_branch
          %412 = sbr.rel (%p410) target = $region52
        $region51: #{egrab_forward.1} parent=11 // pred_region
          _
        $region52: #{egrab_forward.1} parent=11 // pred_fallthru
          _
        // Predicated region
        $region53: #{egrab_forward.1} parent=11 // pred_check
          %p413 = pneg %p279
        $region54: #{egrab_forward.1} parent=11 // pred_check_branch
          %415 = sbr.rel (%p413) target = $region56
        $region55: #{egrab_forward.1} parent=11 // pred_region
          _
        $region56: #{egrab_forward.1} parent=11 // pred_fallthru
          _
        // Predicated region
        $region57: #{egrab_forward.1} parent=11 // pred_check
          %p416 = pneg %p300
        $region58: #{egrab_forward.1} parent=11 // pred_check_branch
          %418 = sbr.rel (%p416) target = $region60
        $region59: #{egrab_forward.1} parent=11 // pred_region
          _
        $region60: #{egrab_forward.1} parent=11 // pred_fallthru
          _
        // Predicated region
        $region61: #{egrab_forward.1} parent=11 // pred_check
          %p419 = pneg %p321
        $region62: #{egrab_forward.1} parent=11 // pred_check_branch
          %421 = sbr.rel (%p419) target = $region64
        $region63: #{egrab_forward.1} parent=11 // pred_region
          _
        $region64: #{egrab_forward.1} parent=11 // pred_fallthru
          _
        // Predicated region
        $region65: #{egrab_forward.1} parent=11 // pred_check
          %p422 = pneg %p342
        $region66: #{egrab_forward.1} parent=11 // pred_check_branch
          %424 = sbr.rel (%p422) target = $region68
        $region67: #{egrab_forward.1} parent=11 // pred_region
          %426 = vsyncadd [#allocation5], 0
          %s428 = sshll.u32 %s14, 4
          %s429 = int_to_ptr.vmem [resolvable:$true] %s428
          %431 = dma.vmem_to_smem %s429, 16, [#allocation4], [#allocation5]
        $region68: #{egrab_forward.1} parent=11 // pred_fallthru
          _
      $region12: #{egrab_forward.1} parent=5 // pred_fallthru
        _
      %p432 = scmp.lt.s32.totalorder %s22, 2
      // Predicated region
      $region69: #{egrab_forward.1} parent=5 // pred_check
        %p433 = pneg %p432
      $region70: #{egrab_forward.1} parent=5 // pred_check_branch
        %435 = sbr.rel (%p433) target = $region72
      $region71: #{egrab_forward.1} parent=5 // pred_region
        // Predicated region
        $region73: #{egrab_forward.1} parent=71 // pred_check
          %p436 = pneg %p42
        $region74: #{egrab_forward.1} parent=71 // pred_check_branch
          %438 = sbr.rel (%p436) target = $region76
        $region75: #{egrab_forward.1} parent=71 // pred_region
          %p439 = scmp.lt.s32.totalorder %s22, 1
          %s440 = scalar_select %p439, %s22, 1
          %s441 = smul.addr %s440, 4
          %s442 = smul.addr %s441, 8
          %s443 = scalar_lea.vmem %s0, %s442
        $region76: #{egrab_forward.1} parent=71 // pred_fallthru
          _
      $region72: #{egrab_forward.1} parent=5 // pred_fallthru
        _
      %p444 = scmp.le.s32.totalorder 1, %s22
      %p445 = scmp.lt.s32.totalorder %s22, 3
      %p446 = pnand %p444, %p445
      %p447 = pneg %p446
      // Predicated region
      $region77: #{egrab_forward.1} parent=5 // pred_check
        _
      $region78: #{egrab_forward.1} parent=5 // pred_check_branch
        %449 = sbr.rel (%p446) target = $region80
      $region79: #{egrab_forward.1} parent=5 // pred_region
        %s450 = ssub.s32 %s22, 1
        // Predicated region
        $region81: #{egrab_forward.1} parent=79 // pred_check
          %p451 = pneg %p342
        $region82: #{egrab_forward.1} parent=79 // pred_check_branch
          %453 = sbr.rel (%p451) target = $region84
        $region83: #{egrab_forward.1} parent=79 // pred_region
          %455 = dma.done [#allocation5], 16
        $region84: #{egrab_forward.1} parent=79 // pred_fallthru
          _
        %456 = sfence
        %p457 = scmp.lt.s32.totalorder %s27, 1
        %s458 = scalar_select %p457, %s27, 1
        %s459 = smul.addr %s458, 4
        %s460 = smul.addr %s459, 8
        %s461 = scalar_lea.vmem %s0, %s460
        %p462 = pneg %p48
        %p463 = pneg %p45
        %p464 = pneg %p69
        %p465 = pneg %p66
        %p466 = pneg %p90
        %p467 = pneg %p87
        %p468 = pneg %p111
        %p469 = pneg %p108
        %p470 = pneg %p132
        %p471 = pneg %p129
        %p472 = pneg %p153
        %p473 = pneg %p150
        %p474 = pneg %p174
        %p475 = pneg %p171
        %p476 = pneg %p195
        %p477 = pneg %p192
        %p478 = pneg %p216
        %p479 = pneg %p213
        %p480 = pneg %p237
        %p481 = pneg %p234
        %p482 = pneg %p258
        %p483 = pneg %p255
        %p484 = pneg %p279
        %p485 = pneg %p276
        %p486 = pneg %p300
        %p487 = pneg %p297
        %p488 = pneg %p321
        %p489 = pneg %p318
        %p490 = pneg %p342
        %p491 = pneg %p339
        %p492 = pneg %p368
        %p493 = pneg %p365
        %p494 = scmp.lt.s32.totalorder %s27, 1
        %s495 = scalar_select %p494, %s27, 1
        %s496 = smul.addr %s495, 4
        %s497 = smul.addr %s496, 8
        %s498 = scalar_lea.vmem %s15, %s497
        %p499 = scmp.lt.s32.totalorder %s27, 1
        %s500 = scalar_select %p499, %s27, 1
        %s501 = smul.addr %s500, 4
        %s502 = smul.addr %s501, 8
        %s503 = scalar_lea.vmem %s0, %s502
        %p504 = scmp.lt.s32.totalorder %s27, 1
        %s505 = scalar_select %p504, %s27, 1
        %s506 = smul.addr %s505, 4
        %s507 = smul.addr %s506, 8
        %s508 = scalar_lea.vmem %s15, %s507
        %510 = vst [vmem:[#allocation2] sm:$0xff] 0
        %511 = vst [vmem:[#allocation2 + $0x8] sm:$0xff] 0
        %512 = vst [vmem:[#allocation2 + $0x10] sm:$0x11] 0
        %vm513 = vcmask 261120
        %514 = vst.msk [vmem:[#allocation3] sm:$0xff] %vm513, 0.0
        %515 = vst.msk [vmem:[#allocation3 + $0x8] sm:$0xff] %vm513, 0.0
        %vm516 = vcmask 259072
        %517 = vst.msk [vmem:[#allocation3 + $0x10] sm:$0x3f] %vm516, 0.0
        %v518 = vld [vmem:[%s503] sm:$0xff]
        %v519 = vld [vmem:[%s503 + $0x8] sm:$0xff]
        %v520 = vld [vmem:[%s503 + $0x10] sm:$0xff]
        %v521 = vld [vmem:[%s503 + $0x18] sm:$0xff]
        %v522 = vpack.c.bf16 %v519, %v518
        %v523 = vpack.c.bf16 %v521, %v520
        %vm524 = vsmask.f32 256
        %vm525 = vsmask.f32 4368
        %vm526 = vmor %vm524, %vm525
        %v528 = vshrl.u32 %v522, 16
        %v530 = vrot.slane %v528, 7
        %v531 = vshll.u32 %v522, 16
        %v533 = vor.u32 %v530, %v531
        %v534 = vrot.slane %v530, 4
        %v536 = vshrl.u32 %v523, 16
        %v538 = vrot.slane %v536, 7
        %v539 = vshll.u32 %v523, 16
        %v541 = vor.u32 %v538, %v539
        %v542 = vsel %vm526, %v534, %v541
        %v543 = vrot.slane %v538, 4
        %vm547 = vcmask 1043456
        %vm548 = vsmask.f32 7938
        %vm549 = vmand %vm547, %vm548
        %vm550 = vcmask 1047556
        %vm551 = vsmask.f32 7954
        %vm552 = vmand %vm550, %vm551
        %vm553 = vmor %vm552, %vm549
        %v554 = vld [vmem:[#allocation2] sm:$0xff]
        %v555 = vsel %vm553, %v533, %v554
        %556 = vst [vmem:[#allocation2] sm:$0xff] %v555
        %557 = vst [vmem:[#allocation2 + $0x8] sm:$0xff] %v542
        %vm558 = vcmask 1040384
        %vm559 = vmand %vm558, %vm524
        %vm560 = vcmask 1044484
        %vm561 = vsmask.f32 4352
        %vm562 = vmand %vm560, %vm561
        %vm563 = vmor %vm562, %vm559
        %v564 = vld [vmem:[#allocation2 + $0x10] sm:$0x11]
        %v565 = vsel %vm563, %v543, %v564
        %566 = vst [vmem:[#allocation2 + $0x10] sm:$0x11] %v565
        %v567 = vld [vmem:[#allocation2] sm:$0xff]
        %v568 = vld [vmem:[#allocation2 + $0x8] sm:$0xff]
        %v569 = vld [vmem:[%s1] sm:$0xff]
        %v570 = vld [vmem:[%s1 + $0x8] sm:$0xff]
        %v571 = vld [vmem:[%s1 + $0x10] sm:$0xff]
        %v572 = vld [vmem:[%s1 + $0x18] sm:$0xff]
        %v573 = vld [vmem:[%s1 + $0x20] sm:$0xff]
        %v574 = vld [vmem:[%s1 + $0x28] sm:$0xff]
        %v575 = vld [vmem:[%s1 + $0x30] sm:$0xff]
        %v576 = vld [vmem:[%s1 + $0x38] sm:$0xff]
        %v577 = vld [vmem:[%s1 + $0x40] sm:$0xff]
        %v578 = vld [vmem:[%s1 + $0x48] sm:$0xff]
        %v579 = vld [vmem:[%s1 + $0x50] sm:$0xff]
        %v580 = vld [vmem:[%s1 + $0x58] sm:$0xff]
        %v581 = vld [vmem:[%s1 + $0x60] sm:$0xff]
        %v582 = vld [vmem:[%s1 + $0x68] sm:$0xff]
        %v583 = vld [vmem:[%s1 + $0x70] sm:$0xff]
        %v584 = vld [vmem:[%s1 + $0x78] sm:$0xff]
        %v585 = vld [vmem:[%s1 + $0x80] sm:$0xff]
        %v586 = vld [vmem:[%s1 + $0x88] sm:$0xff]
        %v587 = vld [vmem:[%s1 + $0x90] sm:$0xff]
        %v588 = vld [vmem:[%s1 + $0x98] sm:$0xff]
        %v589 = vld [vmem:[%s1 + $0xa0] sm:$0xff]
        %v590 = vld [vmem:[%s1 + $0xa8] sm:$0xff]
        %v591 = vld [vmem:[%s1 + $0xb0] sm:$0xff]
        %v592 = vld [vmem:[%s1 + $0xb8] sm:$0xff]
        %v593 = vld [vmem:[%s1 + $0xc0] sm:$0xff]
        %v594 = vld [vmem:[%s1 + $0xc8] sm:$0xff]
        %v595 = vld [vmem:[%s1 + $0xd0] sm:$0xff]
        %v596 = vld [vmem:[%s1 + $0xd8] sm:$0xff]
        %v597 = vld [vmem:[%s1 + $0xe0] sm:$0xff]
        %v598 = vld [vmem:[%s1 + $0xe8] sm:$0xff]
        %v599 = vld [vmem:[%s1 + $0xf0] sm:$0xff]
        %v600 = vld [vmem:[%s1 + $0xf8] sm:$0xff]
        %v601 = vld [vmem:[#allocation2 + $0x10] sm:$0x11]
        %s602 = scalar_lea.vmem %s1, 256
        %v603 = vld [vmem:[%s602] sm:$0xff]
        %v604 = vld [vmem:[%s602 + $0x8] sm:$0xff]
        %v605 = vld [vmem:[%s602 + $0x10] sm:$0xff]
        %v606 = vld [vmem:[%s602 + $0x18] sm:$0xff]
        %v607 = vld [vmem:[%s602 + $0x20] sm:$0xff]
        %v608 = vld [vmem:[%s602 + $0x28] sm:$0xff]
        %v609 = vld [vmem:[%s602 + $0x30] sm:$0xff]
        %v610 = vld [vmem:[%s602 + $0x38] sm:$0xff]
        %v611 = vld [vmem:[%s602 + $0x40] sm:$0xff]
        %v612 = vld [vmem:[%s602 + $0x48] sm:$0xff]
        %v613 = vld [vmem:[%s602 + $0x50] sm:$0xff]
        %v614 = vld [vmem:[%s602 + $0x58] sm:$0xff]
        %v615 = vld [vmem:[%s602 + $0x60] sm:$0xff]
        %v616 = vld [vmem:[%s602 + $0x68] sm:$0xff]
        %v617 = vld [vmem:[%s602 + $0x70] sm:$0xff]
        %v618 = vld [vmem:[%s602 + $0x78] sm:$0xff]
        %v619 = vld [vmem:[%s602 + $0x80] sm:$0xff]
        %v620 = vld [vmem:[%s602 + $0x88] sm:$0xff]
        %v621 = vld [vmem:[%s602 + $0x90] sm:$0xff]
        %v622 = vld [vmem:[%s602 + $0x98] sm:$0xff]
        %v623 = vld [vmem:[%s602 + $0xa0] sm:$0xff]
        %v624 = vld [vmem:[%s602 + $0xa8] sm:$0xff]
        %v625 = vld [vmem:[%s602 + $0xb0] sm:$0xff]
        %v626 = vld [vmem:[%s602 + $0xb8] sm:$0xff]
        %v627 = vld [vmem:[%s602 + $0xc0] sm:$0xff]
        %v628 = vld [vmem:[%s602 + $0xc8] sm:$0xff]
        %v629 = vld [vmem:[%s602 + $0xd0] sm:$0xff]
        %v630 = vld [vmem:[%s602 + $0xd8] sm:$0xff]
        %v631 = vld [vmem:[%s602 + $0xe0] sm:$0xff]
        %v632 = vld [vmem:[%s602 + $0xe8] sm:$0xff]
        %v633 = vld [vmem:[%s602 + $0xf0] sm:$0xff]
        %v634 = vld [vmem:[%s602 + $0xf8] sm:$0xff]
        %v638 = vunpack.c.l.b16 %v567
        %v639 = vunpack.c.h.b16 %v567
        %v640 = vunpack.c.l.b16 %v568
        %v641 = vunpack.c.h.b16 %v568
        %v642 = vunpack.c.l.b16 %v601
        %v643 = vunpack.c.h.b16 %v601
        %v644 = vpack.c.b16 %v640, %v638
        %v645 = vpack.c.b16 %v641, %v639
        %v646 = vpack.c.b16 %v642, %v642
        %v647 = vpack.c.b16 %v643, %v643
        %vm648 = vsmask.f32 7424
        %v650 = vshrl.u32 %v644, 16
        %v652 = vshll.u32 %v644, 16
        %v654 = vrot.slane %v652, 1
        %v655 = vor.u32 %v650, %v654
        %v657 = vshll.u32 %v646, 16
        %v659 = vrot.slane %v657, 1
        %v660 = vsel %vm648, %v655, %v659
        %v662 = vshrl.u32 %v645, 16
        %v664 = vshll.u32 %v645, 16
        %v666 = vrot.slane %v664, 1
        %v667 = vor.u32 %v662, %v666
        %v669 = vshll.u32 %v647, 16
        %v671 = vrot.slane %v669, 1
        %v672 = vsel %vm648, %v667, %v671
        %v707 = vunpack.c.l.b16 %v603
        %v708 = vunpack.c.h.b16 %v603
        %v709 = vunpack.c.l.b16 %v604
        %v710 = vunpack.c.h.b16 %v604
        %v711 = vunpack.c.l.b16 %v605
        %v712 = vunpack.c.h.b16 %v605
        %v713 = vunpack.c.l.b16 %v606
        %v714 = vunpack.c.h.b16 %v606
        %v715 = vunpack.c.l.b16 %v607
        %v716 = vunpack.c.h.b16 %v607
        %v717 = vunpack.c.l.b16 %v608
        %v718 = vunpack.c.h.b16 %v608
        %v719 = vunpack.c.l.b16 %v609
        %v720 = vunpack.c.h.b16 %v609
        %v721 = vunpack.c.l.b16 %v610
        %v722 = vunpack.c.h.b16 %v610
        %v723 = vunpack.c.l.b16 %v611
        %v724 = vunpack.c.h.b16 %v611
        %v725 = vunpack.c.l.b16 %v612
        %v726 = vunpack.c.h.b16 %v612
        %v727 = vunpack.c.l.b16 %v613
        %v728 = vunpack.c.h.b16 %v613
        %v729 = vunpack.c.l.b16 %v614
        %v730 = vunpack.c.h.b16 %v614
        %v731 = vunpack.c.l.b16 %v615
        %v732 = vunpack.c.h.b16 %v615
        %v733 = vunpack.c.l.b16 %v616
        %v734 = vunpack.c.h.b16 %v616
        %v735 = vunpack.c.l.b16 %v617
        %v736 = vunpack.c.h.b16 %v617
        %v737 = vunpack.c.l.b16 %v618
        %v738 = vunpack.c.h.b16 %v618
        %v739 = vunpack.c.l.b16 %v619
        %v740 = vunpack.c.h.b16 %v619
        %v741 = vunpack.c.l.b16 %v620
        %v742 = vunpack.c.h.b16 %v620
        %v743 = vunpack.c.l.b16 %v621
        %v744 = vunpack.c.h.b16 %v621
        %v745 = vunpack.c.l.b16 %v622
        %v746 = vunpack.c.h.b16 %v622
        %v747 = vunpack.c.l.b16 %v623
        %v748 = vunpack.c.h.b16 %v623
        %v749 = vunpack.c.l.b16 %v624
        %v750 = vunpack.c.h.b16 %v624
        %v751 = vunpack.c.l.b16 %v625
        %v752 = vunpack.c.h.b16 %v625
        %v753 = vunpack.c.l.b16 %v626
        %v754 = vunpack.c.h.b16 %v626
        %v755 = vunpack.c.l.b16 %v627
        %v756 = vunpack.c.h.b16 %v627
        %v757 = vunpack.c.l.b16 %v628
        %v758 = vunpack.c.h.b16 %v628
        %v759 = vunpack.c.l.b16 %v629
        %v760 = vunpack.c.h.b16 %v629
        %v761 = vunpack.c.l.b16 %v630
        %v762 = vunpack.c.h.b16 %v630
        %v763 = vunpack.c.l.b16 %v631
        %v764 = vunpack.c.h.b16 %v631
        %v765 = vunpack.c.l.b16 %v632
        %v766 = vunpack.c.h.b16 %v632
        %v767 = vunpack.c.l.b16 %v633
        %v768 = vunpack.c.h.b16 %v633
        %v769 = vunpack.c.l.b16 %v634
        %v770 = vunpack.c.h.b16 %v634
        %v771 = vpack.c.b16 %v709, %v707
        %v772 = vpack.c.b16 %v710, %v708
        %v773 = vpack.c.b16 %v713, %v711
        %v774 = vpack.c.b16 %v714, %v712
        %v775 = vpack.c.b16 %v717, %v715
        %v776 = vpack.c.b16 %v718, %v716
        %v777 = vpack.c.b16 %v721, %v719
        %v778 = vpack.c.b16 %v722, %v720
        %v779 = vpack.c.b16 %v725, %v723
        %v780 = vpack.c.b16 %v726, %v724
        %v781 = vpack.c.b16 %v729, %v727
        %v782 = vpack.c.b16 %v730, %v728
        %v783 = vpack.c.b16 %v733, %v731
        %v784 = vpack.c.b16 %v734, %v732
        %v785 = vpack.c.b16 %v737, %v735
        %v786 = vpack.c.b16 %v738, %v736
        %v787 = vpack.c.b16 %v741, %v739
        %v788 = vpack.c.b16 %v742, %v740
        %v789 = vpack.c.b16 %v745, %v743
        %v790 = vpack.c.b16 %v746, %v744
        %v791 = vpack.c.b16 %v749, %v747
        %v792 = vpack.c.b16 %v750, %v748
        %v793 = vpack.c.b16 %v753, %v751
        %v794 = vpack.c.b16 %v754, %v752
        %v795 = vpack.c.b16 %v757, %v755
        %v796 = vpack.c.b16 %v758, %v756
        %v797 = vpack.c.b16 %v761, %v759
        %v798 = vpack.c.b16 %v762, %v760
        %v799 = vpack.c.b16 %v765, %v763
        %v800 = vpack.c.b16 %v766, %v764
        %v801 = vpack.c.b16 %v769, %v767
        %v802 = vpack.c.b16 %v770, %v768
        %835 = vmatpush.bf16.msra.mxu0 %v785
        %836 = vmatpush.bf16.msra.mxu0 %v783
        %837 = vmatpush.bf16.msra.mxu0 %v781
        %838 = vmatpush.bf16.msra.mxu0 %v779
        %839 = vmatpush.bf16.msra.mxu0 %v777
        %840 = vmatpush.bf16.msra.mxu0 %v775
        %841 = vmatpush.bf16.msra.mxu0 %v773
        %842 = vmatpush.bf16.msra.mxu0 %v771
        %843 = vmatmul.bf16.gmra.mxu0 %v660
        %v844 = vpop.f32.mrf.mxu0
        %v845 = vadd.f32 0.0, %v844
        %v846 = vpop.f32.mrf.mxu0
        %v847 = vadd.f32 0.0, %v846
        %848 = vdwg.mxu0
        %849 = vmatpush.bf16.msra.mxu0 %v801
        %850 = vmatpush.bf16.msra.mxu0 %v799
        %851 = vmatpush.bf16.msra.mxu0 %v797
        %852 = vmatpush.bf16.msra.mxu0 %v795
        %853 = vmatpush.bf16.msra.mxu0 %v793
        %854 = vmatpush.bf16.msra.mxu0 %v791
        %855 = vmatpush.bf16.msra.mxu0 %v789
        %856 = vmatpush.bf16.msra.mxu0 %v787
        %857 = vmatmul.bf16.gmra.mxu0 %v672
        %v858 = vpop.f32.mrf.mxu0
        %v859 = vadd.f32 %v845, %v858
        %v860 = vpop.f32.mrf.mxu0
        %v861 = vadd.f32 %v847, %v860
        %862 = vdwg.mxu0
        %863 = vmatpush.bf16.msra.mxu0 %v786
        %864 = vmatpush.bf16.msra.mxu0 %v784
        %865 = vmatpush.bf16.msra.mxu0 %v782
        %866 = vmatpush.bf16.msra.mxu0 %v780
        %867 = vmatpush.bf16.msra.mxu0 %v778
        %868 = vmatpush.bf16.msra.mxu0 %v776
        %869 = vmatpush.bf16.msra.mxu0 %v774
        %870 = vmatpush.bf16.msra.mxu0 %v772
        %871 = vmatmul.bf16.gmra.mxu0 %v660
        %v872 = vpop.f32.mrf.mxu0
        %v873 = vadd.f32 0.0, %v872
        %v874 = vpop.f32.mrf.mxu0
        %v875 = vadd.f32 0.0, %v874
        %876 = vdwg.mxu0
        %877 = vmatpush.bf16.msra.mxu0 %v802
        %878 = vmatpush.bf16.msra.mxu0 %v800
        %879 = vmatpush.bf16.msra.mxu0 %v798
        %880 = vmatpush.bf16.msra.mxu0 %v796
        %881 = vmatpush.bf16.msra.mxu0 %v794
        %882 = vmatpush.bf16.msra.mxu0 %v792
        %883 = vmatpush.bf16.msra.mxu0 %v790
        %884 = vmatpush.bf16.msra.mxu0 %v788
        %885 = vmatmul.bf16.gmra.mxu0 %v672
        %v886 = vpop.f32.mrf.mxu0
        %v887 = vadd.f32 %v873, %v886
        %v888 = vpop.f32.mrf.mxu0
        %v889 = vadd.f32 %v875, %v888
        %890 = vdwg.mxu0
        %v925 = vunpack.c.l.b16 %v569
        %v926 = vunpack.c.h.b16 %v569
        %v927 = vunpack.c.l.b16 %v570
        %v928 = vunpack.c.h.b16 %v570
        %v929 = vunpack.c.l.b16 %v571
        %v930 = vunpack.c.h.b16 %v571
        %v931 = vunpack.c.l.b16 %v572
        %v932 = vunpack.c.h.b16 %v572
        %v933 = vunpack.c.l.b16 %v573
        %v934 = vunpack.c.h.b16 %v573
        %v935 = vunpack.c.l.b16 %v574
        %v936 = vunpack.c.h.b16 %v574
        %v937 = vunpack.c.l.b16 %v575
        %v938 = vunpack.c.h.b16 %v575
        %v939 = vunpack.c.l.b16 %v576
        %v940 = vunpack.c.h.b16 %v576
        %v941 = vunpack.c.l.b16 %v577
        %v942 = vunpack.c.h.b16 %v577
        %v943 = vunpack.c.l.b16 %v578
        %v944 = vunpack.c.h.b16 %v578
        %v945 = vunpack.c.l.b16 %v579
        %v946 = vunpack.c.h.b16 %v579
        %v947 = vunpack.c.l.b16 %v580
        %v948 = vunpack.c.h.b16 %v580
        %v949 = vunpack.c.l.b16 %v581
        %v950 = vunpack.c.h.b16 %v581
        %v951 = vunpack.c.l.b16 %v582
        %v952 = vunpack.c.h.b16 %v582
        %v953 = vunpack.c.l.b16 %v583
        %v954 = vunpack.c.h.b16 %v583
        %v955 = vunpack.c.l.b16 %v584
        %v956 = vunpack.c.h.b16 %v584
        %v957 = vunpack.c.l.b16 %v585
        %v958 = vunpack.c.h.b16 %v585
        %v959 = vunpack.c.l.b16 %v586
        %v960 = vunpack.c.h.b16 %v586
        %v961 = vunpack.c.l.b16 %v587
        %v962 = vunpack.c.h.b16 %v587
        %v963 = vunpack.c.l.b16 %v588
        %v964 = vunpack.c.h.b16 %v588
        %v965 = vunpack.c.l.b16 %v589
        %v966 = vunpack.c.h.b16 %v589
        %v967 = vunpack.c.l.b16 %v590
        %v968 = vunpack.c.h.b16 %v590
        %v969 = vunpack.c.l.b16 %v591
        %v970 = vunpack.c.h.b16 %v591
        %v971 = vunpack.c.l.b16 %v592
        %v972 = vunpack.c.h.b16 %v592
        %v973 = vunpack.c.l.b16 %v593
        %v974 = vunpack.c.h.b16 %v593
        %v975 = vunpack.c.l.b16 %v594
        %v976 = vunpack.c.h.b16 %v594
        %v977 = vunpack.c.l.b16 %v595
        %v978 = vunpack.c.h.b16 %v595
        %v979 = vunpack.c.l.b16 %v596
        %v980 = vunpack.c.h.b16 %v596
        %v981 = vunpack.c.l.b16 %v597
        %v982 = vunpack.c.h.b16 %v597
        %v983 = vunpack.c.l.b16 %v598
        %v984 = vunpack.c.h.b16 %v598
        %v985 = vunpack.c.l.b16 %v599
        %v986 = vunpack.c.h.b16 %v599
        %v987 = vunpack.c.l.b16 %v600
        %v988 = vunpack.c.h.b16 %v600
        %v989 = vpack.c.b16 %v927, %v925
        %v990 = vpack.c.b16 %v928, %v926
        %v991 = vpack.c.b16 %v931, %v929
        %v992 = vpack.c.b16 %v932, %v930
        %v993 = vpack.c.b16 %v935, %v933
        %v994 = vpack.c.b16 %v936, %v934
        %v995 = vpack.c.b16 %v939, %v937
        %v996 = vpack.c.b16 %v940, %v938
        %v997 = vpack.c.b16 %v943, %v941
        %v998 = vpack.c.b16 %v944, %v942
        %v999 = vpack.c.b16 %v947, %v945
        %v1000 = vpack.c.b16 %v948, %v946
        %v1001 = vpack.c.b16 %v951, %v949
        %v1002 = vpack.c.b16 %v952, %v950
        %v1003 = vpack.c.b16 %v955, %v953
        %v1004 = vpack.c.b16 %v956, %v954
        %v1005 = vpack.c.b16 %v959, %v957
        %v1006 = vpack.c.b16 %v960, %v958
        %v1007 = vpack.c.b16 %v963, %v961
        %v1008 = vpack.c.b16 %v964, %v962
        %v1009 = vpack.c.b16 %v967, %v965
        %v1010 = vpack.c.b16 %v968, %v966
        %v1011 = vpack.c.b16 %v971, %v969
        %v1012 = vpack.c.b16 %v972, %v970
        %v1013 = vpack.c.b16 %v975, %v973
        %v1014 = vpack.c.b16 %v976, %v974
        %v1015 = vpack.c.b16 %v979, %v977
        %v1016 = vpack.c.b16 %v980, %v978
        %v1017 = vpack.c.b16 %v983, %v981
        %v1018 = vpack.c.b16 %v984, %v982
        %v1019 = vpack.c.b16 %v987, %v985
        %v1020 = vpack.c.b16 %v988, %v986
        %1053 = vmatpush.bf16.msra.mxu0 %v1003
        %1054 = vmatpush.bf16.msra.mxu0 %v1001
        %1055 = vmatpush.bf16.msra.mxu0 %v999
        %1056 = vmatpush.bf16.msra.mxu0 %v997
        %1057 = vmatpush.bf16.msra.mxu0 %v995
        %1058 = vmatpush.bf16.msra.mxu0 %v993
        %1059 = vmatpush.bf16.msra.mxu0 %v991
        %1060 = vmatpush.bf16.msra.mxu0 %v989
        %1061 = vmatmul.bf16.gmra.mxu0 %v644
        %v1062 = vpop.f32.mrf.mxu0
        %v1063 = vadd.f32 %v859, %v1062
        %v1064 = vpop.f32.mrf.mxu0
        %v1065 = vadd.f32 %v861, %v1064
        %1066 = vdwg.mxu0
        %1067 = vmatpush.bf16.msra.mxu0 %v1019
        %1068 = vmatpush.bf16.msra.mxu0 %v1017
        %1069 = vmatpush.bf16.msra.mxu0 %v1015
        %1070 = vmatpush.bf16.msra.mxu0 %v1013
        %1071 = vmatpush.bf16.msra.mxu0 %v1011
        %1072 = vmatpush.bf16.msra.mxu0 %v1009
        %1073 = vmatpush.bf16.msra.mxu0 %v1007
        %1074 = vmatpush.bf16.msra.mxu0 %v1005
        %1075 = vmatmul.bf16.gmra.mxu0 %v645
        %v1076 = vpop.f32.mrf.mxu0
        %v1077 = vadd.f32 %v1063, %v1076
        %v1078 = vpop.f32.mrf.mxu0
        %v1079 = vadd.f32 %v1065, %v1078
        %1080 = vdwg.mxu0
        %1081 = vmatpush.bf16.msra.mxu0 %v1004
        %1082 = vmatpush.bf16.msra.mxu0 %v1002
        %1083 = vmatpush.bf16.msra.mxu0 %v1000
        %1084 = vmatpush.bf16.msra.mxu0 %v998
        %1085 = vmatpush.bf16.msra.mxu0 %v996
        %1086 = vmatpush.bf16.msra.mxu0 %v994
        %1087 = vmatpush.bf16.msra.mxu0 %v992
        %1088 = vmatpush.bf16.msra.mxu0 %v990
        %1089 = vmatmul.bf16.gmra.mxu0 %v644
        %v1090 = vpop.f32.mrf.mxu0
        %v1091 = vadd.f32 %v887, %v1090
        %v1092 = vpop.f32.mrf.mxu0
        %v1093 = vadd.f32 %v889, %v1092
        %1094 = vdwg.mxu0
        %1095 = vmatpush.bf16.msra.mxu0 %v1020
        %1096 = vmatpush.bf16.msra.mxu0 %v1018
        %1097 = vmatpush.bf16.msra.mxu0 %v1016
        %1098 = vmatpush.bf16.msra.mxu0 %v1014
        %1099 = vmatpush.bf16.msra.mxu0 %v1012
        %1100 = vmatpush.bf16.msra.mxu0 %v1010
        %1101 = vmatpush.bf16.msra.mxu0 %v1008
        %1102 = vmatpush.bf16.msra.mxu0 %v1006
        %1103 = vmatmul.bf16.gmra.mxu0 %v645
        %v1104 = vpop.f32.mrf.mxu0
        %v1105 = vadd.f32 %v1091, %v1104
        %v1106 = vpop.f32.mrf.mxu0
        %v1107 = vadd.f32 %v1093, %v1106
        %1108 = vdwg.mxu0
        %v1109 = vld [vmem:[#allocation2] sm:$0xee]
        %s1110 = scalar_lea.vmem %s1, 512
        %v1111 = vld [vmem:[%s1110] sm:$0xff]
        %v1112 = vld [vmem:[%s1110 + $0x8] sm:$0xff]
        %v1113 = vld [vmem:[%s1110 + $0x10] sm:$0xff]
        %v1114 = vld [vmem:[%s1110 + $0x18] sm:$0xff]
        %v1115 = vld [vmem:[%s1110 + $0x20] sm:$0xff]
        %v1116 = vld [vmem:[%s1110 + $0x28] sm:$0xff]
        %v1117 = vld [vmem:[%s1110 + $0x30] sm:$0xff]
        %v1118 = vld [vmem:[%s1110 + $0x38] sm:$0xff]
        %v1119 = vld [vmem:[%s1110 + $0x40] sm:$0xff]
        %v1120 = vld [vmem:[%s1110 + $0x48] sm:$0xff]
        %v1121 = vld [vmem:[%s1110 + $0x50] sm:$0xff]
        %v1122 = vld [vmem:[%s1110 + $0x58] sm:$0xff]
        %v1123 = vld [vmem:[%s1110 + $0x60] sm:$0xff]
        %v1124 = vld [vmem:[%s1110 + $0x68] sm:$0xff]
        %v1125 = vld [vmem:[%s1110 + $0x70] sm:$0xff]
        %v1126 = vld [vmem:[%s1110 + $0x78] sm:$0xff]
        %v1127 = vld [vmem:[%s1110 + $0x80] sm:$0xff]
        %v1128 = vld [vmem:[%s1110 + $0x88] sm:$0xff]
        %v1129 = vld [vmem:[%s1110 + $0x90] sm:$0xff]
        %v1130 = vld [vmem:[%s1110 + $0x98] sm:$0xff]
        %v1131 = vld [vmem:[%s1110 + $0xa0] sm:$0xff]
        %v1132 = vld [vmem:[%s1110 + $0xa8] sm:$0xff]
        %v1133 = vld [vmem:[%s1110 + $0xb0] sm:$0xff]
        %v1134 = vld [vmem:[%s1110 + $0xb8] sm:$0xff]
        %v1135 = vld [vmem:[%s1110 + $0xc0] sm:$0xff]
        %v1136 = vld [vmem:[%s1110 + $0xc8] sm:$0xff]
        %v1137 = vld [vmem:[%s1110 + $0xd0] sm:$0xff]
        %v1138 = vld [vmem:[%s1110 + $0xd8] sm:$0xff]
        %v1139 = vld [vmem:[%s1110 + $0xe0] sm:$0xff]
        %v1140 = vld [vmem:[%s1110 + $0xe8] sm:$0xff]
        %v1141 = vld [vmem:[%s1110 + $0xf0] sm:$0xff]
        %v1142 = vld [vmem:[%s1110 + $0xf8] sm:$0xff]
        %v1144 = vunpack.c.l.b16 %v1109
        %v1145 = vunpack.c.h.b16 %v1109
        %v1146 = vpack.c.b16 %v640, %v1144
        %v1147 = vpack.c.b16 %v641, %v1145
        %vm1148 = vcmask 1046528
        %v1149 = vrot.slane %v1146, 1
        %v1150 = vrot.slane %v646, 1
        %v1151 = vsel %vm1148, %v1149, %v1150
        %v1152 = vrot.slane %v1147, 1
        %v1153 = vrot.slane %v647, 1
        %v1154 = vsel %vm1148, %v1152, %v1153
        %v1189 = vunpack.c.l.b16 %v1111
        %v1190 = vunpack.c.h.b16 %v1111
        %v1191 = vunpack.c.l.b16 %v1112
        %v1192 = vunpack.c.h.b16 %v1112
        %v1193 = vunpack.c.l.b16 %v1113
        %v1194 = vunpack.c.h.b16 %v1113
        %v1195 = vunpack.c.l.b16 %v1114
        %v1196 = vunpack.c.h.b16 %v1114
        %v1197 = vunpack.c.l.b16 %v1115
        %v1198 = vunpack.c.h.b16 %v1115
        %v1199 = vunpack.c.l.b16 %v1116
        %v1200 = vunpack.c.h.b16 %v1116
        %v1201 = vunpack.c.l.b16 %v1117
        %v1202 = vunpack.c.h.b16 %v1117
        %v1203 = vunpack.c.l.b16 %v1118
        %v1204 = vunpack.c.h.b16 %v1118
        %v1205 = vunpack.c.l.b16 %v1119
        %v1206 = vunpack.c.h.b16 %v1119
        %v1207 = vunpack.c.l.b16 %v1120
        %v1208 = vunpack.c.h.b16 %v1120
        %v1209 = vunpack.c.l.b16 %v1121
        %v1210 = vunpack.c.h.b16 %v1121
        %v1211 = vunpack.c.l.b16 %v1122
        %v1212 = vunpack.c.h.b16 %v1122
        %v1213 = vunpack.c.l.b16 %v1123
        %v1214 = vunpack.c.h.b16 %v1123
        %v1215 = vunpack.c.l.b16 %v1124
        %v1216 = vunpack.c.h.b16 %v1124
        %v1217 = vunpack.c.l.b16 %v1125
        %v1218 = vunpack.c.h.b16 %v1125
        %v1219 = vunpack.c.l.b16 %v1126
        %v1220 = vunpack.c.h.b16 %v1126
        %v1221 = vunpack.c.l.b16 %v1127
        %v1222 = vunpack.c.h.b16 %v1127
        %v1223 = vunpack.c.l.b16 %v1128
        %v1224 = vunpack.c.h.b16 %v1128
        %v1225 = vunpack.c.l.b16 %v1129
        %v1226 = vunpack.c.h.b16 %v1129
        %v1227 = vunpack.c.l.b16 %v1130
        %v1228 = vunpack.c.h.b16 %v1130
        %v1229 = vunpack.c.l.b16 %v1131
        %v1230 = vunpack.c.h.b16 %v1131
        %v1231 = vunpack.c.l.b16 %v1132
        %v1232 = vunpack.c.h.b16 %v1132
        %v1233 = vunpack.c.l.b16 %v1133
        %v1234 = vunpack.c.h.b16 %v1133
        %v1235 = vunpack.c.l.b16 %v1134
        %v1236 = vunpack.c.h.b16 %v1134
        %v1237 = vunpack.c.l.b16 %v1135
        %v1238 = vunpack.c.h.b16 %v1135
        %v1239 = vunpack.c.l.b16 %v1136
        %v1240 = vunpack.c.h.b16 %v1136
        %v1241 = vunpack.c.l.b16 %v1137
        %v1242 = vunpack.c.h.b16 %v1137
        %v1243 = vunpack.c.l.b16 %v1138
        %v1244 = vunpack.c.h.b16 %v1138
        %v1245 = vunpack.c.l.b16 %v1139
        %v1246 = vunpack.c.h.b16 %v1139
        %v1247 = vunpack.c.l.b16 %v1140
        %v1248 = vunpack.c.h.b16 %v1140
        %v1249 = vunpack.c.l.b16 %v1141
        %v1250 = vunpack.c.h.b16 %v1141
        %v1251 = vunpack.c.l.b16 %v1142
        %v1252 = vunpack.c.h.b16 %v1142
        %v1253 = vpack.c.b16 %v1191, %v1189
        %v1254 = vpack.c.b16 %v1192, %v1190
        %v1255 = vpack.c.b16 %v1195, %v1193
        %v1256 = vpack.c.b16 %v1196, %v1194
        %v1257 = vpack.c.b16 %v1199, %v1197
        %v1258 = vpack.c.b16 %v1200, %v1198
        %v1259 = vpack.c.b16 %v1203, %v1201
        %v1260 = vpack.c.b16 %v1204, %v1202
        %v1261 = vpack.c.b16 %v1207, %v1205
        %v1262 = vpack.c.b16 %v1208, %v1206
        %v1263 = vpack.c.b16 %v1211, %v1209
        %v1264 = vpack.c.b16 %v1212, %v1210
        %v1265 = vpack.c.b16 %v1215, %v1213
        %v1266 = vpack.c.b16 %v1216, %v1214
        %v1267 = vpack.c.b16 %v1219, %v1217
        %v1268 = vpack.c.b16 %v1220, %v1218
        %v1269 = vpack.c.b16 %v1223, %v1221
        %v1270 = vpack.c.b16 %v1224, %v1222
        %v1271 = vpack.c.b16 %v1227, %v1225
        %v1272 = vpack.c.b16 %v1228, %v1226
        %v1273 = vpack.c.b16 %v1231, %v1229
        %v1274 = vpack.c.b16 %v1232, %v1230
        %v1275 = vpack.c.b16 %v1235, %v1233
        %v1276 = vpack.c.b16 %v1236, %v1234
        %v1277 = vpack.c.b16 %v1239, %v1237
        %v1278 = vpack.c.b16 %v1240, %v1238
        %v1279 = vpack.c.b16 %v1243, %v1241
        %v1280 = vpack.c.b16 %v1244, %v1242
        %v1281 = vpack.c.b16 %v1247, %v1245
        %v1282 = vpack.c.b16 %v1248, %v1246
        %v1283 = vpack.c.b16 %v1251, %v1249
        %v1284 = vpack.c.b16 %v1252, %v1250
        %1317 = vmatpush.bf16.msra.mxu0 %v1267
        %1318 = vmatpush.bf16.msra.mxu0 %v1265
        %1319 = vmatpush.bf16.msra.mxu0 %v1263
        %1320 = vmatpush.bf16.msra.mxu0 %v1261
        %1321 = vmatpush.bf16.msra.mxu0 %v1259
        %1322 = vmatpush.bf16.msra.mxu0 %v1257
        %1323 = vmatpush.bf16.msra.mxu0 %v1255
        %1324 = vmatpush.bf16.msra.mxu0 %v1253
        %1325 = vmatmul.bf16.gmra.mxu0 %v1151
        %v1326 = vpop.f32.mrf.mxu0
        %v1327 = vadd.f32 0.0, %v1326
        %v1328 = vpop.f32.mrf.mxu0
        %v1329 = vadd.f32 0.0, %v1328
        %1330 = vdwg.mxu0
        %1331 = vmatpush.bf16.msra.mxu0 %v1283
        %1332 = vmatpush.bf16.msra.mxu0 %v1281
        %1333 = vmatpush.bf16.msra.mxu0 %v1279
        %1334 = vmatpush.bf16.msra.mxu0 %v1277
        %1335 = vmatpush.bf16.msra.mxu0 %v1275
        %1336 = vmatpush.bf16.msra.mxu0 %v1273
        %1337 = vmatpush.bf16.msra.mxu0 %v1271
        %1338 = vmatpush.bf16.msra.mxu0 %v1269
        %1339 = vmatmul.bf16.gmra.mxu0 %v1154
        %v1340 = vpop.f32.mrf.mxu0
        %v1341 = vadd.f32 %v1327, %v1340
        %v1342 = vpop.f32.mrf.mxu0
        %v1343 = vadd.f32 %v1329, %v1342
        %1344 = vdwg.mxu0
        %1345 = vmatpush.bf16.msra.mxu0 %v1268
        %1346 = vmatpush.bf16.msra.mxu0 %v1266
        %1347 = vmatpush.bf16.msra.mxu0 %v1264
        %1348 = vmatpush.bf16.msra.mxu0 %v1262
        %1349 = vmatpush.bf16.msra.mxu0 %v1260
        %1350 = vmatpush.bf16.msra.mxu0 %v1258
        %1351 = vmatpush.bf16.msra.mxu0 %v1256
        %1352 = vmatpush.bf16.msra.mxu0 %v1254
        %1353 = vmatmul.bf16.gmra.mxu0 %v1151
        %v1354 = vpop.f32.mrf.mxu0
        %v1355 = vadd.f32 0.0, %v1354
        %v1356 = vpop.f32.mrf.mxu0
        %v1357 = vadd.f32 0.0, %v1356
        %1358 = vdwg.mxu0
        %1359 = vmatpush.bf16.msra.mxu0 %v1284
        %1360 = vmatpush.bf16.msra.mxu0 %v1282
        %1361 = vmatpush.bf16.msra.mxu0 %v1280
        %1362 = vmatpush.bf16.msra.mxu0 %v1278
        %1363 = vmatpush.bf16.msra.mxu0 %v1276
        %1364 = vmatpush.bf16.msra.mxu0 %v1274
        %1365 = vmatpush.bf16.msra.mxu0 %v1272
        %1366 = vmatpush.bf16.msra.mxu0 %v1270
        %1367 = vmatmul.bf16.gmra.mxu0 %v1154
        %v1368 = vpop.f32.mrf.mxu0
        %v1369 = vadd.f32 %v1355, %v1368
        %v1370 = vpop.f32.mrf.mxu0
        %v1371 = vadd.f32 %v1357, %v1370
        %1372 = vdwg.mxu0
        %v1373 = vadd.f32 %v1077, %v1341
        %v1374 = vadd.f32 %v1105, %v1369
        %v1375 = vadd.f32 %v1079, %v1343
        %v1376 = vadd.f32 %v1107, %v1371
        %v1377 = vld [vmem:[%s2] sm:$0x3]
        %v1379 = vperm.slane %v1377, 0
        %v1380 = vperm.slane %v1377, 1
        %v1383 = vadd.f32 %v1373, %v1379
        %v1384 = vadd.f32 %v1374, %v1380
        %v1385 = vadd.f32 %v1375, %v1379
        %v1386 = vadd.f32 %v1376, %v1380
        %s1387 = sld [smem:[#allocation4]]
        %vm1388 = vcmp.ge.f32.partialorder %v1383, 0.0
        %vm1389 = vcmp.ge.f32.partialorder %v1384, 0.0
        %vm1390 = vcmp.ge.f32.partialorder %v1385, 0.0
        %vm1391 = vcmp.ge.f32.partialorder %v1386, 0.0
        %v1392 = vstv %s1387
        %v1393 = vmul.f32 %v1392, %v1383
        %v1394 = vmul.f32 %v1392, %v1384
        %v1395 = vmul.f32 %v1392, %v1385
        %v1396 = vmul.f32 %v1392, %v1386
        %v1397 = vsel %vm1388, %v1383, %v1393
        %v1398 = vsel %vm1389, %v1384, %v1394
        %v1399 = vsel %vm1390, %v1385, %v1395
        %v1400 = vsel %vm1391, %v1386, %v1396
        %v1401 = vpack.c.bf16 %v1398, %v1397
        %v1402 = vpack.c.bf16 %v1400, %v1399
        %v1404 = vshrl.u32 %v1401, 16
        %v1406 = vrot.slane %v1404, 7
        %v1407 = vshll.u32 %v1401, 16
        %v1409 = vor.u32 %v1406, %v1407
        %v1410 = vrot.slane %v1406, 4
        %v1412 = vshrl.u32 %v1402, 16
        %v1414 = vrot.slane %v1412, 7
        %v1415 = vshll.u32 %v1402, 16
        %v1417 = vor.u32 %v1414, %v1415
        %v1418 = vsel %vm526, %v1410, %v1417
        %v1419 = vrot.slane %v1414, 4
        %v1423 = vsel %vm553, %v1409, %v567
        %1424 = vst [vmem:[#allocation2] sm:$0xff] %v1423
        %1425 = vst [vmem:[#allocation2 + $0x8] sm:$0xff] %v1418
        %v1426 = vld [vmem:[#allocation2 + $0x10] sm:$0x11]
        %v1427 = vsel %vm563, %v1419, %v1426
        %1428 = vst [vmem:[#allocation2 + $0x10] sm:$0x11] %v1427
        %v1429 = vld [vmem:[#allocation2] sm:$0xff]
        %v1430 = vld [vmem:[#allocation2 + $0x8] sm:$0xff]
        %s1431 = scalar_lea.vmem %s1, 768
        %v1432 = vld [vmem:[%s1431] sm:$0xff]
        %v1433 = vld [vmem:[%s1431 + $0x8] sm:$0xff]
        %v1434 = vld [vmem:[%s1431 + $0x10] sm:$0xff]
        %v1435 = vld [vmem:[%s1431 + $0x18] sm:$0xff]
        %v1436 = vld [vmem:[%s1431 + $0x20] sm:$0xff]
        %v1437 = vld [vmem:[%s1431 + $0x28] sm:$0xff]
        %v1438 = vld [vmem:[%s1431 + $0x30] sm:$0xff]
        %v1439 = vld [vmem:[%s1431 + $0x38] sm:$0xff]
        %v1440 = vld [vmem:[%s1431 + $0x40] sm:$0xff]
        %v1441 = vld [vmem:[%s1431 + $0x48] sm:$0xff]
        %v1442 = vld [vmem:[%s1431 + $0x50] sm:$0xff]
        %v1443 = vld [vmem:[%s1431 + $0x58] sm:$0xff]
        %v1444 = vld [vmem:[%s1431 + $0x60] sm:$0xff]
        %v1445 = vld [vmem:[%s1431 + $0x68] sm:$0xff]
        %v1446 = vld [vmem:[%s1431 + $0x70] sm:$0xff]
        %v1447 = vld [vmem:[%s1431 + $0x78] sm:$0xff]
        %v1448 = vld [vmem:[%s1431 + $0x80] sm:$0xff]
        %v1449 = vld [vmem:[%s1431 + $0x88] sm:$0xff]
        %v1450 = vld [vmem:[%s1431 + $0x90] sm:$0xff]
        %v1451 = vld [vmem:[%s1431 + $0x98] sm:$0xff]
        %v1452 = vld [vmem:[%s1431 + $0xa0] sm:$0xff]
        %v1453 = vld [vmem:[%s1431 + $0xa8] sm:$0xff]
        %v1454 = vld [vmem:[%s1431 + $0xb0] sm:$0xff]
        %v1455 = vld [vmem:[%s1431 + $0xb8] sm:$0xff]
        %v1456 = vld [vmem:[%s1431 + $0xc0] sm:$0xff]
        %v1457 = vld [vmem:[%s1431 + $0xc8] sm:$0xff]
        %v1458 = vld [vmem:[%s1431 + $0xd0] sm:$0xff]
        %v1459 = vld [vmem:[%s1431 + $0xd8] sm:$0xff]
        %v1460 = vld [vmem:[%s1431 + $0xe0] sm:$0xff]
        %v1461 = vld [vmem:[%s1431 + $0xe8] sm:$0xff]
        %v1462 = vld [vmem:[%s1431 + $0xf0] sm:$0xff]
        %v1463 = vld [vmem:[%s1431 + $0xf8] sm:$0xff]
        %v1464 = vld [vmem:[#allocation2 + $0x10] sm:$0x11]
        %s1465 = scalar_lea.vmem %s1, 1024
        %v1466 = vld [vmem:[%s1465] sm:$0xff]
        %v1467 = vld [vmem:[%s1465 + $0x8] sm:$0xff]
        %v1468 = vld [vmem:[%s1465 + $0x10] sm:$0xff]
        %v1469 = vld [vmem:[%s1465 + $0x18] sm:$0xff]
        %v1470 = vld [vmem:[%s1465 + $0x20] sm:$0xff]
        %v1471 = vld [vmem:[%s1465 + $0x28] sm:$0xff]
        %v1472 = vld [vmem:[%s1465 + $0x30] sm:$0xff]
        %v1473 = vld [vmem:[%s1465 + $0x38] sm:$0xff]
        %v1474 = vld [vmem:[%s1465 + $0x40] sm:$0xff]
        %v1475 = vld [vmem:[%s1465 + $0x48] sm:$0xff]
        %v1476 = vld [vmem:[%s1465 + $0x50] sm:$0xff]
        %v1477 = vld [vmem:[%s1465 + $0x58] sm:$0xff]
        %v1478 = vld [vmem:[%s1465 + $0x60] sm:$0xff]
        %v1479 = vld [vmem:[%s1465 + $0x68] sm:$0xff]
        %v1480 = vld [vmem:[%s1465 + $0x70] sm:$0xff]
        %v1481 = vld [vmem:[%s1465 + $0x78] sm:$0xff]
        %v1482 = vld [vmem:[%s1465 + $0x80] sm:$0xff]
        %v1483 = vld [vmem:[%s1465 + $0x88] sm:$0xff]
        %v1484 = vld [vmem:[%s1465 + $0x90] sm:$0xff]
        %v1485 = vld [vmem:[%s1465 + $0x98] sm:$0xff]
        %v1486 = vld [vmem:[%s1465 + $0xa0] sm:$0xff]
        %v1487 = vld [vmem:[%s1465 + $0xa8] sm:$0xff]
        %v1488 = vld [vmem:[%s1465 + $0xb0] sm:$0xff]
        %v1489 = vld [vmem:[%s1465 + $0xb8] sm:$0xff]
        %v1490 = vld [vmem:[%s1465 + $0xc0] sm:$0xff]
        %v1491 = vld [vmem:[%s1465 + $0xc8] sm:$0xff]
        %v1492 = vld [vmem:[%s1465 + $0xd0] sm:$0xff]
        %v1493 = vld [vmem:[%s1465 + $0xd8] sm:$0xff]
        %v1494 = vld [vmem:[%s1465 + $0xe0] sm:$0xff]
        %v1495 = vld [vmem:[%s1465 + $0xe8] sm:$0xff]
        %v1496 = vld [vmem:[%s1465 + $0xf0] sm:$0xff]
        %v1497 = vld [vmem:[%s1465 + $0xf8] sm:$0xff]
        %v1501 = vunpack.c.l.b16 %v1429
        %v1502 = vunpack.c.h.b16 %v1429
        %v1503 = vunpack.c.l.b16 %v1430
        %v1504 = vunpack.c.h.b16 %v1430
        %v1505 = vunpack.c.l.b16 %v1464
        %v1506 = vunpack.c.h.b16 %v1464
        %v1507 = vpack.c.b16 %v1503, %v1501
        %v1508 = vpack.c.b16 %v1504, %v1502
        %v1509 = vpack.c.b16 %v1505, %v1505
        %v1510 = vpack.c.b16 %v1506, %v1506
        %v1512 = vshrl.u32 %v1507, 16
        %v1514 = vshll.u32 %v1507, 16
        %v1516 = vrot.slane %v1514, 1
        %v1517 = vor.u32 %v1512, %v1516
        %v1519 = vshll.u32 %v1509, 16
        %v1521 = vrot.slane %v1519, 1
        %v1522 = vsel %vm648, %v1517, %v1521
        %v1524 = vshrl.u32 %v1508, 16
        %v1526 = vshll.u32 %v1508, 16
        %v1528 = vrot.slane %v1526, 1
        %v1529 = vor.u32 %v1524, %v1528
        %v1531 = vshll.u32 %v1510, 16
        %v1533 = vrot.slane %v1531, 1
        %v1534 = vsel %vm648, %v1529, %v1533
        %v1569 = vunpack.c.l.b16 %v1466
        %v1570 = vunpack.c.h.b16 %v1466
        %v1571 = vunpack.c.l.b16 %v1467
        %v1572 = vunpack.c.h.b16 %v1467
        %v1573 = vunpack.c.l.b16 %v1468
        %v1574 = vunpack.c.h.b16 %v1468
        %v1575 = vunpack.c.l.b16 %v1469
        %v1576 = vunpack.c.h.b16 %v1469
        %v1577 = vunpack.c.l.b16 %v1470
        %v1578 = vunpack.c.h.b16 %v1470
        %v1579 = vunpack.c.l.b16 %v1471
        %v1580 = vunpack.c.h.b16 %v1471
        %v1581 = vunpack.c.l.b16 %v1472
        %v1582 = vunpack.c.h.b16 %v1472
        %v1583 = vunpack.c.l.b16 %v1473
        %v1584 = vunpack.c.h.b16 %v1473
        %v1585 = vunpack.c.l.b16 %v1474
        %v1586 = vunpack.c.h.b16 %v1474
        %v1587 = vunpack.c.l.b16 %v1475
        %v1588 = vunpack.c.h.b16 %v1475
        %v1589 = vunpack.c.l.b16 %v1476
        %v1590 = vunpack.c.h.b16 %v1476
        %v1591 = vunpack.c.l.b16 %v1477
        %v1592 = vunpack.c.h.b16 %v1477
        %v1593 = vunpack.c.l.b16 %v1478
        %v1594 = vunpack.c.h.b16 %v1478
        %v1595 = vunpack.c.l.b16 %v1479
        %v1596 = vunpack.c.h.b16 %v1479
        %v1597 = vunpack.c.l.b16 %v1480
        %v1598 = vunpack.c.h.b16 %v1480
        %v1599 = vunpack.c.l.b16 %v1481
        %v1600 = vunpack.c.h.b16 %v1481
        %v1601 = vunpack.c.l.b16 %v1482
        %v1602 = vunpack.c.h.b16 %v1482
        %v1603 = vunpack.c.l.b16 %v1483
        %v1604 = vunpack.c.h.b16 %v1483
        %v1605 = vunpack.c.l.b16 %v1484
        %v1606 = vunpack.c.h.b16 %v1484
        %v1607 = vunpack.c.l.b16 %v1485
        %v1608 = vunpack.c.h.b16 %v1485
        %v1609 = vunpack.c.l.b16 %v1486
        %v1610 = vunpack.c.h.b16 %v1486
        %v1611 = vunpack.c.l.b16 %v1487
        %v1612 = vunpack.c.h.b16 %v1487
        %v1613 = vunpack.c.l.b16 %v1488
        %v1614 = vunpack.c.h.b16 %v1488
        %v1615 = vunpack.c.l.b16 %v1489
        %v1616 = vunpack.c.h.b16 %v1489
        %v1617 = vunpack.c.l.b16 %v1490
        %v1618 = vunpack.c.h.b16 %v1490
        %v1619 = vunpack.c.l.b16 %v1491
        %v1620 = vunpack.c.h.b16 %v1491
        %v1621 = vunpack.c.l.b16 %v1492
        %v1622 = vunpack.c.h.b16 %v1492
        %v1623 = vunpack.c.l.b16 %v1493
        %v1624 = vunpack.c.h.b16 %v1493
        %v1625 = vunpack.c.l.b16 %v1494
        %v1626 = vunpack.c.h.b16 %v1494
        %v1627 = vunpack.c.l.b16 %v1495
        %v1628 = vunpack.c.h.b16 %v1495
        %v1629 = vunpack.c.l.b16 %v1496
        %v1630 = vunpack.c.h.b16 %v1496
        %v1631 = vunpack.c.l.b16 %v1497
        %v1632 = vunpack.c.h.b16 %v1497
        %v1633 = vpack.c.b16 %v1571, %v1569
        %v1634 = vpack.c.b16 %v1572, %v1570
        %v1635 = vpack.c.b16 %v1575, %v1573
        %v1636 = vpack.c.b16 %v1576, %v1574
        %v1637 = vpack.c.b16 %v1579, %v1577
        %v1638 = vpack.c.b16 %v1580, %v1578
        %v1639 = vpack.c.b16 %v1583, %v1581
        %v1640 = vpack.c.b16 %v1584, %v1582
        %v1641 = vpack.c.b16 %v1587, %v1585
        %v1642 = vpack.c.b16 %v1588, %v1586
        %v1643 = vpack.c.b16 %v1591, %v1589
        %v1644 = vpack.c.b16 %v1592, %v1590
        %v1645 = vpack.c.b16 %v1595, %v1593
        %v1646 = vpack.c.b16 %v1596, %v1594
        %v1647 = vpack.c.b16 %v1599, %v1597
        %v1648 = vpack.c.b16 %v1600, %v1598
        %v1649 = vpack.c.b16 %v1603, %v1601
        %v1650 = vpack.c.b16 %v1604, %v1602
        %v1651 = vpack.c.b16 %v1607, %v1605
        %v1652 = vpack.c.b16 %v1608, %v1606
        %v1653 = vpack.c.b16 %v1611, %v1609
        %v1654 = vpack.c.b16 %v1612, %v1610
        %v1655 = vpack.c.b16 %v1615, %v1613
        %v1656 = vpack.c.b16 %v1616, %v1614
        %v1657 = vpack.c.b16 %v1619, %v1617
        %v1658 = vpack.c.b16 %v1620, %v1618
        %v1659 = vpack.c.b16 %v1623, %v1621
        %v1660 = vpack.c.b16 %v1624, %v1622
        %v1661 = vpack.c.b16 %v1627, %v1625
        %v1662 = vpack.c.b16 %v1628, %v1626
        %v1663 = vpack.c.b16 %v1631, %v1629
        %v1664 = vpack.c.b16 %v1632, %v1630
        %1697 = vmatpush.bf16.msra.mxu0 %v1647
        %1698 = vmatpush.bf16.msra.mxu0 %v1645
        %1699 = vmatpush.bf16.msra.mxu0 %v1643
        %1700 = vmatpush.bf16.msra.mxu0 %v1641
        %1701 = vmatpush.bf16.msra.mxu0 %v1639
        %1702 = vmatpush.bf16.msra.mxu0 %v1637
        %1703 = vmatpush.bf16.msra.mxu0 %v1635
        %1704 = vmatpush.bf16.msra.mxu0 %v1633
        %1705 = vmatmul.bf16.gmra.mxu0 %v1522
        %v1706 = vpop.f32.mrf.mxu0
        %v1707 = vadd.f32 0.0, %v1706
        %v1708 = vpop.f32.mrf.mxu0
        %v1709 = vadd.f32 0.0, %v1708
        %1710 = vdwg.mxu0
        %1711 = vmatpush.bf16.msra.mxu0 %v1663
        %1712 = vmatpush.bf16.msra.mxu0 %v1661
        %1713 = vmatpush.bf16.msra.mxu0 %v1659
        %1714 = vmatpush.bf16.msra.mxu0 %v1657
        %1715 = vmatpush.bf16.msra.mxu0 %v1655
        %1716 = vmatpush.bf16.msra.mxu0 %v1653
        %1717 = vmatpush.bf16.msra.mxu0 %v1651
        %1718 = vmatpush.bf16.msra.mxu0 %v1649
        %1719 = vmatmul.bf16.gmra.mxu0 %v1534
        %v1720 = vpop.f32.mrf.mxu0
        %v1721 = vadd.f32 %v1707, %v1720
        %v1722 = vpop.f32.mrf.mxu0
        %v1723 = vadd.f32 %v1709, %v1722
        %1724 = vdwg.mxu0
        %1725 = vmatpush.bf16.msra.mxu0 %v1648
        %1726 = vmatpush.bf16.msra.mxu0 %v1646
        %1727 = vmatpush.bf16.msra.mxu0 %v1644
        %1728 = vmatpush.bf16.msra.mxu0 %v1642
        %1729 = vmatpush.bf16.msra.mxu0 %v1640
        %1730 = vmatpush.bf16.msra.mxu0 %v1638
        %1731 = vmatpush.bf16.msra.mxu0 %v1636
        %1732 = vmatpush.bf16.msra.mxu0 %v1634
        %1733 = vmatmul.bf16.gmra.mxu0 %v1522
        %v1734 = vpop.f32.mrf.mxu0
        %v1735 = vadd.f32 0.0, %v1734
        %v1736 = vpop.f32.mrf.mxu0
        %v1737 = vadd.f32 0.0, %v1736
        %1738 = vdwg.mxu0
        %1739 = vmatpush.bf16.msra.mxu0 %v1664
        %1740 = vmatpush.bf16.msra.mxu0 %v1662
        %1741 = vmatpush.bf16.msra.mxu0 %v1660
        %1742 = vmatpush.bf16.msra.mxu0 %v1658
        %1743 = vmatpush.bf16.msra.mxu0 %v1656
        %1744 = vmatpush.bf16.msra.mxu0 %v1654
        %1745 = vmatpush.bf16.msra.mxu0 %v1652
        %1746 = vmatpush.bf16.msra.mxu0 %v1650
        %1747 = vmatmul.bf16.gmra.mxu0 %v1534
        %v1748 = vpop.f32.mrf.mxu0
        %v1749 = vadd.f32 %v1735, %v1748
        %v1750 = vpop.f32.mrf.mxu0
        %v1751 = vadd.f32 %v1737, %v1750
        %1752 = vdwg.mxu0
        %v1787 = vunpack.c.l.b16 %v1432
        %v1788 = vunpack.c.h.b16 %v1432
        %v1789 = vunpack.c.l.b16 %v1433
        %v1790 = vunpack.c.h.b16 %v1433
        %v1791 = vunpack.c.l.b16 %v1434
        %v1792 = vunpack.c.h.b16 %v1434
        %v1793 = vunpack.c.l.b16 %v1435
        %v1794 = vunpack.c.h.b16 %v1435
        %v1795 = vunpack.c.l.b16 %v1436
        %v1796 = vunpack.c.h.b16 %v1436
        %v1797 = vunpack.c.l.b16 %v1437
        %v1798 = vunpack.c.h.b16 %v1437
        %v1799 = vunpack.c.l.b16 %v1438
        %v1800 = vunpack.c.h.b16 %v1438
        %v1801 = vunpack.c.l.b16 %v1439
        %v1802 = vunpack.c.h.b16 %v1439
        %v1803 = vunpack.c.l.b16 %v1440
        %v1804 = vunpack.c.h.b16 %v1440
        %v1805 = vunpack.c.l.b16 %v1441
        %v1806 = vunpack.c.h.b16 %v1441
        %v1807 = vunpack.c.l.b16 %v1442
        %v1808 = vunpack.c.h.b16 %v1442
        %v1809 = vunpack.c.l.b16 %v1443
        %v1810 = vunpack.c.h.b16 %v1443
        %v1811 = vunpack.c.l.b16 %v1444
        %v1812 = vunpack.c.h.b16 %v1444
        %v1813 = vunpack.c.l.b16 %v1445
        %v1814 = vunpack.c.h.b16 %v1445
        %v1815 = vunpack.c.l.b16 %v1446
        %v1816 = vunpack.c.h.b16 %v1446
        %v1817 = vunpack.c.l.b16 %v1447
        %v1818 = vunpack.c.h.b16 %v1447
        %v1819 = vunpack.c.l.b16 %v1448
        %v1820 = vunpack.c.h.b16 %v1448
        %v1821 = vunpack.c.l.b16 %v1449
        %v1822 = vunpack.c.h.b16 %v1449
        %v1823 = vunpack.c.l.b16 %v1450
        %v1824 = vunpack.c.h.b16 %v1450
        %v1825 = vunpack.c.l.b16 %v1451
        %v1826 = vunpack.c.h.b16 %v1451
        %v1827 = vunpack.c.l.b16 %v1452
        %v1828 = vunpack.c.h.b16 %v1452
        %v1829 = vunpack.c.l.b16 %v1453
        %v1830 = vunpack.c.h.b16 %v1453
        %v1831 = vunpack.c.l.b16 %v1454
        %v1832 = vunpack.c.h.b16 %v1454
        %v1833 = vunpack.c.l.b16 %v1455
        %v1834 = vunpack.c.h.b16 %v1455
        %v1835 = vunpack.c.l.b16 %v1456
        %v1836 = vunpack.c.h.b16 %v1456
        %v1837 = vunpack.c.l.b16 %v1457
        %v1838 = vunpack.c.h.b16 %v1457
        %v1839 = vunpack.c.l.b16 %v1458
        %v1840 = vunpack.c.h.b16 %v1458
        %v1841 = vunpack.c.l.b16 %v1459
        %v1842 = vunpack.c.h.b16 %v1459
        %v1843 = vunpack.c.l.b16 %v1460
        %v1844 = vunpack.c.h.b16 %v1460
        %v1845 = vunpack.c.l.b16 %v1461
        %v1846 = vunpack.c.h.b16 %v1461
        %v1847 = vunpack.c.l.b16 %v1462
        %v1848 = vunpack.c.h.b16 %v1462
        %v1849 = vunpack.c.l.b16 %v1463
        %v1850 = vunpack.c.h.b16 %v1463
        %v1851 = vpack.c.b16 %v1789, %v1787
        %v1852 = vpack.c.b16 %v1790, %v1788
        %v1853 = vpack.c.b16 %v1793, %v1791
        %v1854 = vpack.c.b16 %v1794, %v1792
        %v1855 = vpack.c.b16 %v1797, %v1795
        %v1856 = vpack.c.b16 %v1798, %v1796
        %v1857 = vpack.c.b16 %v1801, %v1799
        %v1858 = vpack.c.b16 %v1802, %v1800
        %v1859 = vpack.c.b16 %v1805, %v1803
        %v1860 = vpack.c.b16 %v1806, %v1804
        %v1861 = vpack.c.b16 %v1809, %v1807
        %v1862 = vpack.c.b16 %v1810, %v1808
        %v1863 = vpack.c.b16 %v1813, %v1811
        %v1864 = vpack.c.b16 %v1814, %v1812
        %v1865 = vpack.c.b16 %v1817, %v1815
        %v1866 = vpack.c.b16 %v1818, %v1816
        %v1867 = vpack.c.b16 %v1821, %v1819
        %v1868 = vpack.c.b16 %v1822, %v1820
        %v1869 = vpack.c.b16 %v1825, %v1823
        %v1870 = vpack.c.b16 %v1826, %v1824
        %v1871 = vpack.c.b16 %v1829, %v1827
        %v1872 = vpack.c.b16 %v1830, %v1828
        %v1873 = vpack.c.b16 %v1833, %v1831
        %v1874 = vpack.c.b16 %v1834, %v1832
        %v1875 = vpack.c.b16 %v1837, %v1835
        %v1876 = vpack.c.b16 %v1838, %v1836
        %v1877 = vpack.c.b16 %v1841, %v1839
        %v1878 = vpack.c.b16 %v1842, %v1840
        %v1879 = vpack.c.b16 %v1845, %v1843
        %v1880 = vpack.c.b16 %v1846, %v1844
        %v1881 = vpack.c.b16 %v1849, %v1847
        %v1882 = vpack.c.b16 %v1850, %v1848
        %1915 = vmatpush.bf16.msra.mxu0 %v1865
        %1916 = vmatpush.bf16.msra.mxu0 %v1863
        %1917 = vmatpush.bf16.msra.mxu0 %v1861
        %1918 = vmatpush.bf16.msra.mxu0 %v1859
        %1919 = vmatpush.bf16.msra.mxu0 %v1857
        %1920 = vmatpush.bf16.msra.mxu0 %v1855
        %1921 = vmatpush.bf16.msra.mxu0 %v1853
        %1922 = vmatpush.bf16.msra.mxu0 %v1851
        %1923 = vmatmul.bf16.gmra.mxu0 %v1507
        %v1924 = vpop.f32.mrf.mxu0
        %v1925 = vadd.f32 %v1721, %v1924
        %v1926 = vpop.f32.mrf.mxu0
        %v1927 = vadd.f32 %v1723, %v1926
        %1928 = vdwg.mxu0
        %1929 = vmatpush.bf16.msra.mxu0 %v1881
        %1930 = vmatpush.bf16.msra.mxu0 %v1879
        %1931 = vmatpush.bf16.msra.mxu0 %v1877
        %1932 = vmatpush.bf16.msra.mxu0 %v1875
        %1933 = vmatpush.bf16.msra.mxu0 %v1873
        %1934 = vmatpush.bf16.msra.mxu0 %v1871
        %1935 = vmatpush.bf16.msra.mxu0 %v1869
        %1936 = vmatpush.bf16.msra.mxu0 %v1867
        %1937 = vmatmul.bf16.gmra.mxu0 %v1508
        %v1938 = vpop.f32.mrf.mxu0
        %v1939 = vadd.f32 %v1925, %v1938
        %v1940 = vpop.f32.mrf.mxu0
        %v1941 = vadd.f32 %v1927, %v1940
        %1942 = vdwg.mxu0
        %1943 = vmatpush.bf16.msra.mxu0 %v1866
        %1944 = vmatpush.bf16.msra.mxu0 %v1864
        %1945 = vmatpush.bf16.msra.mxu0 %v1862
        %1946 = vmatpush.bf16.msra.mxu0 %v1860
        %1947 = vmatpush.bf16.msra.mxu0 %v1858
        %1948 = vmatpush.bf16.msra.mxu0 %v1856
        %1949 = vmatpush.bf16.msra.mxu0 %v1854
        %1950 = vmatpush.bf16.msra.mxu0 %v1852
        %1951 = vmatmul.bf16.gmra.mxu0 %v1507
        %v1952 = vpop.f32.mrf.mxu0
        %v1953 = vadd.f32 %v1749, %v1952
        %v1954 = vpop.f32.mrf.mxu0
        %v1955 = vadd.f32 %v1751, %v1954
        %1956 = vdwg.mxu0
        %1957 = vmatpush.bf16.msra.mxu0 %v1882
        %1958 = vmatpush.bf16.msra.mxu0 %v1880
        %1959 = vmatpush.bf16.msra.mxu0 %v1878
        %1960 = vmatpush.bf16.msra.mxu0 %v1876
        %1961 = vmatpush.bf16.msra.mxu0 %v1874
        %1962 = vmatpush.bf16.msra.mxu0 %v1872
        %1963 = vmatpush.bf16.msra.mxu0 %v1870
        %1964 = vmatpush.bf16.msra.mxu0 %v1868
        %1965 = vmatmul.bf16.gmra.mxu0 %v1508
        %v1966 = vpop.f32.mrf.mxu0
        %v1967 = vadd.f32 %v1953, %v1966
        %v1968 = vpop.f32.mrf.mxu0
        %v1969 = vadd.f32 %v1955, %v1968
        %1970 = vdwg.mxu0
        %v1971 = vld [vmem:[#allocation2] sm:$0xee]
        %s1972 = scalar_lea.vmem %s1, 1280
        %v1973 = vld [vmem:[%s1972] sm:$0xff]
        %v1974 = vld [vmem:[%s1972 + $0x8] sm:$0xff]
        %v1975 = vld [vmem:[%s1972 + $0x10] sm:$0xff]
        %v1976 = vld [vmem:[%s1972 + $0x18] sm:$0xff]
        %v1977 = vld [vmem:[%s1972 + $0x20] sm:$0xff]
        %v1978 = vld [vmem:[%s1972 + $0x28] sm:$0xff]
        %v1979 = vld [vmem:[%s1972 + $0x30] sm:$0xff]
        %v1980 = vld [vmem:[%s1972 + $0x38] sm:$0xff]
        %v1981 = vld [vmem:[%s1972 + $0x40] sm:$0xff]
        %v1982 = vld [vmem:[%s1972 + $0x48] sm:$0xff]
        %v1983 = vld [vmem:[%s1972 + $0x50] sm:$0xff]
        %v1984 = vld [vmem:[%s1972 + $0x58] sm:$0xff]
        %v1985 = vld [vmem:[%s1972 + $0x60] sm:$0xff]
        %v1986 = vld [vmem:[%s1972 + $0x68] sm:$0xff]
        %v1987 = vld [vmem:[%s1972 + $0x70] sm:$0xff]
        %v1988 = vld [vmem:[%s1972 + $0x78] sm:$0xff]
        %v1989 = vld [vmem:[%s1972 + $0x80] sm:$0xff]
        %v1990 = vld [vmem:[%s1972 + $0x88] sm:$0xff]
        %v1991 = vld [vmem:[%s1972 + $0x90] sm:$0xff]
        %v1992 = vld [vmem:[%s1972 + $0x98] sm:$0xff]
        %v1993 = vld [vmem:[%s1972 + $0xa0] sm:$0xff]
        %v1994 = vld [vmem:[%s1972 + $0xa8] sm:$0xff]
        %v1995 = vld [vmem:[%s1972 + $0xb0] sm:$0xff]
        %v1996 = vld [vmem:[%s1972 + $0xb8] sm:$0xff]
        %v1997 = vld [vmem:[%s1972 + $0xc0] sm:$0xff]
        %v1998 = vld [vmem:[%s1972 + $0xc8] sm:$0xff]
        %v1999 = vld [vmem:[%s1972 + $0xd0] sm:$0xff]
        %v2000 = vld [vmem:[%s1972 + $0xd8] sm:$0xff]
        %v2001 = vld [vmem:[%s1972 + $0xe0] sm:$0xff]
        %v2002 = vld [vmem:[%s1972 + $0xe8] sm:$0xff]
        %v2003 = vld [vmem:[%s1972 + $0xf0] sm:$0xff]
        %v2004 = vld [vmem:[%s1972 + $0xf8] sm:$0xff]
        %v2006 = vunpack.c.l.b16 %v1971
        %v2007 = vunpack.c.h.b16 %v1971
        %v2008 = vpack.c.b16 %v1503, %v2006
        %v2009 = vpack.c.b16 %v1504, %v2007
        %v2010 = vrot.slane %v2008, 1
        %v2011 = vrot.slane %v1509, 1
        %v2012 = vsel %vm1148, %v2010, %v2011
        %v2013 = vrot.slane %v2009, 1
        %v2014 = vrot.slane %v1510, 1
        %v2015 = vsel %vm1148, %v2013, %v2014
        %v2050 = vunpack.c.l.b16 %v1973
        %v2051 = vunpack.c.h.b16 %v1973
        %v2052 = vunpack.c.l.b16 %v1974
        %v2053 = vunpack.c.h.b16 %v1974
        %v2054 = vunpack.c.l.b16 %v1975
        %v2055 = vunpack.c.h.b16 %v1975
        %v2056 = vunpack.c.l.b16 %v1976
        %v2057 = vunpack.c.h.b16 %v1976
        %v2058 = vunpack.c.l.b16 %v1977
        %v2059 = vunpack.c.h.b16 %v1977
        %v2060 = vunpack.c.l.b16 %v1978
        %v2061 = vunpack.c.h.b16 %v1978
        %v2062 = vunpack.c.l.b16 %v1979
        %v2063 = vunpack.c.h.b16 %v1979
        %v2064 = vunpack.c.l.b16 %v1980
        %v2065 = vunpack.c.h.b16 %v1980
        %v2066 = vunpack.c.l.b16 %v1981
        %v2067 = vunpack.c.h.b16 %v1981
        %v2068 = vunpack.c.l.b16 %v1982
        %v2069 = vunpack.c.h.b16 %v1982
        %v2070 = vunpack.c.l.b16 %v1983
        %v2071 = vunpack.c.h.b16 %v1983
        %v2072 = vunpack.c.l.b16 %v1984
        %v2073 = vunpack.c.h.b16 %v1984
        %v2074 = vunpack.c.l.b16 %v1985
        %v2075 = vunpack.c.h.b16 %v1985
        %v2076 = vunpack.c.l.b16 %v1986
        %v2077 = vunpack.c.h.b16 %v1986
        %v2078 = vunpack.c.l.b16 %v1987
        %v2079 = vunpack.c.h.b16 %v1987
        %v2080 = vunpack.c.l.b16 %v1988
        %v2081 = vunpack.c.h.b16 %v1988
        %v2082 = vunpack.c.l.b16 %v1989
        %v2083 = vunpack.c.h.b16 %v1989
        %v2084 = vunpack.c.l.b16 %v1990
        %v2085 = vunpack.c.h.b16 %v1990
        %v2086 = vunpack.c.l.b16 %v1991
        %v2087 = vunpack.c.h.b16 %v1991
        %v2088 = vunpack.c.l.b16 %v1992
        %v2089 = vunpack.c.h.b16 %v1992
        %v2090 = vunpack.c.l.b16 %v1993
        %v2091 = vunpack.c.h.b16 %v1993
        %v2092 = vunpack.c.l.b16 %v1994
        %v2093 = vunpack.c.h.b16 %v1994
        %v2094 = vunpack.c.l.b16 %v1995
        %v2095 = vunpack.c.h.b16 %v1995
        %v2096 = vunpack.c.l.b16 %v1996
        %v2097 = vunpack.c.h.b16 %v1996
        %v2098 = vunpack.c.l.b16 %v1997
        %v2099 = vunpack.c.h.b16 %v1997
        %v2100 = vunpack.c.l.b16 %v1998
        %v2101 = vunpack.c.h.b16 %v1998
        %v2102 = vunpack.c.l.b16 %v1999
        %v2103 = vunpack.c.h.b16 %v1999
        %v2104 = vunpack.c.l.b16 %v2000
        %v2105 = vunpack.c.h.b16 %v2000
        %v2106 = vunpack.c.l.b16 %v2001
        %v2107 = vunpack.c.h.b16 %v2001
        %v2108 = vunpack.c.l.b16 %v2002
        %v2109 = vunpack.c.h.b16 %v2002
        %v2110 = vunpack.c.l.b16 %v2003
        %v2111 = vunpack.c.h.b16 %v2003
        %v2112 = vunpack.c.l.b16 %v2004
        %v2113 = vunpack.c.h.b16 %v2004
        %v2114 = vpack.c.b16 %v2052, %v2050
        %v2115 = vpack.c.b16 %v2053, %v2051
        %v2116 = vpack.c.b16 %v2056, %v2054
        %v2117 = vpack.c.b16 %v2057, %v2055
        %v2118 = vpack.c.b16 %v2060, %v2058
        %v2119 = vpack.c.b16 %v2061, %v2059
        %v2120 = vpack.c.b16 %v2064, %v2062
        %v2121 = vpack.c.b16 %v2065, %v2063
        %v2122 = vpack.c.b16 %v2068, %v2066
        %v2123 = vpack.c.b16 %v2069, %v2067
        %v2124 = vpack.c.b16 %v2072, %v2070
        %v2125 = vpack.c.b16 %v2073, %v2071
        %v2126 = vpack.c.b16 %v2076, %v2074
        %v2127 = vpack.c.b16 %v2077, %v2075
        %v2128 = vpack.c.b16 %v2080, %v2078
        %v2129 = vpack.c.b16 %v2081, %v2079
        %v2130 = vpack.c.b16 %v2084, %v2082
        %v2131 = vpack.c.b16 %v2085, %v2083
        %v2132 = vpack.c.b16 %v2088, %v2086
        %v2133 = vpack.c.b16 %v2089, %v2087
        %v2134 = vpack.c.b16 %v2092, %v2090
        %v2135 = vpack.c.b16 %v2093, %v2091
        %v2136 = vpack.c.b16 %v2096, %v2094
        %v2137 = vpack.c.b16 %v2097, %v2095
        %v2138 = vpack.c.b16 %v2100, %v2098
        %v2139 = vpack.c.b16 %v2101, %v2099
        %v2140 = vpack.c.b16 %v2104, %v2102
        %v2141 = vpack.c.b16 %v2105, %v2103
        %v2142 = vpack.c.b16 %v2108, %v2106
        %v2143 = vpack.c.b16 %v2109, %v2107
        %v2144 = vpack.c.b16 %v2112, %v2110
        %v2145 = vpack.c.b16 %v2113, %v2111
        %2178 = vmatpush.bf16.msra.mxu0 %v2128
        %2179 = vmatpush.bf16.msra.mxu0 %v2126
        %2180 = vmatpush.bf16.msra.mxu0 %v2124
        %2181 = vmatpush.bf16.msra.mxu0 %v2122
        %2182 = vmatpush.bf16.msra.mxu0 %v2120
        %2183 = vmatpush.bf16.msra.mxu0 %v2118
        %2184 = vmatpush.bf16.msra.mxu0 %v2116
        %2185 = vmatpush.bf16.msra.mxu0 %v2114
        %2186 = vmatmul.bf16.gmra.mxu0 %v2012
        %v2187 = vpop.f32.mrf.mxu0
        %v2188 = vadd.f32 0.0, %v2187
        %v2189 = vpop.f32.mrf.mxu0
        %v2190 = vadd.f32 0.0, %v2189
        %2191 = vdwg.mxu0
        %2192 = vmatpush.bf16.msra.mxu0 %v2144
        %2193 = vmatpush.bf16.msra.mxu0 %v2142
        %2194 = vmatpush.bf16.msra.mxu0 %v2140
        %2195 = vmatpush.bf16.msra.mxu0 %v2138
        %2196 = vmatpush.bf16.msra.mxu0 %v2136
        %2197 = vmatpush.bf16.msra.mxu0 %v2134
        %2198 = vmatpush.bf16.msra.mxu0 %v2132
        %2199 = vmatpush.bf16.msra.mxu0 %v2130
        %2200 = vmatmul.bf16.gmra.mxu0 %v2015
        %v2201 = vpop.f32.mrf.mxu0
        %v2202 = vadd.f32 %v2188, %v2201
        %v2203 = vpop.f32.mrf.mxu0
        %v2204 = vadd.f32 %v2190, %v2203
        %2205 = vdwg.mxu0
        %2206 = vmatpush.bf16.msra.mxu0 %v2129
        %2207 = vmatpush.bf16.msra.mxu0 %v2127
        %2208 = vmatpush.bf16.msra.mxu0 %v2125
        %2209 = vmatpush.bf16.msra.mxu0 %v2123
        %2210 = vmatpush.bf16.msra.mxu0 %v2121
        %2211 = vmatpush.bf16.msra.mxu0 %v2119
        %2212 = vmatpush.bf16.msra.mxu0 %v2117
        %2213 = vmatpush.bf16.msra.mxu0 %v2115
        %2214 = vmatmul.bf16.gmra.mxu0 %v2012
        %v2215 = vpop.f32.mrf.mxu0
        %v2216 = vadd.f32 0.0, %v2215
        %v2217 = vpop.f32.mrf.mxu0
        %v2218 = vadd.f32 0.0, %v2217
        %2219 = vdwg.mxu0
        %2220 = vmatpush.bf16.msra.mxu0 %v2145
        %2221 = vmatpush.bf16.msra.mxu0 %v2143
        %2222 = vmatpush.bf16.msra.mxu0 %v2141
        %2223 = vmatpush.bf16.msra.mxu0 %v2139
        %2224 = vmatpush.bf16.msra.mxu0 %v2137
        %2225 = vmatpush.bf16.msra.mxu0 %v2135
        %2226 = vmatpush.bf16.msra.mxu0 %v2133
        %2227 = vmatpush.bf16.msra.mxu0 %v2131
        %2228 = vmatmul.bf16.gmra.mxu0 %v2015
        %v2229 = vpop.f32.mrf.mxu0
        %v2230 = vadd.f32 %v2216, %v2229
        %v2231 = vpop.f32.mrf.mxu0
        %v2232 = vadd.f32 %v2218, %v2231
        %2233 = vdwg.mxu0
        %v2234 = vadd.f32 %v1939, %v2202
        %v2235 = vadd.f32 %v1967, %v2230
        %v2236 = vadd.f32 %v1941, %v2204
        %v2237 = vadd.f32 %v1969, %v2232
        %s2238 = scalar_lea.vmem %s2, 2
        %v2239 = vld [vmem:[%s2238] sm:$0x3]
        %v2241 = vperm.slane %v2239, 0
        %v2242 = vperm.slane %v2239, 1
        %v2245 = vadd.f32 %v2234, %v2241
        %v2246 = vadd.f32 %v2235, %v2242
        %v2247 = vadd.f32 %v2236, %v2241
        %v2248 = vadd.f32 %v2237, %v2242
        %v2249 = vpack.c.bf16 %v2246, %v2245
        %v2250 = vpack.c.bf16 %v2248, %v2247
        %v2252 = vshrl.u32 %v2249, 16
        %v2254 = vrot.slane %v2252, 7
        %v2255 = vshll.u32 %v2249, 16
        %v2257 = vor.u32 %v2254, %v2255
        %v2258 = vrot.slane %v2254, 4
        %v2260 = vshrl.u32 %v2250, 16
        %v2262 = vrot.slane %v2260, 7
        %v2263 = vshll.u32 %v2250, 16
        %v2265 = vor.u32 %v2262, %v2263
        %v2266 = vsel %vm526, %v2258, %v2265
        %v2267 = vrot.slane %v2262, 4
        %v2271 = vsel %vm553, %v2257, %v1429
        %2272 = vst [vmem:[#allocation2] sm:$0xff] %v2271
        %2273 = vst [vmem:[#allocation2 + $0x8] sm:$0xff] %v2266
        %v2274 = vld [vmem:[#allocation2 + $0x10] sm:$0x11]
        %v2275 = vsel %vm563, %v2267, %v2274
        %2276 = vst [vmem:[#allocation2 + $0x10] sm:$0x11] %v2275
        %v2277 = vld [vmem:[#allocation2] sm:$0xff]
        %v2278 = vld [vmem:[#allocation2 + $0x8] sm:$0xff]
        %s2279 = scalar_lea.vmem %s1, 1536
        %v2280 = vld [vmem:[%s2279] sm:$0xff]
        %v2281 = vld [vmem:[%s2279 + $0x8] sm:$0xff]
        %v2282 = vld [vmem:[%s2279 + $0x10] sm:$0xff]
        %v2283 = vld [vmem:[%s2279 + $0x18] sm:$0xff]
        %v2284 = vld [vmem:[%s2279 + $0x20] sm:$0xff]
        %v2285 = vld [vmem:[%s2279 + $0x28] sm:$0xff]
        %v2286 = vld [vmem:[%s2279 + $0x30] sm:$0xff]
        %v2287 = vld [vmem:[%s2279 + $0x38] sm:$0xff]
        %v2288 = vld [vmem:[%s2279 + $0x40] sm:$0xff]
        %v2289 = vld [vmem:[%s2279 + $0x48] sm:$0xff]
        %v2290 = vld [vmem:[%s2279 + $0x50] sm:$0xff]
        %v2291 = vld [vmem:[%s2279 + $0x58] sm:$0xff]
        %v2292 = vld [vmem:[%s2279 + $0x60] sm:$0xff]
        %v2293 = vld [vmem:[%s2279 + $0x68] sm:$0xff]
        %v2294 = vld [vmem:[%s2279 + $0x70] sm:$0xff]
        %v2295 = vld [vmem:[%s2279 + $0x78] sm:$0xff]
        %v2296 = vld [vmem:[%s2279 + $0x80] sm:$0xff]
        %v2297 = vld [vmem:[%s2279 + $0x88] sm:$0xff]
        %v2298 = vld [vmem:[%s2279 + $0x90] sm:$0xff]
        %v2299 = vld [vmem:[%s2279 + $0x98] sm:$0xff]
        %v2300 = vld [vmem:[%s2279 + $0xa0] sm:$0xff]
        %v2301 = vld [vmem:[%s2279 + $0xa8] sm:$0xff]
        %v2302 = vld [vmem:[%s2279 + $0xb0] sm:$0xff]
        %v2303 = vld [vmem:[%s2279 + $0xb8] sm:$0xff]
        %v2304 = vld [vmem:[%s2279 + $0xc0] sm:$0xff]
        %v2305 = vld [vmem:[%s2279 + $0xc8] sm:$0xff]
        %v2306 = vld [vmem:[%s2279 + $0xd0] sm:$0xff]
        %v2307 = vld [vmem:[%s2279 + $0xd8] sm:$0xff]
        %v2308 = vld [vmem:[%s2279 + $0xe0] sm:$0xff]
        %v2309 = vld [vmem:[%s2279 + $0xe8] sm:$0xff]
        %v2310 = vld [vmem:[%s2279 + $0xf0] sm:$0xff]
        %v2311 = vld [vmem:[%s2279 + $0xf8] sm:$0xff]
        %v2312 = vld [vmem:[#allocation2 + $0x10] sm:$0x11]
        %s2313 = scalar_lea.vmem %s1, 1792
        %v2314 = vld [vmem:[%s2313] sm:$0xff]
        %v2315 = vld [vmem:[%s2313 + $0x8] sm:$0xff]
        %v2316 = vld [vmem:[%s2313 + $0x10] sm:$0xff]
        %v2317 = vld [vmem:[%s2313 + $0x18] sm:$0xff]
        %v2318 = vld [vmem:[%s2313 + $0x20] sm:$0xff]
        %v2319 = vld [vmem:[%s2313 + $0x28] sm:$0xff]
        %v2320 = vld [vmem:[%s2313 + $0x30] sm:$0xff]
        %v2321 = vld [vmem:[%s2313 + $0x38] sm:$0xff]
        %v2322 = vld [vmem:[%s2313 + $0x40] sm:$0xff]
        %v2323 = vld [vmem:[%s2313 + $0x48] sm:$0xff]
        %v2324 = vld [vmem:[%s2313 + $0x50] sm:$0xff]
        %v2325 = vld [vmem:[%s2313 + $0x58] sm:$0xff]
        %v2326 = vld [vmem:[%s2313 + $0x60] sm:$0xff]
        %v2327 = vld [vmem:[%s2313 + $0x68] sm:$0xff]
        %v2328 = vld [vmem:[%s2313 + $0x70] sm:$0xff]
        %v2329 = vld [vmem:[%s2313 + $0x78] sm:$0xff]
        %v2330 = vld [vmem:[%s2313 + $0x80] sm:$0xff]
        %v2331 = vld [vmem:[%s2313 + $0x88] sm:$0xff]
        %v2332 = vld [vmem:[%s2313 + $0x90] sm:$0xff]
        %v2333 = vld [vmem:[%s2313 + $0x98] sm:$0xff]
        %v2334 = vld [vmem:[%s2313 + $0xa0] sm:$0xff]
        %v2335 = vld [vmem:[%s2313 + $0xa8] sm:$0xff]
        %v2336 = vld [vmem:[%s2313 + $0xb0] sm:$0xff]
        %v2337 = vld [vmem:[%s2313 + $0xb8] sm:$0xff]
        %v2338 = vld [vmem:[%s2313 + $0xc0] sm:$0xff]
        %v2339 = vld [vmem:[%s2313 + $0xc8] sm:$0xff]
        %v2340 = vld [vmem:[%s2313 + $0xd0] sm:$0xff]
        %v2341 = vld [vmem:[%s2313 + $0xd8] sm:$0xff]
        %v2342 = vld [vmem:[%s2313 + $0xe0] sm:$0xff]
        %v2343 = vld [vmem:[%s2313 + $0xe8] sm:$0xff]
        %v2344 = vld [vmem:[%s2313 + $0xf0] sm:$0xff]
        %v2345 = vld [vmem:[%s2313 + $0xf8] sm:$0xff]
        %v2349 = vunpack.c.l.b16 %v2277
        %v2350 = vunpack.c.h.b16 %v2277
        %v2351 = vunpack.c.l.b16 %v2278
        %v2352 = vunpack.c.h.b16 %v2278
        %v2353 = vunpack.c.l.b16 %v2312
        %v2354 = vunpack.c.h.b16 %v2312
        %v2355 = vpack.c.b16 %v2351, %v2349
        %v2356 = vpack.c.b16 %v2352, %v2350
        %v2357 = vpack.c.b16 %v2353, %v2353
        %v2358 = vpack.c.b16 %v2354, %v2354
        %v2360 = vshrl.u32 %v2355, 16
        %v2362 = vshll.u32 %v2355, 16
        %v2364 = vrot.slane %v2362, 1
        %v2365 = vor.u32 %v2360, %v2364
        %v2367 = vshll.u32 %v2357, 16
        %v2369 = vrot.slane %v2367, 1
        %v2370 = vsel %vm648, %v2365, %v2369
        %v2372 = vshrl.u32 %v2356, 16
        %v2374 = vshll.u32 %v2356, 16
        %v2376 = vrot.slane %v2374, 1
        %v2377 = vor.u32 %v2372, %v2376
        %v2379 = vshll.u32 %v2358, 16
        %v2381 = vrot.slane %v2379, 1
        %v2382 = vsel %vm648, %v2377, %v2381
        %v2417 = vunpack.c.l.b16 %v2314
        %v2418 = vunpack.c.h.b16 %v2314
        %v2419 = vunpack.c.l.b16 %v2315
        %v2420 = vunpack.c.h.b16 %v2315
        %v2421 = vunpack.c.l.b16 %v2316
        %v2422 = vunpack.c.h.b16 %v2316
        %v2423 = vunpack.c.l.b16 %v2317
        %v2424 = vunpack.c.h.b16 %v2317
        %v2425 = vunpack.c.l.b16 %v2318
        %v2426 = vunpack.c.h.b16 %v2318
        %v2427 = vunpack.c.l.b16 %v2319
        %v2428 = vunpack.c.h.b16 %v2319
        %v2429 = vunpack.c.l.b16 %v2320
        %v2430 = vunpack.c.h.b16 %v2320
        %v2431 = vunpack.c.l.b16 %v2321
        %v2432 = vunpack.c.h.b16 %v2321
        %v2433 = vunpack.c.l.b16 %v2322
        %v2434 = vunpack.c.h.b16 %v2322
        %v2435 = vunpack.c.l.b16 %v2323
        %v2436 = vunpack.c.h.b16 %v2323
        %v2437 = vunpack.c.l.b16 %v2324
        %v2438 = vunpack.c.h.b16 %v2324
        %v2439 = vunpack.c.l.b16 %v2325
        %v2440 = vunpack.c.h.b16 %v2325
        %v2441 = vunpack.c.l.b16 %v2326
        %v2442 = vunpack.c.h.b16 %v2326
        %v2443 = vunpack.c.l.b16 %v2327
        %v2444 = vunpack.c.h.b16 %v2327
        %v2445 = vunpack.c.l.b16 %v2328
        %v2446 = vunpack.c.h.b16 %v2328
        %v2447 = vunpack.c.l.b16 %v2329
        %v2448 = vunpack.c.h.b16 %v2329
        %v2449 = vunpack.c.l.b16 %v2330
        %v2450 = vunpack.c.h.b16 %v2330
        %v2451 = vunpack.c.l.b16 %v2331
        %v2452 = vunpack.c.h.b16 %v2331
        %v2453 = vunpack.c.l.b16 %v2332
        %v2454 = vunpack.c.h.b16 %v2332
        %v2455 = vunpack.c.l.b16 %v2333
        %v2456 = vunpack.c.h.b16 %v2333
        %v2457 = vunpack.c.l.b16 %v2334
        %v2458 = vunpack.c.h.b16 %v2334
        %v2459 = vunpack.c.l.b16 %v2335
        %v2460 = vunpack.c.h.b16 %v2335
        %v2461 = vunpack.c.l.b16 %v2336
        %v2462 = vunpack.c.h.b16 %v2336
        %v2463 = vunpack.c.l.b16 %v2337
        %v2464 = vunpack.c.h.b16 %v2337
        %v2465 = vunpack.c.l.b16 %v2338
        %v2466 = vunpack.c.h.b16 %v2338
        %v2467 = vunpack.c.l.b16 %v2339
        %v2468 = vunpack.c.h.b16 %v2339
        %v2469 = vunpack.c.l.b16 %v2340
        %v2470 = vunpack.c.h.b16 %v2340
        %v2471 = vunpack.c.l.b16 %v2341
        %v2472 = vunpack.c.h.b16 %v2341
        %v2473 = vunpack.c.l.b16 %v2342
        %v2474 = vunpack.c.h.b16 %v2342
        %v2475 = vunpack.c.l.b16 %v2343
        %v2476 = vunpack.c.h.b16 %v2343
        %v2477 = vunpack.c.l.b16 %v2344
        %v2478 = vunpack.c.h.b16 %v2344
        %v2479 = vunpack.c.l.b16 %v2345
        %v2480 = vunpack.c.h.b16 %v2345
        %v2481 = vpack.c.b16 %v2419, %v2417
        %v2482 = vpack.c.b16 %v2420, %v2418
        %v2483 = vpack.c.b16 %v2423, %v2421
        %v2484 = vpack.c.b16 %v2424, %v2422
        %v2485 = vpack.c.b16 %v2427, %v2425
        %v2486 = vpack.c.b16 %v2428, %v2426
        %v2487 = vpack.c.b16 %v2431, %v2429
        %v2488 = vpack.c.b16 %v2432, %v2430
        %v2489 = vpack.c.b16 %v2435, %v2433
        %v2490 = vpack.c.b16 %v2436, %v2434
        %v2491 = vpack.c.b16 %v2439, %v2437
        %v2492 = vpack.c.b16 %v2440, %v2438
        %v2493 = vpack.c.b16 %v2443, %v2441
        %v2494 = vpack.c.b16 %v2444, %v2442
        %v2495 = vpack.c.b16 %v2447, %v2445
        %v2496 = vpack.c.b16 %v2448, %v2446
        %v2497 = vpack.c.b16 %v2451, %v2449
        %v2498 = vpack.c.b16 %v2452, %v2450
        %v2499 = vpack.c.b16 %v2455, %v2453
        %v2500 = vpack.c.b16 %v2456, %v2454
        %v2501 = vpack.c.b16 %v2459, %v2457
        %v2502 = vpack.c.b16 %v2460, %v2458
        %v2503 = vpack.c.b16 %v2463, %v2461
        %v2504 = vpack.c.b16 %v2464, %v2462
        %v2505 = vpack.c.b16 %v2467, %v2465
        %v2506 = vpack.c.b16 %v2468, %v2466
        %v2507 = vpack.c.b16 %v2471, %v2469
        %v2508 = vpack.c.b16 %v2472, %v2470
        %v2509 = vpack.c.b16 %v2475, %v2473
        %v2510 = vpack.c.b16 %v2476, %v2474
        %v2511 = vpack.c.b16 %v2479, %v2477
        %v2512 = vpack.c.b16 %v2480, %v2478
        %2545 = vmatpush.bf16.msra.mxu0 %v2495
        %2546 = vmatpush.bf16.msra.mxu0 %v2493
        %2547 = vmatpush.bf16.msra.mxu0 %v2491
        %2548 = vmatpush.bf16.msra.mxu0 %v2489
        %2549 = vmatpush.bf16.msra.mxu0 %v2487
        %2550 = vmatpush.bf16.msra.mxu0 %v2485
        %2551 = vmatpush.bf16.msra.mxu0 %v2483
        %2552 = vmatpush.bf16.msra.mxu0 %v2481
        %2553 = vmatmul.bf16.gmra.mxu0 %v2370
        %v2554 = vpop.f32.mrf.mxu0
        %v2555 = vadd.f32 0.0, %v2554
        %v2556 = vpop.f32.mrf.mxu0
        %v2557 = vadd.f32 0.0, %v2556
        %2558 = vdwg.mxu0
        %2559 = vmatpush.bf16.msra.mxu0 %v2511
        %2560 = vmatpush.bf16.msra.mxu0 %v2509
        %2561 = vmatpush.bf16.msra.mxu0 %v2507
        %2562 = vmatpush.bf16.msra.mxu0 %v2505
        %2563 = vmatpush.bf16.msra.mxu0 %v2503
        %2564 = vmatpush.bf16.msra.mxu0 %v2501
        %2565 = vmatpush.bf16.msra.mxu0 %v2499
        %2566 = vmatpush.bf16.msra.mxu0 %v2497
        %2567 = vmatmul.bf16.gmra.mxu0 %v2382
        %v2568 = vpop.f32.mrf.mxu0
        %v2569 = vadd.f32 %v2555, %v2568
        %v2570 = vpop.f32.mrf.mxu0
        %v2571 = vadd.f32 %v2557, %v2570
        %2572 = vdwg.mxu0
        %2573 = vmatpush.bf16.msra.mxu0 %v2496
        %2574 = vmatpush.bf16.msra.mxu0 %v2494
        %2575 = vmatpush.bf16.msra.mxu0 %v2492
        %2576 = vmatpush.bf16.msra.mxu0 %v2490
        %2577 = vmatpush.bf16.msra.mxu0 %v2488
        %2578 = vmatpush.bf16.msra.mxu0 %v2486
        %2579 = vmatpush.bf16.msra.mxu0 %v2484
        %2580 = vmatpush.bf16.msra.mxu0 %v2482
        %2581 = vmatmul.bf16.gmra.mxu0 %v2370
        %v2582 = vpop.f32.mrf.mxu0
        %v2583 = vadd.f32 0.0, %v2582
        %v2584 = vpop.f32.mrf.mxu0
        %v2585 = vadd.f32 0.0, %v2584
        %2586 = vdwg.mxu0
        %2587 = vmatpush.bf16.msra.mxu0 %v2512
        %2588 = vmatpush.bf16.msra.mxu0 %v2510
        %2589 = vmatpush.bf16.msra.mxu0 %v2508
        %2590 = vmatpush.bf16.msra.mxu0 %v2506
        %2591 = vmatpush.bf16.msra.mxu0 %v2504
        %2592 = vmatpush.bf16.msra.mxu0 %v2502
        %2593 = vmatpush.bf16.msra.mxu0 %v2500
        %2594 = vmatpush.bf16.msra.mxu0 %v2498
        %2595 = vmatmul.bf16.gmra.mxu0 %v2382
        %v2596 = vpop.f32.mrf.mxu0
        %v2597 = vadd.f32 %v2583, %v2596
        %v2598 = vpop.f32.mrf.mxu0
        %v2599 = vadd.f32 %v2585, %v2598
        %2600 = vdwg.mxu0
        %v2635 = vunpack.c.l.b16 %v2280
        %v2636 = vunpack.c.h.b16 %v2280
        %v2637 = vunpack.c.l.b16 %v2281
        %v2638 = vunpack.c.h.b16 %v2281
        %v2639 = vunpack.c.l.b16 %v2282
        %v2640 = vunpack.c.h.b16 %v2282
        %v2641 = vunpack.c.l.b16 %v2283
        %v2642 = vunpack.c.h.b16 %v2283
        %v2643 = vunpack.c.l.b16 %v2284
        %v2644 = vunpack.c.h.b16 %v2284
        %v2645 = vunpack.c.l.b16 %v2285
        %v2646 = vunpack.c.h.b16 %v2285
        %v2647 = vunpack.c.l.b16 %v2286
        %v2648 = vunpack.c.h.b16 %v2286
        %v2649 = vunpack.c.l.b16 %v2287
        %v2650 = vunpack.c.h.b16 %v2287
        %v2651 = vunpack.c.l.b16 %v2288
        %v2652 = vunpack.c.h.b16 %v2288
        %v2653 = vunpack.c.l.b16 %v2289
        %v2654 = vunpack.c.h.b16 %v2289
        %v2655 = vunpack.c.l.b16 %v2290
        %v2656 = vunpack.c.h.b16 %v2290
        %v2657 = vunpack.c.l.b16 %v2291
        %v2658 = vunpack.c.h.b16 %v2291
        %v2659 = vunpack.c.l.b16 %v2292
        %v2660 = vunpack.c.h.b16 %v2292
        %v2661 = vunpack.c.l.b16 %v2293
        %v2662 = vunpack.c.h.b16 %v2293
        %v2663 = vunpack.c.l.b16 %v2294
        %v2664 = vunpack.c.h.b16 %v2294
        %v2665 = vunpack.c.l.b16 %v2295
        %v2666 = vunpack.c.h.b16 %v2295
        %v2667 = vunpack.c.l.b16 %v2296
        %v2668 = vunpack.c.h.b16 %v2296
        %v2669 = vunpack.c.l.b16 %v2297
        %v2670 = vunpack.c.h.b16 %v2297
        %v2671 = vunpack.c.l.b16 %v2298
        %v2672 = vunpack.c.h.b16 %v2298
        %v2673 = vunpack.c.l.b16 %v2299
        %v2674 = vunpack.c.h.b16 %v2299
        %v2675 = vunpack.c.l.b16 %v2300
        %v2676 = vunpack.c.h.b16 %v2300
        %v2677 = vunpack.c.l.b16 %v2301
        %v2678 = vunpack.c.h.b16 %v2301
        %v2679 = vunpack.c.l.b16 %v2302
        %v2680 = vunpack.c.h.b16 %v2302
        %v2681 = vunpack.c.l.b16 %v2303
        %v2682 = vunpack.c.h.b16 %v2303
        %v2683 = vunpack.c.l.b16 %v2304
        %v2684 = vunpack.c.h.b16 %v2304
        %v2685 = vunpack.c.l.b16 %v2305
        %v2686 = vunpack.c.h.b16 %v2305
        %v2687 = vunpack.c.l.b16 %v2306
        %v2688 = vunpack.c.h.b16 %v2306
        %v2689 = vunpack.c.l.b16 %v2307
        %v2690 = vunpack.c.h.b16 %v2307
        %v2691 = vunpack.c.l.b16 %v2308
        %v2692 = vunpack.c.h.b16 %v2308
        %v2693 = vunpack.c.l.b16 %v2309
        %v2694 = vunpack.c.h.b16 %v2309
        %v2695 = vunpack.c.l.b16 %v2310
        %v2696 = vunpack.c.h.b16 %v2310
        %v2697 = vunpack.c.l.b16 %v2311
        %v2698 = vunpack.c.h.b16 %v2311
        %v2699 = vpack.c.b16 %v2637, %v2635
        %v2700 = vpack.c.b16 %v2638, %v2636
        %v2701 = vpack.c.b16 %v2641, %v2639
        %v2702 = vpack.c.b16 %v2642, %v2640
        %v2703 = vpack.c.b16 %v2645, %v2643
        %v2704 = vpack.c.b16 %v2646, %v2644
        %v2705 = vpack.c.b16 %v2649, %v2647
        %v2706 = vpack.c.b16 %v2650, %v2648
        %v2707 = vpack.c.b16 %v2653, %v2651
        %v2708 = vpack.c.b16 %v2654, %v2652
        %v2709 = vpack.c.b16 %v2657, %v2655
        %v2710 = vpack.c.b16 %v2658, %v2656
        %v2711 = vpack.c.b16 %v2661, %v2659
        %v2712 = vpack.c.b16 %v2662, %v2660
        %v2713 = vpack.c.b16 %v2665, %v2663
        %v2714 = vpack.c.b16 %v2666, %v2664
        %v2715 = vpack.c.b16 %v2669, %v2667
        %v2716 = vpack.c.b16 %v2670, %v2668
        %v2717 = vpack.c.b16 %v2673, %v2671
        %v2718 = vpack.c.b16 %v2674, %v2672
        %v2719 = vpack.c.b16 %v2677, %v2675
        %v2720 = vpack.c.b16 %v2678, %v2676
        %v2721 = vpack.c.b16 %v2681, %v2679
        %v2722 = vpack.c.b16 %v2682, %v2680
        %v2723 = vpack.c.b16 %v2685, %v2683
        %v2724 = vpack.c.b16 %v2686, %v2684
        %v2725 = vpack.c.b16 %v2689, %v2687
        %v2726 = vpack.c.b16 %v2690, %v2688
        %v2727 = vpack.c.b16 %v2693, %v2691
        %v2728 = vpack.c.b16 %v2694, %v2692
        %v2729 = vpack.c.b16 %v2697, %v2695
        %v2730 = vpack.c.b16 %v2698, %v2696
        %2763 = vmatpush.bf16.msra.mxu0 %v2713
        %2764 = vmatpush.bf16.msra.mxu0 %v2711
        %2765 = vmatpush.bf16.msra.mxu0 %v2709
        %2766 = vmatpush.bf16.msra.mxu0 %v2707
        %2767 = vmatpush.bf16.msra.mxu0 %v2705
        %2768 = vmatpush.bf16.msra.mxu0 %v2703
        %2769 = vmatpush.bf16.msra.mxu0 %v2701
        %2770 = vmatpush.bf16.msra.mxu0 %v2699
        %2771 = vmatmul.bf16.gmra.mxu0 %v2355
        %v2772 = vpop.f32.mrf.mxu0
        %v2773 = vadd.f32 %v2569, %v2772
        %v2774 = vpop.f32.mrf.mxu0
        %v2775 = vadd.f32 %v2571, %v2774
        %2776 = vdwg.mxu0
        %2777 = vmatpush.bf16.msra.mxu0 %v2729
        %2778 = vmatpush.bf16.msra.mxu0 %v2727
        %2779 = vmatpush.bf16.msra.mxu0 %v2725
        %2780 = vmatpush.bf16.msra.mxu0 %v2723
        %2781 = vmatpush.bf16.msra.mxu0 %v2721
        %2782 = vmatpush.bf16.msra.mxu0 %v2719
        %2783 = vmatpush.bf16.msra.mxu0 %v2717
        %2784 = vmatpush.bf16.msra.mxu0 %v2715
        %2785 = vmatmul.bf16.gmra.mxu0 %v2356
        %v2786 = vpop.f32.mrf.mxu0
        %v2787 = vadd.f32 %v2773, %v2786
        %v2788 = vpop.f32.mrf.mxu0
        %v2789 = vadd.f32 %v2775, %v2788
        %2790 = vdwg.mxu0
        %2791 = vmatpush.bf16.msra.mxu0 %v2714
        %2792 = vmatpush.bf16.msra.mxu0 %v2712
        %2793 = vmatpush.bf16.msra.mxu0 %v2710
        %2794 = vmatpush.bf16.msra.mxu0 %v2708
        %2795 = vmatpush.bf16.msra.mxu0 %v2706
        %2796 = vmatpush.bf16.msra.mxu0 %v2704
        %2797 = vmatpush.bf16.msra.mxu0 %v2702
        %2798 = vmatpush.bf16.msra.mxu0 %v2700
        %2799 = vmatmul.bf16.gmra.mxu0 %v2355
        %v2800 = vpop.f32.mrf.mxu0
        %v2801 = vadd.f32 %v2597, %v2800
        %v2802 = vpop.f32.mrf.mxu0
        %v2803 = vadd.f32 %v2599, %v2802
        %2804 = vdwg.mxu0
        %2805 = vmatpush.bf16.msra.mxu0 %v2730
        %2806 = vmatpush.bf16.msra.mxu0 %v2728
        %2807 = vmatpush.bf16.msra.mxu0 %v2726
        %2808 = vmatpush.bf16.msra.mxu0 %v2724
        %2809 = vmatpush.bf16.msra.mxu0 %v2722
        %2810 = vmatpush.bf16.msra.mxu0 %v2720
        %2811 = vmatpush.bf16.msra.mxu0 %v2718
        %2812 = vmatpush.bf16.msra.mxu0 %v2716
        %2813 = vmatmul.bf16.gmra.mxu0 %v2356
        %v2814 = vpop.f32.mrf.mxu0
        %v2815 = vadd.f32 %v2801, %v2814
        %v2816 = vpop.f32.mrf.mxu0
        %v2817 = vadd.f32 %v2803, %v2816
        %2818 = vdwg.mxu0
        %v2819 = vld [vmem:[#allocation2] sm:$0xee]
        %s2820 = scalar_lea.vmem %s1, 2048
        %v2821 = vld [vmem:[%s2820] sm:$0xff]
        %v2822 = vld [vmem:[%s2820 + $0x8] sm:$0xff]
        %v2823 = vld [vmem:[%s2820 + $0x10] sm:$0xff]
        %v2824 = vld [vmem:[%s2820 + $0x18] sm:$0xff]
        %v2825 = vld [vmem:[%s2820 + $0x20] sm:$0xff]
        %v2826 = vld [vmem:[%s2820 + $0x28] sm:$0xff]
        %v2827 = vld [vmem:[%s2820 + $0x30] sm:$0xff]
        %v2828 = vld [vmem:[%s2820 + $0x38] sm:$0xff]
        %v2829 = vld [vmem:[%s2820 + $0x40] sm:$0xff]
        %v2830 = vld [vmem:[%s2820 + $0x48] sm:$0xff]
        %v2831 = vld [vmem:[%s2820 + $0x50] sm:$0xff]
        %v2832 = vld [vmem:[%s2820 + $0x58] sm:$0xff]
        %v2833 = vld [vmem:[%s2820 + $0x60] sm:$0xff]
        %v2834 = vld [vmem:[%s2820 + $0x68] sm:$0xff]
        %v2835 = vld [vmem:[%s2820 + $0x70] sm:$0xff]
        %v2836 = vld [vmem:[%s2820 + $0x78] sm:$0xff]
        %v2837 = vld [vmem:[%s2820 + $0x80] sm:$0xff]
        %v2838 = vld [vmem:[%s2820 + $0x88] sm:$0xff]
        %v2839 = vld [vmem:[%s2820 + $0x90] sm:$0xff]
        %v2840 = vld [vmem:[%s2820 + $0x98] sm:$0xff]
        %v2841 = vld [vmem:[%s2820 + $0xa0] sm:$0xff]
        %v2842 = vld [vmem:[%s2820 + $0xa8] sm:$0xff]
        %v2843 = vld [vmem:[%s2820 + $0xb0] sm:$0xff]
        %v2844 = vld [vmem:[%s2820 + $0xb8] sm:$0xff]
        %v2845 = vld [vmem:[%s2820 + $0xc0] sm:$0xff]
        %v2846 = vld [vmem:[%s2820 + $0xc8] sm:$0xff]
        %v2847 = vld [vmem:[%s2820 + $0xd0] sm:$0xff]
        %v2848 = vld [vmem:[%s2820 + $0xd8] sm:$0xff]
        %v2849 = vld [vmem:[%s2820 + $0xe0] sm:$0xff]
        %v2850 = vld [vmem:[%s2820 + $0xe8] sm:$0xff]
        %v2851 = vld [vmem:[%s2820 + $0xf0] sm:$0xff]
        %v2852 = vld [vmem:[%s2820 + $0xf8] sm:$0xff]
        %v2854 = vunpack.c.l.b16 %v2819
        %v2855 = vunpack.c.h.b16 %v2819
        %v2856 = vpack.c.b16 %v2351, %v2854
        %v2857 = vpack.c.b16 %v2352, %v2855
        %v2858 = vrot.slane %v2856, 1
        %v2859 = vrot.slane %v2357, 1
        %v2860 = vsel %vm1148, %v2858, %v2859
        %v2861 = vrot.slane %v2857, 1
        %v2862 = vrot.slane %v2358, 1
        %v2863 = vsel %vm1148, %v2861, %v2862
        %v2898 = vunpack.c.l.b16 %v2821
        %v2899 = vunpack.c.h.b16 %v2821
        %v2900 = vunpack.c.l.b16 %v2822
        %v2901 = vunpack.c.h.b16 %v2822
        %v2902 = vunpack.c.l.b16 %v2823
        %v2903 = vunpack.c.h.b16 %v2823
        %v2904 = vunpack.c.l.b16 %v2824
        %v2905 = vunpack.c.h.b16 %v2824
        %v2906 = vunpack.c.l.b16 %v2825
        %v2907 = vunpack.c.h.b16 %v2825
        %v2908 = vunpack.c.l.b16 %v2826
        %v2909 = vunpack.c.h.b16 %v2826
        %v2910 = vunpack.c.l.b16 %v2827
        %v2911 = vunpack.c.h.b16 %v2827
        %v2912 = vunpack.c.l.b16 %v2828
        %v2913 = vunpack.c.h.b16 %v2828
        %v2914 = vunpack.c.l.b16 %v2829
        %v2915 = vunpack.c.h.b16 %v2829
        %v2916 = vunpack.c.l.b16 %v2830
        %v2917 = vunpack.c.h.b16 %v2830
        %v2918 = vunpack.c.l.b16 %v2831
        %v2919 = vunpack.c.h.b16 %v2831
        %v2920 = vunpack.c.l.b16 %v2832
        %v2921 = vunpack.c.h.b16 %v2832
        %v2922 = vunpack.c.l.b16 %v2833
        %v2923 = vunpack.c.h.b16 %v2833
        %v2924 = vunpack.c.l.b16 %v2834
        %v2925 = vunpack.c.h.b16 %v2834
        %v2926 = vunpack.c.l.b16 %v2835
        %v2927 = vunpack.c.h.b16 %v2835
        %v2928 = vunpack.c.l.b16 %v2836
        %v2929 = vunpack.c.h.b16 %v2836
        %v2930 = vunpack.c.l.b16 %v2837
        %v2931 = vunpack.c.h.b16 %v2837
        %v2932 = vunpack.c.l.b16 %v2838
        %v2933 = vunpack.c.h.b16 %v2838
        %v2934 = vunpack.c.l.b16 %v2839
        %v2935 = vunpack.c.h.b16 %v2839
        %v2936 = vunpack.c.l.b16 %v2840
        %v2937 = vunpack.c.h.b16 %v2840
        %v2938 = vunpack.c.l.b16 %v2841
        %v2939 = vunpack.c.h.b16 %v2841
        %v2940 = vunpack.c.l.b16 %v2842
        %v2941 = vunpack.c.h.b16 %v2842
        %v2942 = vunpack.c.l.b16 %v2843
        %v2943 = vunpack.c.h.b16 %v2843
        %v2944 = vunpack.c.l.b16 %v2844
        %v2945 = vunpack.c.h.b16 %v2844
        %v2946 = vunpack.c.l.b16 %v2845
        %v2947 = vunpack.c.h.b16 %v2845
        %v2948 = vunpack.c.l.b16 %v2846
        %v2949 = vunpack.c.h.b16 %v2846
        %v2950 = vunpack.c.l.b16 %v2847
        %v2951 = vunpack.c.h.b16 %v2847
        %v2952 = vunpack.c.l.b16 %v2848
        %v2953 = vunpack.c.h.b16 %v2848
        %v2954 = vunpack.c.l.b16 %v2849
        %v2955 = vunpack.c.h.b16 %v2849
        %v2956 = vunpack.c.l.b16 %v2850
        %v2957 = vunpack.c.h.b16 %v2850
        %v2958 = vunpack.c.l.b16 %v2851
        %v2959 = vunpack.c.h.b16 %v2851
        %v2960 = vunpack.c.l.b16 %v2852
        %v2961 = vunpack.c.h.b16 %v2852
        %v2962 = vpack.c.b16 %v2900, %v2898
        %v2963 = vpack.c.b16 %v2901, %v2899
        %v2964 = vpack.c.b16 %v2904, %v2902
        %v2965 = vpack.c.b16 %v2905, %v2903
        %v2966 = vpack.c.b16 %v2908, %v2906
        %v2967 = vpack.c.b16 %v2909, %v2907
        %v2968 = vpack.c.b16 %v2912, %v2910
        %v2969 = vpack.c.b16 %v2913, %v2911
        %v2970 = vpack.c.b16 %v2916, %v2914
        %v2971 = vpack.c.b16 %v2917, %v2915
        %v2972 = vpack.c.b16 %v2920, %v2918
        %v2973 = vpack.c.b16 %v2921, %v2919
        %v2974 = vpack.c.b16 %v2924, %v2922
        %v2975 = vpack.c.b16 %v2925, %v2923
        %v2976 = vpack.c.b16 %v2928, %v2926
        %v2977 = vpack.c.b16 %v2929, %v2927
        %v2978 = vpack.c.b16 %v2932, %v2930
        %v2979 = vpack.c.b16 %v2933, %v2931
        %v2980 = vpack.c.b16 %v2936, %v2934
        %v2981 = vpack.c.b16 %v2937, %v2935
        %v2982 = vpack.c.b16 %v2940, %v2938
        %v2983 = vpack.c.b16 %v2941, %v2939
        %v2984 = vpack.c.b16 %v2944, %v2942
        %v2985 = vpack.c.b16 %v2945, %v2943
        %v2986 = vpack.c.b16 %v2948, %v2946
        %v2987 = vpack.c.b16 %v2949, %v2947
        %v2988 = vpack.c.b16 %v2952, %v2950
        %v2989 = vpack.c.b16 %v2953, %v2951
        %v2990 = vpack.c.b16 %v2956, %v2954
        %v2991 = vpack.c.b16 %v2957, %v2955
        %v2992 = vpack.c.b16 %v2960, %v2958
        %v2993 = vpack.c.b16 %v2961, %v2959
        %3026 = vmatpush.bf16.msra.mxu0 %v2976
        %3027 = vmatpush.bf16.msra.mxu0 %v2974
        %3028 = vmatpush.bf16.msra.mxu0 %v2972
        %3029 = vmatpush.bf16.msra.mxu0 %v2970
        %3030 = vmatpush.bf16.msra.mxu0 %v2968
        %3031 = vmatpush.bf16.msra.mxu0 %v2966
        %3032 = vmatpush.bf16.msra.mxu0 %v2964
        %3033 = vmatpush.bf16.msra.mxu0 %v2962
        %3034 = vmatmul.bf16.gmra.mxu0 %v2860
        %v3035 = vpop.f32.mrf.mxu0
        %v3036 = vadd.f32 0.0, %v3035
        %v3037 = vpop.f32.mrf.mxu0
        %v3038 = vadd.f32 0.0, %v3037
        %3039 = vdwg.mxu0
        %3040 = vmatpush.bf16.msra.mxu0 %v2992
        %3041 = vmatpush.bf16.msra.mxu0 %v2990
        %3042 = vmatpush.bf16.msra.mxu0 %v2988
        %3043 = vmatpush.bf16.msra.mxu0 %v2986
        %3044 = vmatpush.bf16.msra.mxu0 %v2984
        %3045 = vmatpush.bf16.msra.mxu0 %v2982
        %3046 = vmatpush.bf16.msra.mxu0 %v2980
        %3047 = vmatpush.bf16.msra.mxu0 %v2978
        %3048 = vmatmul.bf16.gmra.mxu0 %v2863
        %v3049 = vpop.f32.mrf.mxu0
        %v3050 = vadd.f32 %v3036, %v3049
        %v3051 = vpop.f32.mrf.mxu0
        %v3052 = vadd.f32 %v3038, %v3051
        %3053 = vdwg.mxu0
        %3054 = vmatpush.bf16.msra.mxu0 %v2977
        %3055 = vmatpush.bf16.msra.mxu0 %v2975
        %3056 = vmatpush.bf16.msra.mxu0 %v2973
        %3057 = vmatpush.bf16.msra.mxu0 %v2971
        %3058 = vmatpush.bf16.msra.mxu0 %v2969
        %3059 = vmatpush.bf16.msra.mxu0 %v2967
        %3060 = vmatpush.bf16.msra.mxu0 %v2965
        %3061 = vmatpush.bf16.msra.mxu0 %v2963
        %3062 = vmatmul.bf16.gmra.mxu0 %v2860
        %v3063 = vpop.f32.mrf.mxu0
        %v3064 = vadd.f32 0.0, %v3063
        %v3065 = vpop.f32.mrf.mxu0
        %v3066 = vadd.f32 0.0, %v3065
        %3067 = vdwg.mxu0
        %3068 = vmatpush.bf16.msra.mxu0 %v2993
        %3069 = vmatpush.bf16.msra.mxu0 %v2991
        %3070 = vmatpush.bf16.msra.mxu0 %v2989
        %3071 = vmatpush.bf16.msra.mxu0 %v2987
        %3072 = vmatpush.bf16.msra.mxu0 %v2985
        %3073 = vmatpush.bf16.msra.mxu0 %v2983
        %3074 = vmatpush.bf16.msra.mxu0 %v2981
        %3075 = vmatpush.bf16.msra.mxu0 %v2979
        %3076 = vmatmul.bf16.gmra.mxu0 %v2863
        %v3077 = vpop.f32.mrf.mxu0
        %v3078 = vadd.f32 %v3064, %v3077
        %v3079 = vpop.f32.mrf.mxu0
        %v3080 = vadd.f32 %v3066, %v3079
        %3081 = vdwg.mxu0
        %v3082 = vadd.f32 %v2787, %v3050
        %v3083 = vadd.f32 %v2815, %v3078
        %v3084 = vadd.f32 %v2789, %v3052
        %v3085 = vadd.f32 %v2817, %v3080
        %s3086 = scalar_lea.vmem %s2, 4
        %v3087 = vld [vmem:[%s3086] sm:$0x3]
        %v3089 = vperm.slane %v3087, 0
        %v3090 = vperm.slane %v3087, 1
        %v3093 = vadd.f32 %v3082, %v3089
        %v3094 = vadd.f32 %v3083, %v3090
        %v3095 = vadd.f32 %v3084, %v3089
        %v3096 = vadd.f32 %v3085, %v3090
        %s3097 = sld [smem:[#allocation4 + $0x1]]
        %vm3098 = vcmp.ge.f32.partialorder %v3093, 0.0
        %vm3099 = vcmp.ge.f32.partialorder %v3094, 0.0
        %vm3100 = vcmp.ge.f32.partialorder %v3095, 0.0
        %vm3101 = vcmp.ge.f32.partialorder %v3096, 0.0
        %v3102 = vstv %s3097
        %v3103 = vmul.f32 %v3102, %v3093
        %v3104 = vmul.f32 %v3102, %v3094
        %v3105 = vmul.f32 %v3102, %v3095
        %v3106 = vmul.f32 %v3102, %v3096
        %v3107 = vsel %vm3098, %v3093, %v3103
        %v3108 = vsel %vm3099, %v3094, %v3104
        %v3109 = vsel %vm3100, %v3095, %v3105
        %v3110 = vsel %vm3101, %v3096, %v3106
        %v3111 = vpack.c.bf16 %v3108, %v3107
        %v3112 = vpack.c.bf16 %v3110, %v3109
        %v3114 = vshrl.u32 %v3111, 16
        %v3116 = vrot.slane %v3114, 7
        %v3117 = vshll.u32 %v3111, 16
        %v3119 = vor.u32 %v3116, %v3117
        %v3120 = vrot.slane %v3116, 4
        %v3122 = vshrl.u32 %v3112, 16
        %v3124 = vrot.slane %v3122, 7
        %v3125 = vshll.u32 %v3112, 16
        %v3127 = vor.u32 %v3124, %v3125
        %v3128 = vsel %vm526, %v3120, %v3127
        %v3129 = vrot.slane %v3124, 4
        %v3133 = vsel %vm553, %v3119, %v2277
        %3134 = vst [vmem:[#allocation2] sm:$0xff] %v3133
        %3135 = vst [vmem:[#allocation2 + $0x8] sm:$0xff] %v3128
        %v3136 = vld [vmem:[#allocation2 + $0x10] sm:$0x11]
        %v3137 = vsel %vm563, %v3129, %v3136
        %3138 = vst [vmem:[#allocation2 + $0x10] sm:$0x11] %v3137
        %v3139 = vld [vmem:[#allocation2] sm:$0xff]
        %v3140 = vld [vmem:[#allocation2 + $0x8] sm:$0xff]
        %s3141 = scalar_lea.vmem %s1, 2304
        %v3142 = vld [vmem:[%s3141] sm:$0xff]
        %v3143 = vld [vmem:[%s3141 + $0x8] sm:$0xff]
        %v3144 = vld [vmem:[%s3141 + $0x10] sm:$0xff]
        %v3145 = vld [vmem:[%s3141 + $0x18] sm:$0xff]
        %v3146 = vld [vmem:[%s3141 + $0x20] sm:$0xff]
        %v3147 = vld [vmem:[%s3141 + $0x28] sm:$0xff]
        %v3148 = vld [vmem:[%s3141 + $0x30] sm:$0xff]
        %v3149 = vld [vmem:[%s3141 + $0x38] sm:$0xff]
        %v3150 = vld [vmem:[%s3141 + $0x40] sm:$0xff]
        %v3151 = vld [vmem:[%s3141 + $0x48] sm:$0xff]
        %v3152 = vld [vmem:[%s3141 + $0x50] sm:$0xff]
        %v3153 = vld [vmem:[%s3141 + $0x58] sm:$0xff]
        %v3154 = vld [vmem:[%s3141 + $0x60] sm:$0xff]
        %v3155 = vld [vmem:[%s3141 + $0x68] sm:$0xff]
        %v3156 = vld [vmem:[%s3141 + $0x70] sm:$0xff]
        %v3157 = vld [vmem:[%s3141 + $0x78] sm:$0xff]
        %v3158 = vld [vmem:[%s3141 + $0x80] sm:$0xff]
        %v3159 = vld [vmem:[%s3141 + $0x88] sm:$0xff]
        %v3160 = vld [vmem:[%s3141 + $0x90] sm:$0xff]
        %v3161 = vld [vmem:[%s3141 + $0x98] sm:$0xff]
        %v3162 = vld [vmem:[%s3141 + $0xa0] sm:$0xff]
        %v3163 = vld [vmem:[%s3141 + $0xa8] sm:$0xff]
        %v3164 = vld [vmem:[%s3141 + $0xb0] sm:$0xff]
        %v3165 = vld [vmem:[%s3141 + $0xb8] sm:$0xff]
        %v3166 = vld [vmem:[%s3141 + $0xc0] sm:$0xff]
        %v3167 = vld [vmem:[%s3141 + $0xc8] sm:$0xff]
        %v3168 = vld [vmem:[%s3141 + $0xd0] sm:$0xff]
        %v3169 = vld [vmem:[%s3141 + $0xd8] sm:$0xff]
        %v3170 = vld [vmem:[%s3141 + $0xe0] sm:$0xff]
        %v3171 = vld [vmem:[%s3141 + $0xe8] sm:$0xff]
        %v3172 = vld [vmem:[%s3141 + $0xf0] sm:$0xff]
        %v3173 = vld [vmem:[%s3141 + $0xf8] sm:$0xff]
        %v3174 = vld [vmem:[#allocation2 + $0x10] sm:$0x11]
        %s3175 = scalar_lea.vmem %s1, 2560
        %v3176 = vld [vmem:[%s3175] sm:$0xff]
        %v3177 = vld [vmem:[%s3175 + $0x8] sm:$0xff]
        %v3178 = vld [vmem:[%s3175 + $0x10] sm:$0xff]
        %v3179 = vld [vmem:[%s3175 + $0x18] sm:$0xff]
        %v3180 = vld [vmem:[%s3175 + $0x20] sm:$0xff]
        %v3181 = vld [vmem:[%s3175 + $0x28] sm:$0xff]
        %v3182 = vld [vmem:[%s3175 + $0x30] sm:$0xff]
        %v3183 = vld [vmem:[%s3175 + $0x38] sm:$0xff]
        %v3184 = vld [vmem:[%s3175 + $0x40] sm:$0xff]
        %v3185 = vld [vmem:[%s3175 + $0x48] sm:$0xff]
        %v3186 = vld [vmem:[%s3175 + $0x50] sm:$0xff]
        %v3187 = vld [vmem:[%s3175 + $0x58] sm:$0xff]
        %v3188 = vld [vmem:[%s3175 + $0x60] sm:$0xff]
        %v3189 = vld [vmem:[%s3175 + $0x68] sm:$0xff]
        %v3190 = vld [vmem:[%s3175 + $0x70] sm:$0xff]
        %v3191 = vld [vmem:[%s3175 + $0x78] sm:$0xff]
        %v3192 = vld [vmem:[%s3175 + $0x80] sm:$0xff]
        %v3193 = vld [vmem:[%s3175 + $0x88] sm:$0xff]
        %v3194 = vld [vmem:[%s3175 + $0x90] sm:$0xff]
        %v3195 = vld [vmem:[%s3175 + $0x98] sm:$0xff]
        %v3196 = vld [vmem:[%s3175 + $0xa0] sm:$0xff]
        %v3197 = vld [vmem:[%s3175 + $0xa8] sm:$0xff]
        %v3198 = vld [vmem:[%s3175 + $0xb0] sm:$0xff]
        %v3199 = vld [vmem:[%s3175 + $0xb8] sm:$0xff]
        %v3200 = vld [vmem:[%s3175 + $0xc0] sm:$0xff]
        %v3201 = vld [vmem:[%s3175 + $0xc8] sm:$0xff]
        %v3202 = vld [vmem:[%s3175 + $0xd0] sm:$0xff]
        %v3203 = vld [vmem:[%s3175 + $0xd8] sm:$0xff]
        %v3204 = vld [vmem:[%s3175 + $0xe0] sm:$0xff]
        %v3205 = vld [vmem:[%s3175 + $0xe8] sm:$0xff]
        %v3206 = vld [vmem:[%s3175 + $0xf0] sm:$0xff]
        %v3207 = vld [vmem:[%s3175 + $0xf8] sm:$0xff]
        %v3211 = vunpack.c.l.b16 %v3139
        %v3212 = vunpack.c.h.b16 %v3139
        %v3213 = vunpack.c.l.b16 %v3140
        %v3214 = vunpack.c.h.b16 %v3140
        %v3215 = vunpack.c.l.b16 %v3174
        %v3216 = vunpack.c.h.b16 %v3174
        %v3217 = vpack.c.b16 %v3213, %v3211
        %v3218 = vpack.c.b16 %v3214, %v3212
        %v3219 = vpack.c.b16 %v3215, %v3215
        %v3220 = vpack.c.b16 %v3216, %v3216
        %v3222 = vshrl.u32 %v3217, 16
        %v3224 = vshll.u32 %v3217, 16
        %v3226 = vrot.slane %v3224, 1
        %v3227 = vor.u32 %v3222, %v3226
        %v3229 = vshll.u32 %v3219, 16
        %v3231 = vrot.slane %v3229, 1
        %v3232 = vsel %vm648, %v3227, %v3231
        %v3234 = vshrl.u32 %v3218, 16
        %v3236 = vshll.u32 %v3218, 16
        %v3238 = vrot.slane %v3236, 1
        %v3239 = vor.u32 %v3234, %v3238
        %v3241 = vshll.u32 %v3220, 16
        %v3243 = vrot.slane %v3241, 1
        %v3244 = vsel %vm648, %v3239, %v3243
        %v3279 = vunpack.c.l.b16 %v3176
        %v3280 = vunpack.c.h.b16 %v3176
        %v3281 = vunpack.c.l.b16 %v3177
        %v3282 = vunpack.c.h.b16 %v3177
        %v3283 = vunpack.c.l.b16 %v3178
        %v3284 = vunpack.c.h.b16 %v3178
        %v3285 = vunpack.c.l.b16 %v3179
        %v3286 = vunpack.c.h.b16 %v3179
        %v3287 = vunpack.c.l.b16 %v3180
        %v3288 = vunpack.c.h.b16 %v3180
        %v3289 = vunpack.c.l.b16 %v3181
        %v3290 = vunpack.c.h.b16 %v3181
        %v3291 = vunpack.c.l.b16 %v3182
        %v3292 = vunpack.c.h.b16 %v3182
        %v3293 = vunpack.c.l.b16 %v3183
        %v3294 = vunpack.c.h.b16 %v3183
        %v3295 = vunpack.c.l.b16 %v3184
        %v3296 = vunpack.c.h.b16 %v3184
        %v3297 = vunpack.c.l.b16 %v3185
        %v3298 = vunpack.c.h.b16 %v3185
        %v3299 = vunpack.c.l.b16 %v3186
        %v3300 = vunpack.c.h.b16 %v3186
        %v3301 = vunpack.c.l.b16 %v3187
        %v3302 = vunpack.c.h.b16 %v3187
        %v3303 = vunpack.c.l.b16 %v3188
        %v3304 = vunpack.c.h.b16 %v3188
        %v3305 = vunpack.c.l.b16 %v3189
        %v3306 = vunpack.c.h.b16 %v3189
        %v3307 = vunpack.c.l.b16 %v3190
        %v3308 = vunpack.c.h.b16 %v3190
        %v3309 = vunpack.c.l.b16 %v3191
        %v3310 = vunpack.c.h.b16 %v3191
        %v3311 = vunpack.c.l.b16 %v3192
        %v3312 = vunpack.c.h.b16 %v3192
        %v3313 = vunpack.c.l.b16 %v3193
        %v3314 = vunpack.c.h.b16 %v3193
        %v3315 = vunpack.c.l.b16 %v3194
        %v3316 = vunpack.c.h.b16 %v3194
        %v3317 = vunpack.c.l.b16 %v3195
        %v3318 = vunpack.c.h.b16 %v3195
        %v3319 = vunpack.c.l.b16 %v3196
        %v3320 = vunpack.c.h.b16 %v3196
        %v3321 = vunpack.c.l.b16 %v3197
        %v3322 = vunpack.c.h.b16 %v3197
        %v3323 = vunpack.c.l.b16 %v3198
        %v3324 = vunpack.c.h.b16 %v3198
        %v3325 = vunpack.c.l.b16 %v3199
        %v3326 = vunpack.c.h.b16 %v3199
        %v3327 = vunpack.c.l.b16 %v3200
        %v3328 = vunpack.c.h.b16 %v3200
        %v3329 = vunpack.c.l.b16 %v3201
        %v3330 = vunpack.c.h.b16 %v3201
        %v3331 = vunpack.c.l.b16 %v3202
        %v3332 = vunpack.c.h.b16 %v3202
        %v3333 = vunpack.c.l.b16 %v3203
        %v3334 = vunpack.c.h.b16 %v3203
        %v3335 = vunpack.c.l.b16 %v3204
        %v3336 = vunpack.c.h.b16 %v3204
        %v3337 = vunpack.c.l.b16 %v3205
        %v3338 = vunpack.c.h.b16 %v3205
        %v3339 = vunpack.c.l.b16 %v3206
        %v3340 = vunpack.c.h.b16 %v3206
        %v3341 = vunpack.c.l.b16 %v3207
        %v3342 = vunpack.c.h.b16 %v3207
        %v3343 = vpack.c.b16 %v3281, %v3279
        %v3344 = vpack.c.b16 %v3282, %v3280
        %v3345 = vpack.c.b16 %v3285, %v3283
        %v3346 = vpack.c.b16 %v3286, %v3284
        %v3347 = vpack.c.b16 %v3289, %v3287
        %v3348 = vpack.c.b16 %v3290, %v3288
        %v3349 = vpack.c.b16 %v3293, %v3291
        %v3350 = vpack.c.b16 %v3294, %v3292
        %v3351 = vpack.c.b16 %v3297, %v3295
        %v3352 = vpack.c.b16 %v3298, %v3296
        %v3353 = vpack.c.b16 %v3301, %v3299
        %v3354 = vpack.c.b16 %v3302, %v3300
        %v3355 = vpack.c.b16 %v3305, %v3303
        %v3356 = vpack.c.b16 %v3306, %v3304
        %v3357 = vpack.c.b16 %v3309, %v3307
        %v3358 = vpack.c.b16 %v3310, %v3308
        %v3359 = vpack.c.b16 %v3313, %v3311
        %v3360 = vpack.c.b16 %v3314, %v3312
        %v3361 = vpack.c.b16 %v3317, %v3315
        %v3362 = vpack.c.b16 %v3318, %v3316
        %v3363 = vpack.c.b16 %v3321, %v3319
        %v3364 = vpack.c.b16 %v3322, %v3320
        %v3365 = vpack.c.b16 %v3325, %v3323
        %v3366 = vpack.c.b16 %v3326, %v3324
        %v3367 = vpack.c.b16 %v3329, %v3327
        %v3368 = vpack.c.b16 %v3330, %v3328
        %v3369 = vpack.c.b16 %v3333, %v3331
        %v3370 = vpack.c.b16 %v3334, %v3332
        %v3371 = vpack.c.b16 %v3337, %v3335
        %v3372 = vpack.c.b16 %v3338, %v3336
        %v3373 = vpack.c.b16 %v3341, %v3339
        %v3374 = vpack.c.b16 %v3342, %v3340
        %3407 = vmatpush.bf16.msra.mxu0 %v3357
        %3408 = vmatpush.bf16.msra.mxu0 %v3355
        %3409 = vmatpush.bf16.msra.mxu0 %v3353
        %3410 = vmatpush.bf16.msra.mxu0 %v3351
        %3411 = vmatpush.bf16.msra.mxu0 %v3349
        %3412 = vmatpush.bf16.msra.mxu0 %v3347
        %3413 = vmatpush.bf16.msra.mxu0 %v3345
        %3414 = vmatpush.bf16.msra.mxu0 %v3343
        %3415 = vmatmul.bf16.gmra.mxu0 %v3232
        %v3416 = vpop.f32.mrf.mxu0
        %v3417 = vadd.f32 0.0, %v3416
        %v3418 = vpop.f32.mrf.mxu0
        %v3419 = vadd.f32 0.0, %v3418
        %3420 = vdwg.mxu0
        %3421 = vmatpush.bf16.msra.mxu0 %v3373
        %3422 = vmatpush.bf16.msra.mxu0 %v3371
        %3423 = vmatpush.bf16.msra.mxu0 %v3369
        %3424 = vmatpush.bf16.msra.mxu0 %v3367
        %3425 = vmatpush.bf16.msra.mxu0 %v3365
        %3426 = vmatpush.bf16.msra.mxu0 %v3363
        %3427 = vmatpush.bf16.msra.mxu0 %v3361
        %3428 = vmatpush.bf16.msra.mxu0 %v3359
        %3429 = vmatmul.bf16.gmra.mxu0 %v3244
        %v3430 = vpop.f32.mrf.mxu0
        %v3431 = vadd.f32 %v3417, %v3430
        %v3432 = vpop.f32.mrf.mxu0
        %v3433 = vadd.f32 %v3419, %v3432
        %3434 = vdwg.mxu0
        %3435 = vmatpush.bf16.msra.mxu0 %v3358
        %3436 = vmatpush.bf16.msra.mxu0 %v3356
        %3437 = vmatpush.bf16.msra.mxu0 %v3354
        %3438 = vmatpush.bf16.msra.mxu0 %v3352
        %3439 = vmatpush.bf16.msra.mxu0 %v3350
        %3440 = vmatpush.bf16.msra.mxu0 %v3348
        %3441 = vmatpush.bf16.msra.mxu0 %v3346
        %3442 = vmatpush.bf16.msra.mxu0 %v3344
        %3443 = vmatmul.bf16.gmra.mxu0 %v3232
        %v3444 = vpop.f32.mrf.mxu0
        %v3445 = vadd.f32 0.0, %v3444
        %v3446 = vpop.f32.mrf.mxu0
        %v3447 = vadd.f32 0.0, %v3446
        %3448 = vdwg.mxu0
        %3449 = vmatpush.bf16.msra.mxu0 %v3374
        %3450 = vmatpush.bf16.msra.mxu0 %v3372
        %3451 = vmatpush.bf16.msra.mxu0 %v3370
        %3452 = vmatpush.bf16.msra.mxu0 %v3368
        %3453 = vmatpush.bf16.msra.mxu0 %v3366
        %3454 = vmatpush.bf16.msra.mxu0 %v3364
        %3455 = vmatpush.bf16.msra.mxu0 %v3362
        %3456 = vmatpush.bf16.msra.mxu0 %v3360
        %3457 = vmatmul.bf16.gmra.mxu0 %v3244
        %v3458 = vpop.f32.mrf.mxu0
        %v3459 = vadd.f32 %v3445, %v3458
        %v3460 = vpop.f32.mrf.mxu0
        %v3461 = vadd.f32 %v3447, %v3460
        %3462 = vdwg.mxu0
        %v3497 = vunpack.c.l.b16 %v3142
        %v3498 = vunpack.c.h.b16 %v3142
        %v3499 = vunpack.c.l.b16 %v3143
        %v3500 = vunpack.c.h.b16 %v3143
        %v3501 = vunpack.c.l.b16 %v3144
        %v3502 = vunpack.c.h.b16 %v3144
        %v3503 = vunpack.c.l.b16 %v3145
        %v3504 = vunpack.c.h.b16 %v3145
        %v3505 = vunpack.c.l.b16 %v3146
        %v3506 = vunpack.c.h.b16 %v3146
        %v3507 = vunpack.c.l.b16 %v3147
        %v3508 = vunpack.c.h.b16 %v3147
        %v3509 = vunpack.c.l.b16 %v3148
        %v3510 = vunpack.c.h.b16 %v3148
        %v3511 = vunpack.c.l.b16 %v3149
        %v3512 = vunpack.c.h.b16 %v3149
        %v3513 = vunpack.c.l.b16 %v3150
        %v3514 = vunpack.c.h.b16 %v3150
        %v3515 = vunpack.c.l.b16 %v3151
        %v3516 = vunpack.c.h.b16 %v3151
        %v3517 = vunpack.c.l.b16 %v3152
        %v3518 = vunpack.c.h.b16 %v3152
        %v3519 = vunpack.c.l.b16 %v3153
        %v3520 = vunpack.c.h.b16 %v3153
        %v3521 = vunpack.c.l.b16 %v3154
        %v3522 = vunpack.c.h.b16 %v3154
        %v3523 = vunpack.c.l.b16 %v3155
        %v3524 = vunpack.c.h.b16 %v3155
        %v3525 = vunpack.c.l.b16 %v3156
        %v3526 = vunpack.c.h.b16 %v3156
        %v3527 = vunpack.c.l.b16 %v3157
        %v3528 = vunpack.c.h.b16 %v3157
        %v3529 = vunpack.c.l.b16 %v3158
        %v3530 = vunpack.c.h.b16 %v3158
        %v3531 = vunpack.c.l.b16 %v3159
        %v3532 = vunpack.c.h.b16 %v3159
        %v3533 = vunpack.c.l.b16 %v3160
        %v3534 = vunpack.c.h.b16 %v3160
        %v3535 = vunpack.c.l.b16 %v3161
        %v3536 = vunpack.c.h.b16 %v3161
        %v3537 = vunpack.c.l.b16 %v3162
        %v3538 = vunpack.c.h.b16 %v3162
        %v3539 = vunpack.c.l.b16 %v3163
        %v3540 = vunpack.c.h.b16 %v3163
        %v3541 = vunpack.c.l.b16 %v3164
        %v3542 = vunpack.c.h.b16 %v3164
        %v3543 = vunpack.c.l.b16 %v3165
        %v3544 = vunpack.c.h.b16 %v3165
        %v3545 = vunpack.c.l.b16 %v3166
        %v3546 = vunpack.c.h.b16 %v3166
        %v3547 = vunpack.c.l.b16 %v3167
        %v3548 = vunpack.c.h.b16 %v3167
        %v3549 = vunpack.c.l.b16 %v3168
        %v3550 = vunpack.c.h.b16 %v3168
        %v3551 = vunpack.c.l.b16 %v3169
        %v3552 = vunpack.c.h.b16 %v3169
        %v3553 = vunpack.c.l.b16 %v3170
        %v3554 = vunpack.c.h.b16 %v3170
        %v3555 = vunpack.c.l.b16 %v3171
        %v3556 = vunpack.c.h.b16 %v3171
        %v3557 = vunpack.c.l.b16 %v3172
        %v3558 = vunpack.c.h.b16 %v3172
        %v3559 = vunpack.c.l.b16 %v3173
        %v3560 = vunpack.c.h.b16 %v3173
        %v3561 = vpack.c.b16 %v3499, %v3497
        %v3562 = vpack.c.b16 %v3500, %v3498
        %v3563 = vpack.c.b16 %v3503, %v3501
        %v3564 = vpack.c.b16 %v3504, %v3502
        %v3565 = vpack.c.b16 %v3507, %v3505
        %v3566 = vpack.c.b16 %v3508, %v3506
        %v3567 = vpack.c.b16 %v3511, %v3509
        %v3568 = vpack.c.b16 %v3512, %v3510
        %v3569 = vpack.c.b16 %v3515, %v3513
        %v3570 = vpack.c.b16 %v3516, %v3514
        %v3571 = vpack.c.b16 %v3519, %v3517
        %v3572 = vpack.c.b16 %v3520, %v3518
        %v3573 = vpack.c.b16 %v3523, %v3521
        %v3574 = vpack.c.b16 %v3524, %v3522
        %v3575 = vpack.c.b16 %v3527, %v3525
        %v3576 = vpack.c.b16 %v3528, %v3526
        %v3577 = vpack.c.b16 %v3531, %v3529
        %v3578 = vpack.c.b16 %v3532, %v3530
        %v3579 = vpack.c.b16 %v3535, %v3533
        %v3580 = vpack.c.b16 %v3536, %v3534
        %v3581 = vpack.c.b16 %v3539, %v3537
        %v3582 = vpack.c.b16 %v3540, %v3538
        %v3583 = vpack.c.b16 %v3543, %v3541
        %v3584 = vpack.c.b16 %v3544, %v3542
        %v3585 = vpack.c.b16 %v3547, %v3545
        %v3586 = vpack.c.b16 %v3548, %v3546
        %v3587 = vpack.c.b16 %v3551, %v3549
        %v3588 = vpack.c.b16 %v3552, %v3550
        %v3589 = vpack.c.b16 %v3555, %v3553
        %v3590 = vpack.c.b16 %v3556, %v3554
        %v3591 = vpack.c.b16 %v3559, %v3557
        %v3592 = vpack.c.b16 %v3560, %v3558
        %3625 = vmatpush.bf16.msra.mxu0 %v3575
        %3626 = vmatpush.bf16.msra.mxu0 %v3573
        %3627 = vmatpush.bf16.msra.mxu0 %v3571
        %3628 = vmatpush.bf16.msra.mxu0 %v3569
        %3629 = vmatpush.bf16.msra.mxu0 %v3567
        %3630 = vmatpush.bf16.msra.mxu0 %v3565
        %3631 = vmatpush.bf16.msra.mxu0 %v3563
        %3632 = vmatpush.bf16.msra.mxu0 %v3561
        %3633 = vmatmul.bf16.gmra.mxu0 %v3217
        %v3634 = vpop.f32.mrf.mxu0
        %v3635 = vadd.f32 %v3431, %v3634
        %v3636 = vpop.f32.mrf.mxu0
        %v3637 = vadd.f32 %v3433, %v3636
        %3638 = vdwg.mxu0
        %3639 = vmatpush.bf16.msra.mxu0 %v3591
        %3640 = vmatpush.bf16.msra.mxu0 %v3589
        %3641 = vmatpush.bf16.msra.mxu0 %v3587
        %3642 = vmatpush.bf16.msra.mxu0 %v3585
        %3643 = vmatpush.bf16.msra.mxu0 %v3583
        %3644 = vmatpush.bf16.msra.mxu0 %v3581
        %3645 = vmatpush.bf16.msra.mxu0 %v3579
        %3646 = vmatpush.bf16.msra.mxu0 %v3577
        %3647 = vmatmul.bf16.gmra.mxu0 %v3218
        %v3648 = vpop.f32.mrf.mxu0
        %v3649 = vadd.f32 %v3635, %v3648
        %v3650 = vpop.f32.mrf.mxu0
        %v3651 = vadd.f32 %v3637, %v3650
        %3652 = vdwg.mxu0
        %3653 = vmatpush.bf16.msra.mxu0 %v3576
        %3654 = vmatpush.bf16.msra.mxu0 %v3574
        %3655 = vmatpush.bf16.msra.mxu0 %v3572
        %3656 = vmatpush.bf16.msra.mxu0 %v3570
        %3657 = vmatpush.bf16.msra.mxu0 %v3568
        %3658 = vmatpush.bf16.msra.mxu0 %v3566
        %3659 = vmatpush.bf16.msra.mxu0 %v3564
        %3660 = vmatpush.bf16.msra.mxu0 %v3562
        %3661 = vmatmul.bf16.gmra.mxu0 %v3217
        %v3662 = vpop.f32.mrf.mxu0
        %v3663 = vadd.f32 %v3459, %v3662
        %v3664 = vpop.f32.mrf.mxu0
        %v3665 = vadd.f32 %v3461, %v3664
        %3666 = vdwg.mxu0
        %3667 = vmatpush.bf16.msra.mxu0 %v3592
        %3668 = vmatpush.bf16.msra.mxu0 %v3590
        %3669 = vmatpush.bf16.msra.mxu0 %v3588
        %3670 = vmatpush.bf16.msra.mxu0 %v3586
        %3671 = vmatpush.bf16.msra.mxu0 %v3584
        %3672 = vmatpush.bf16.msra.mxu0 %v3582
        %3673 = vmatpush.bf16.msra.mxu0 %v3580
        %3674 = vmatpush.bf16.msra.mxu0 %v3578
        %3675 = vmatmul.bf16.gmra.mxu0 %v3218
        %v3676 = vpop.f32.mrf.mxu0
        %v3677 = vadd.f32 %v3663, %v3676
        %v3678 = vpop.f32.mrf.mxu0
        %v3679 = vadd.f32 %v3665, %v3678
        %3680 = vdwg.mxu0
        %v3681 = vld [vmem:[#allocation2] sm:$0xee]
        %s3682 = scalar_lea.vmem %s1, 2816
        %v3683 = vld [vmem:[%s3682] sm:$0xff]
        %v3684 = vld [vmem:[%s3682 + $0x8] sm:$0xff]
        %v3685 = vld [vmem:[%s3682 + $0x10] sm:$0xff]
        %v3686 = vld [vmem:[%s3682 + $0x18] sm:$0xff]
        %v3687 = vld [vmem:[%s3682 + $0x20] sm:$0xff]
        %v3688 = vld [vmem:[%s3682 + $0x28] sm:$0xff]
        %v3689 = vld [vmem:[%s3682 + $0x30] sm:$0xff]
        %v3690 = vld [vmem:[%s3682 + $0x38] sm:$0xff]
        %v3691 = vld [vmem:[%s3682 + $0x40] sm:$0xff]
        %v3692 = vld [vmem:[%s3682 + $0x48] sm:$0xff]
        %v3693 = vld [vmem:[%s3682 + $0x50] sm:$0xff]
        %v3694 = vld [vmem:[%s3682 + $0x58] sm:$0xff]
        %v3695 = vld [vmem:[%s3682 + $0x60] sm:$0xff]
        %v3696 = vld [vmem:[%s3682 + $0x68] sm:$0xff]
        %v3697 = vld [vmem:[%s3682 + $0x70] sm:$0xff]
        %v3698 = vld [vmem:[%s3682 + $0x78] sm:$0xff]
        %v3699 = vld [vmem:[%s3682 + $0x80] sm:$0xff]
        %v3700 = vld [vmem:[%s3682 + $0x88] sm:$0xff]
        %v3701 = vld [vmem:[%s3682 + $0x90] sm:$0xff]
        %v3702 = vld [vmem:[%s3682 + $0x98] sm:$0xff]
        %v3703 = vld [vmem:[%s3682 + $0xa0] sm:$0xff]
        %v3704 = vld [vmem:[%s3682 + $0xa8] sm:$0xff]
        %v3705 = vld [vmem:[%s3682 + $0xb0] sm:$0xff]
        %v3706 = vld [vmem:[%s3682 + $0xb8] sm:$0xff]
        %v3707 = vld [vmem:[%s3682 + $0xc0] sm:$0xff]
        %v3708 = vld [vmem:[%s3682 + $0xc8] sm:$0xff]
        %v3709 = vld [vmem:[%s3682 + $0xd0] sm:$0xff]
        %v3710 = vld [vmem:[%s3682 + $0xd8] sm:$0xff]
        %v3711 = vld [vmem:[%s3682 + $0xe0] sm:$0xff]
        %v3712 = vld [vmem:[%s3682 + $0xe8] sm:$0xff]
        %v3713 = vld [vmem:[%s3682 + $0xf0] sm:$0xff]
        %v3714 = vld [vmem:[%s3682 + $0xf8] sm:$0xff]
        %v3716 = vunpack.c.l.b16 %v3681
        %v3717 = vunpack.c.h.b16 %v3681
        %v3718 = vpack.c.b16 %v3213, %v3716
        %v3719 = vpack.c.b16 %v3214, %v3717
        %v3720 = vrot.slane %v3718, 1
        %v3721 = vrot.slane %v3219, 1
        %v3722 = vsel %vm1148, %v3720, %v3721
        %v3723 = vrot.slane %v3719, 1
        %v3724 = vrot.slane %v3220, 1
        %v3725 = vsel %vm1148, %v3723, %v3724
        %v3760 = vunpack.c.l.b16 %v3683
        %v3761 = vunpack.c.h.b16 %v3683
        %v3762 = vunpack.c.l.b16 %v3684
        %v3763 = vunpack.c.h.b16 %v3684
        %v3764 = vunpack.c.l.b16 %v3685
        %v3765 = vunpack.c.h.b16 %v3685
        %v3766 = vunpack.c.l.b16 %v3686
        %v3767 = vunpack.c.h.b16 %v3686
        %v3768 = vunpack.c.l.b16 %v3687
        %v3769 = vunpack.c.h.b16 %v3687
        %v3770 = vunpack.c.l.b16 %v3688
        %v3771 = vunpack.c.h.b16 %v3688
        %v3772 = vunpack.c.l.b16 %v3689
        %v3773 = vunpack.c.h.b16 %v3689
        %v3774 = vunpack.c.l.b16 %v3690
        %v3775 = vunpack.c.h.b16 %v3690
        %v3776 = vunpack.c.l.b16 %v3691
        %v3777 = vunpack.c.h.b16 %v3691
        %v3778 = vunpack.c.l.b16 %v3692
        %v3779 = vunpack.c.h.b16 %v3692
        %v3780 = vunpack.c.l.b16 %v3693
        %v3781 = vunpack.c.h.b16 %v3693
        %v3782 = vunpack.c.l.b16 %v3694
        %v3783 = vunpack.c.h.b16 %v3694
        %v3784 = vunpack.c.l.b16 %v3695
        %v3785 = vunpack.c.h.b16 %v3695
        %v3786 = vunpack.c.l.b16 %v3696
        %v3787 = vunpack.c.h.b16 %v3696
        %v3788 = vunpack.c.l.b16 %v3697
        %v3789 = vunpack.c.h.b16 %v3697
        %v3790 = vunpack.c.l.b16 %v3698
        %v3791 = vunpack.c.h.b16 %v3698
        %v3792 = vunpack.c.l.b16 %v3699
        %v3793 = vunpack.c.h.b16 %v3699
        %v3794 = vunpack.c.l.b16 %v3700
        %v3795 = vunpack.c.h.b16 %v3700
        %v3796 = vunpack.c.l.b16 %v3701
        %v3797 = vunpack.c.h.b16 %v3701
        %v3798 = vunpack.c.l.b16 %v3702
        %v3799 = vunpack.c.h.b16 %v3702
        %v3800 = vunpack.c.l.b16 %v3703
        %v3801 = vunpack.c.h.b16 %v3703
        %v3802 = vunpack.c.l.b16 %v3704
        %v3803 = vunpack.c.h.b16 %v3704
        %v3804 = vunpack.c.l.b16 %v3705
        %v3805 = vunpack.c.h.b16 %v3705
        %v3806 = vunpack.c.l.b16 %v3706
        %v3807 = vunpack.c.h.b16 %v3706
        %v3808 = vunpack.c.l.b16 %v3707
        %v3809 = vunpack.c.h.b16 %v3707
        %v3810 = vunpack.c.l.b16 %v3708
        %v3811 = vunpack.c.h.b16 %v3708
        %v3812 = vunpack.c.l.b16 %v3709
        %v3813 = vunpack.c.h.b16 %v3709
        %v3814 = vunpack.c.l.b16 %v3710
        %v3815 = vunpack.c.h.b16 %v3710
        %v3816 = vunpack.c.l.b16 %v3711
        %v3817 = vunpack.c.h.b16 %v3711
        %v3818 = vunpack.c.l.b16 %v3712
        %v3819 = vunpack.c.h.b16 %v3712
        %v3820 = vunpack.c.l.b16 %v3713
        %v3821 = vunpack.c.h.b16 %v3713
        %v3822 = vunpack.c.l.b16 %v3714
        %v3823 = vunpack.c.h.b16 %v3714
        %v3824 = vpack.c.b16 %v3762, %v3760
        %v3825 = vpack.c.b16 %v3763, %v3761
        %v3826 = vpack.c.b16 %v3766, %v3764
        %v3827 = vpack.c.b16 %v3767, %v3765
        %v3828 = vpack.c.b16 %v3770, %v3768
        %v3829 = vpack.c.b16 %v3771, %v3769
        %v3830 = vpack.c.b16 %v3774, %v3772
        %v3831 = vpack.c.b16 %v3775, %v3773
        %v3832 = vpack.c.b16 %v3778, %v3776
        %v3833 = vpack.c.b16 %v3779, %v3777
        %v3834 = vpack.c.b16 %v3782, %v3780
        %v3835 = vpack.c.b16 %v3783, %v3781
        %v3836 = vpack.c.b16 %v3786, %v3784
        %v3837 = vpack.c.b16 %v3787, %v3785
        %v3838 = vpack.c.b16 %v3790, %v3788
        %v3839 = vpack.c.b16 %v3791, %v3789
        %v3840 = vpack.c.b16 %v3794, %v3792
        %v3841 = vpack.c.b16 %v3795, %v3793
        %v3842 = vpack.c.b16 %v3798, %v3796
        %v3843 = vpack.c.b16 %v3799, %v3797
        %v3844 = vpack.c.b16 %v3802, %v3800
        %v3845 = vpack.c.b16 %v3803, %v3801
        %v3846 = vpack.c.b16 %v3806, %v3804
        %v3847 = vpack.c.b16 %v3807, %v3805
        %v3848 = vpack.c.b16 %v3810, %v3808
        %v3849 = vpack.c.b16 %v3811, %v3809
        %v3850 = vpack.c.b16 %v3814, %v3812
        %v3851 = vpack.c.b16 %v3815, %v3813
        %v3852 = vpack.c.b16 %v3818, %v3816
        %v3853 = vpack.c.b16 %v3819, %v3817
        %v3854 = vpack.c.b16 %v3822, %v3820
        %v3855 = vpack.c.b16 %v3823, %v3821
        %3888 = vmatpush.bf16.msra.mxu0 %v3838
        %3889 = vmatpush.bf16.msra.mxu0 %v3836
        %3890 = vmatpush.bf16.msra.mxu0 %v3834
        %3891 = vmatpush.bf16.msra.mxu0 %v3832
        %3892 = vmatpush.bf16.msra.mxu0 %v3830
        %3893 = vmatpush.bf16.msra.mxu0 %v3828
        %3894 = vmatpush.bf16.msra.mxu0 %v3826
        %3895 = vmatpush.bf16.msra.mxu0 %v3824
        %3896 = vmatmul.bf16.gmra.mxu0 %v3722
        %v3897 = vpop.f32.mrf.mxu0
        %v3898 = vadd.f32 0.0, %v3897
        %v3899 = vpop.f32.mrf.mxu0
        %v3900 = vadd.f32 0.0, %v3899
        %3901 = vdwg.mxu0
        %3902 = vmatpush.bf16.msra.mxu0 %v3854
        %3903 = vmatpush.bf16.msra.mxu0 %v3852
        %3904 = vmatpush.bf16.msra.mxu0 %v3850
        %3905 = vmatpush.bf16.msra.mxu0 %v3848
        %3906 = vmatpush.bf16.msra.mxu0 %v3846
        %3907 = vmatpush.bf16.msra.mxu0 %v3844
        %3908 = vmatpush.bf16.msra.mxu0 %v3842
        %3909 = vmatpush.bf16.msra.mxu0 %v3840
        %3910 = vmatmul.bf16.gmra.mxu0 %v3725
        %v3911 = vpop.f32.mrf.mxu0
        %v3912 = vadd.f32 %v3898, %v3911
        %v3913 = vpop.f32.mrf.mxu0
        %v3914 = vadd.f32 %v3900, %v3913
        %3915 = vdwg.mxu0
        %3916 = vmatpush.bf16.msra.mxu0 %v3839
        %3917 = vmatpush.bf16.msra.mxu0 %v3837
        %3918 = vmatpush.bf16.msra.mxu0 %v3835
        %3919 = vmatpush.bf16.msra.mxu0 %v3833
        %3920 = vmatpush.bf16.msra.mxu0 %v3831
        %3921 = vmatpush.bf16.msra.mxu0 %v3829
        %3922 = vmatpush.bf16.msra.mxu0 %v3827
        %3923 = vmatpush.bf16.msra.mxu0 %v3825
        %3924 = vmatmul.bf16.gmra.mxu0 %v3722
        %v3925 = vpop.f32.mrf.mxu0
        %v3926 = vadd.f32 0.0, %v3925
        %v3927 = vpop.f32.mrf.mxu0
        %v3928 = vadd.f32 0.0, %v3927
        %3929 = vdwg.mxu0
        %3930 = vmatpush.bf16.msra.mxu0 %v3855
        %3931 = vmatpush.bf16.msra.mxu0 %v3853
        %3932 = vmatpush.bf16.msra.mxu0 %v3851
        %3933 = vmatpush.bf16.msra.mxu0 %v3849
        %3934 = vmatpush.bf16.msra.mxu0 %v3847
        %3935 = vmatpush.bf16.msra.mxu0 %v3845
        %3936 = vmatpush.bf16.msra.mxu0 %v3843
        %3937 = vmatpush.bf16.msra.mxu0 %v3841
        %3938 = vmatmul.bf16.gmra.mxu0 %v3725
        %v3939 = vpop.f32.mrf.mxu0
        %v3940 = vadd.f32 %v3926, %v3939
        %v3941 = vpop.f32.mrf.mxu0
        %v3942 = vadd.f32 %v3928, %v3941
        %3943 = vdwg.mxu0
        %v3944 = vadd.f32 %v3649, %v3912
        %v3945 = vadd.f32 %v3677, %v3940
        %v3946 = vadd.f32 %v3651, %v3914
        %v3947 = vadd.f32 %v3679, %v3942
        %s3948 = scalar_lea.vmem %s2, 6
        %v3949 = vld [vmem:[%s3948] sm:$0x3]
        %v3951 = vperm.slane %v3949, 0
        %v3952 = vperm.slane %v3949, 1
        %v3955 = vadd.f32 %v3944, %v3951
        %v3956 = vadd.f32 %v3945, %v3952
        %v3957 = vadd.f32 %v3946, %v3951
        %v3958 = vadd.f32 %v3947, %v3952
        %v3959 = vadd.f32 %v2245, %v3955
        %v3960 = vadd.f32 %v2246, %v3956
        %v3961 = vadd.f32 %v2247, %v3957
        %v3962 = vadd.f32 %v2248, %v3958
        %v3963 = vsel %vm553, %v2257, %v3139
        %3964 = vst [vmem:[#allocation2] sm:$0xff] %v3963
        %3965 = vst [vmem:[#allocation2 + $0x8] sm:$0xff] %v2266
        %v3966 = vld [vmem:[#allocation2 + $0x10] sm:$0x11]
        %v3967 = vsel %vm563, %v2267, %v3966
        %3968 = vst [vmem:[#allocation2 + $0x10] sm:$0x11] %v3967
        %v3969 = vld [vmem:[#allocation2] sm:$0xff]
        %v3970 = vld [vmem:[#allocation2 + $0x8] sm:$0xff]
        %s3971 = scalar_lea.vmem %s1, 3072
        %v3972 = vld [vmem:[%s3971] sm:$0xff]
        %v3973 = vld [vmem:[%s3971 + $0x8] sm:$0xff]
        %v3974 = vld [vmem:[%s3971 + $0x10] sm:$0xff]
        %v3975 = vld [vmem:[%s3971 + $0x18] sm:$0xff]
        %v3976 = vld [vmem:[%s3971 + $0x20] sm:$0xff]
        %v3977 = vld [vmem:[%s3971 + $0x28] sm:$0xff]
        %v3978 = vld [vmem:[%s3971 + $0x30] sm:$0xff]
        %v3979 = vld [vmem:[%s3971 + $0x38] sm:$0xff]
        %v3980 = vld [vmem:[%s3971 + $0x40] sm:$0xff]
        %v3981 = vld [vmem:[%s3971 + $0x48] sm:$0xff]
        %v3982 = vld [vmem:[%s3971 + $0x50] sm:$0xff]
        %v3983 = vld [vmem:[%s3971 + $0x58] sm:$0xff]
        %v3984 = vld [vmem:[%s3971 + $0x60] sm:$0xff]
        %v3985 = vld [vmem:[%s3971 + $0x68] sm:$0xff]
        %v3986 = vld [vmem:[%s3971 + $0x70] sm:$0xff]
        %v3987 = vld [vmem:[%s3971 + $0x78] sm:$0xff]
        %v3988 = vld [vmem:[%s3971 + $0x80] sm:$0xff]
        %v3989 = vld [vmem:[%s3971 + $0x88] sm:$0xff]
        %v3990 = vld [vmem:[%s3971 + $0x90] sm:$0xff]
        %v3991 = vld [vmem:[%s3971 + $0x98] sm:$0xff]
        %v3992 = vld [vmem:[%s3971 + $0xa0] sm:$0xff]
        %v3993 = vld [vmem:[%s3971 + $0xa8] sm:$0xff]
        %v3994 = vld [vmem:[%s3971 + $0xb0] sm:$0xff]
        %v3995 = vld [vmem:[%s3971 + $0xb8] sm:$0xff]
        %v3996 = vld [vmem:[%s3971 + $0xc0] sm:$0xff]
        %v3997 = vld [vmem:[%s3971 + $0xc8] sm:$0xff]
        %v3998 = vld [vmem:[%s3971 + $0xd0] sm:$0xff]
        %v3999 = vld [vmem:[%s3971 + $0xd8] sm:$0xff]
        %v4000 = vld [vmem:[%s3971 + $0xe0] sm:$0xff]
        %v4001 = vld [vmem:[%s3971 + $0xe8] sm:$0xff]
        %v4002 = vld [vmem:[%s3971 + $0xf0] sm:$0xff]
        %v4003 = vld [vmem:[%s3971 + $0xf8] sm:$0xff]
        %v4004 = vld [vmem:[#allocation2 + $0x10] sm:$0x11]
        %s4005 = scalar_lea.vmem %s1, 3328
        %v4006 = vld [vmem:[%s4005] sm:$0xff]
        %v4007 = vld [vmem:[%s4005 + $0x8] sm:$0xff]
        %v4008 = vld [vmem:[%s4005 + $0x10] sm:$0xff]
        %v4009 = vld [vmem:[%s4005 + $0x18] sm:$0xff]
        %v4010 = vld [vmem:[%s4005 + $0x20] sm:$0xff]
        %v4011 = vld [vmem:[%s4005 + $0x28] sm:$0xff]
        %v4012 = vld [vmem:[%s4005 + $0x30] sm:$0xff]
        %v4013 = vld [vmem:[%s4005 + $0x38] sm:$0xff]
        %v4014 = vld [vmem:[%s4005 + $0x40] sm:$0xff]
        %v4015 = vld [vmem:[%s4005 + $0x48] sm:$0xff]
        %v4016 = vld [vmem:[%s4005 + $0x50] sm:$0xff]
        %v4017 = vld [vmem:[%s4005 + $0x58] sm:$0xff]
        %v4018 = vld [vmem:[%s4005 + $0x60] sm:$0xff]
        %v4019 = vld [vmem:[%s4005 + $0x68] sm:$0xff]
        %v4020 = vld [vmem:[%s4005 + $0x70] sm:$0xff]
        %v4021 = vld [vmem:[%s4005 + $0x78] sm:$0xff]
        %v4022 = vld [vmem:[%s4005 + $0x80] sm:$0xff]
        %v4023 = vld [vmem:[%s4005 + $0x88] sm:$0xff]
        %v4024 = vld [vmem:[%s4005 + $0x90] sm:$0xff]
        %v4025 = vld [vmem:[%s4005 + $0x98] sm:$0xff]
        %v4026 = vld [vmem:[%s4005 + $0xa0] sm:$0xff]
        %v4027 = vld [vmem:[%s4005 + $0xa8] sm:$0xff]
        %v4028 = vld [vmem:[%s4005 + $0xb0] sm:$0xff]
        %v4029 = vld [vmem:[%s4005 + $0xb8] sm:$0xff]
        %v4030 = vld [vmem:[%s4005 + $0xc0] sm:$0xff]
        %v4031 = vld [vmem:[%s4005 + $0xc8] sm:$0xff]
        %v4032 = vld [vmem:[%s4005 + $0xd0] sm:$0xff]
        %v4033 = vld [vmem:[%s4005 + $0xd8] sm:$0xff]
        %v4034 = vld [vmem:[%s4005 + $0xe0] sm:$0xff]
        %v4035 = vld [vmem:[%s4005 + $0xe8] sm:$0xff]
        %v4036 = vld [vmem:[%s4005 + $0xf0] sm:$0xff]
        %v4037 = vld [vmem:[%s4005 + $0xf8] sm:$0xff]
        %v4041 = vunpack.c.l.b16 %v3969
        %v4042 = vunpack.c.h.b16 %v3969
        %v4043 = vunpack.c.l.b16 %v3970
        %v4044 = vunpack.c.h.b16 %v3970
        %v4045 = vunpack.c.l.b16 %v4004
        %v4046 = vunpack.c.h.b16 %v4004
        %v4047 = vpack.c.b16 %v4043, %v4041
        %v4048 = vpack.c.b16 %v4044, %v4042
        %v4049 = vpack.c.b16 %v4045, %v4045
        %v4050 = vpack.c.b16 %v4046, %v4046
        %v4052 = vshrl.u32 %v4047, 16
        %v4054 = vshll.u32 %v4047, 16
        %v4056 = vrot.slane %v4054, 1
        %v4057 = vor.u32 %v4052, %v4056
        %v4059 = vshll.u32 %v4049, 16
        %v4061 = vrot.slane %v4059, 1
        %v4062 = vsel %vm648, %v4057, %v4061
        %v4064 = vshrl.u32 %v4048, 16
        %v4066 = vshll.u32 %v4048, 16
        %v4068 = vrot.slane %v4066, 1
        %v4069 = vor.u32 %v4064, %v4068
        %v4071 = vshll.u32 %v4050, 16
        %v4073 = vrot.slane %v4071, 1
        %v4074 = vsel %vm648, %v4069, %v4073
        %v4109 = vunpack.c.l.b16 %v4006
        %v4110 = vunpack.c.h.b16 %v4006
        %v4111 = vunpack.c.l.b16 %v4007
        %v4112 = vunpack.c.h.b16 %v4007
        %v4113 = vunpack.c.l.b16 %v4008
        %v4114 = vunpack.c.h.b16 %v4008
        %v4115 = vunpack.c.l.b16 %v4009
        %v4116 = vunpack.c.h.b16 %v4009
        %v4117 = vunpack.c.l.b16 %v4010
        %v4118 = vunpack.c.h.b16 %v4010
        %v4119 = vunpack.c.l.b16 %v4011
        %v4120 = vunpack.c.h.b16 %v4011
        %v4121 = vunpack.c.l.b16 %v4012
        %v4122 = vunpack.c.h.b16 %v4012
        %v4123 = vunpack.c.l.b16 %v4013
        %v4124 = vunpack.c.h.b16 %v4013
        %v4125 = vunpack.c.l.b16 %v4014
        %v4126 = vunpack.c.h.b16 %v4014
        %v4127 = vunpack.c.l.b16 %v4015
        %v4128 = vunpack.c.h.b16 %v4015
        %v4129 = vunpack.c.l.b16 %v4016
        %v4130 = vunpack.c.h.b16 %v4016
        %v4131 = vunpack.c.l.b16 %v4017
        %v4132 = vunpack.c.h.b16 %v4017
        %v4133 = vunpack.c.l.b16 %v4018
        %v4134 = vunpack.c.h.b16 %v4018
        %v4135 = vunpack.c.l.b16 %v4019
        %v4136 = vunpack.c.h.b16 %v4019
        %v4137 = vunpack.c.l.b16 %v4020
        %v4138 = vunpack.c.h.b16 %v4020
        %v4139 = vunpack.c.l.b16 %v4021
        %v4140 = vunpack.c.h.b16 %v4021
        %v4141 = vunpack.c.l.b16 %v4022
        %v4142 = vunpack.c.h.b16 %v4022
        %v4143 = vunpack.c.l.b16 %v4023
        %v4144 = vunpack.c.h.b16 %v4023
        %v4145 = vunpack.c.l.b16 %v4024
        %v4146 = vunpack.c.h.b16 %v4024
        %v4147 = vunpack.c.l.b16 %v4025
        %v4148 = vunpack.c.h.b16 %v4025
        %v4149 = vunpack.c.l.b16 %v4026
        %v4150 = vunpack.c.h.b16 %v4026
        %v4151 = vunpack.c.l.b16 %v4027
        %v4152 = vunpack.c.h.b16 %v4027
        %v4153 = vunpack.c.l.b16 %v4028
        %v4154 = vunpack.c.h.b16 %v4028
        %v4155 = vunpack.c.l.b16 %v4029
        %v4156 = vunpack.c.h.b16 %v4029
        %v4157 = vunpack.c.l.b16 %v4030
        %v4158 = vunpack.c.h.b16 %v4030
        %v4159 = vunpack.c.l.b16 %v4031
        %v4160 = vunpack.c.h.b16 %v4031
        %v4161 = vunpack.c.l.b16 %v4032
        %v4162 = vunpack.c.h.b16 %v4032
        %v4163 = vunpack.c.l.b16 %v4033
        %v4164 = vunpack.c.h.b16 %v4033
        %v4165 = vunpack.c.l.b16 %v4034
        %v4166 = vunpack.c.h.b16 %v4034
        %v4167 = vunpack.c.l.b16 %v4035
        %v4168 = vunpack.c.h.b16 %v4035
        %v4169 = vunpack.c.l.b16 %v4036
        %v4170 = vunpack.c.h.b16 %v4036
        %v4171 = vunpack.c.l.b16 %v4037
        %v4172 = vunpack.c.h.b16 %v4037
        %v4173 = vpack.c.b16 %v4111, %v4109
        %v4174 = vpack.c.b16 %v4112, %v4110
        %v4175 = vpack.c.b16 %v4115, %v4113
        %v4176 = vpack.c.b16 %v4116, %v4114
        %v4177 = vpack.c.b16 %v4119, %v4117
        %v4178 = vpack.c.b16 %v4120, %v4118
        %v4179 = vpack.c.b16 %v4123, %v4121
        %v4180 = vpack.c.b16 %v4124, %v4122
        %v4181 = vpack.c.b16 %v4127, %v4125
        %v4182 = vpack.c.b16 %v4128, %v4126
        %v4183 = vpack.c.b16 %v4131, %v4129
        %v4184 = vpack.c.b16 %v4132, %v4130
        %v4185 = vpack.c.b16 %v4135, %v4133
        %v4186 = vpack.c.b16 %v4136, %v4134
        %v4187 = vpack.c.b16 %v4139, %v4137
        %v4188 = vpack.c.b16 %v4140, %v4138
        %v4189 = vpack.c.b16 %v4143, %v4141
        %v4190 = vpack.c.b16 %v4144, %v4142
        %v4191 = vpack.c.b16 %v4147, %v4145
        %v4192 = vpack.c.b16 %v4148, %v4146
        %v4193 = vpack.c.b16 %v4151, %v4149
        %v4194 = vpack.c.b16 %v4152, %v4150
        %v4195 = vpack.c.b16 %v4155, %v4153
        %v4196 = vpack.c.b16 %v4156, %v4154
        %v4197 = vpack.c.b16 %v4159, %v4157
        %v4198 = vpack.c.b16 %v4160, %v4158
        %v4199 = vpack.c.b16 %v4163, %v4161
        %v4200 = vpack.c.b16 %v4164, %v4162
        %v4201 = vpack.c.b16 %v4167, %v4165
        %v4202 = vpack.c.b16 %v4168, %v4166
        %v4203 = vpack.c.b16 %v4171, %v4169
        %v4204 = vpack.c.b16 %v4172, %v4170
        %4237 = vmatpush.bf16.msra.mxu0 %v4187
        %4238 = vmatpush.bf16.msra.mxu0 %v4185
        %4239 = vmatpush.bf16.msra.mxu0 %v4183
        %4240 = vmatpush.bf16.msra.mxu0 %v4181
        %4241 = vmatpush.bf16.msra.mxu0 %v4179
        %4242 = vmatpush.bf16.msra.mxu0 %v4177
        %4243 = vmatpush.bf16.msra.mxu0 %v4175
        %4244 = vmatpush.bf16.msra.mxu0 %v4173
        %4245 = vmatmul.bf16.gmra.mxu0 %v4062
        %v4246 = vpop.f32.mrf.mxu0
        %v4247 = vadd.f32 0.0, %v4246
        %v4248 = vpop.f32.mrf.mxu0
        %v4249 = vadd.f32 0.0, %v4248
        %4250 = vdwg.mxu0
        %4251 = vmatpush.bf16.msra.mxu0 %v4203
        %4252 = vmatpush.bf16.msra.mxu0 %v4201
        %4253 = vmatpush.bf16.msra.mxu0 %v4199
        %4254 = vmatpush.bf16.msra.mxu0 %v4197
        %4255 = vmatpush.bf16.msra.mxu0 %v4195
        %4256 = vmatpush.bf16.msra.mxu0 %v4193
        %4257 = vmatpush.bf16.msra.mxu0 %v4191
        %4258 = vmatpush.bf16.msra.mxu0 %v4189
        %4259 = vmatmul.bf16.gmra.mxu0 %v4074
        %v4260 = vpop.f32.mrf.mxu0
        %v4261 = vadd.f32 %v4247, %v4260
        %v4262 = vpop.f32.mrf.mxu0
        %v4263 = vadd.f32 %v4249, %v4262
        %4264 = vdwg.mxu0
        %4265 = vmatpush.bf16.msra.mxu0 %v4188
        %4266 = vmatpush.bf16.msra.mxu0 %v4186
        %4267 = vmatpush.bf16.msra.mxu0 %v4184
        %4268 = vmatpush.bf16.msra.mxu0 %v4182
        %4269 = vmatpush.bf16.msra.mxu0 %v4180
        %4270 = vmatpush.bf16.msra.mxu0 %v4178
        %4271 = vmatpush.bf16.msra.mxu0 %v4176
        %4272 = vmatpush.bf16.msra.mxu0 %v4174
        %4273 = vmatmul.bf16.gmra.mxu0 %v4062
        %v4274 = vpop.f32.mrf.mxu0
        %v4275 = vadd.f32 0.0, %v4274
        %v4276 = vpop.f32.mrf.mxu0
        %v4277 = vadd.f32 0.0, %v4276
        %4278 = vdwg.mxu0
        %4279 = vmatpush.bf16.msra.mxu0 %v4204
        %4280 = vmatpush.bf16.msra.mxu0 %v4202
        %4281 = vmatpush.bf16.msra.mxu0 %v4200
        %4282 = vmatpush.bf16.msra.mxu0 %v4198
        %4283 = vmatpush.bf16.msra.mxu0 %v4196
        %4284 = vmatpush.bf16.msra.mxu0 %v4194
        %4285 = vmatpush.bf16.msra.mxu0 %v4192
        %4286 = vmatpush.bf16.msra.mxu0 %v4190
        %4287 = vmatmul.bf16.gmra.mxu0 %v4074
        %v4288 = vpop.f32.mrf.mxu0
        %v4289 = vadd.f32 %v4275, %v4288
        %v4290 = vpop.f32.mrf.mxu0
        %v4291 = vadd.f32 %v4277, %v4290
        %4292 = vdwg.mxu0
        %v4327 = vunpack.c.l.b16 %v3972
        %v4328 = vunpack.c.h.b16 %v3972
        %v4329 = vunpack.c.l.b16 %v3973
        %v4330 = vunpack.c.h.b16 %v3973
        %v4331 = vunpack.c.l.b16 %v3974
        %v4332 = vunpack.c.h.b16 %v3974
        %v4333 = vunpack.c.l.b16 %v3975
        %v4334 = vunpack.c.h.b16 %v3975
        %v4335 = vunpack.c.l.b16 %v3976
        %v4336 = vunpack.c.h.b16 %v3976
        %v4337 = vunpack.c.l.b16 %v3977
        %v4338 = vunpack.c.h.b16 %v3977
        %v4339 = vunpack.c.l.b16 %v3978
        %v4340 = vunpack.c.h.b16 %v3978
        %v4341 = vunpack.c.l.b16 %v3979
        %v4342 = vunpack.c.h.b16 %v3979
        %v4343 = vunpack.c.l.b16 %v3980
        %v4344 = vunpack.c.h.b16 %v3980
        %v4345 = vunpack.c.l.b16 %v3981
        %v4346 = vunpack.c.h.b16 %v3981
        %v4347 = vunpack.c.l.b16 %v3982
        %v4348 = vunpack.c.h.b16 %v3982
        %v4349 = vunpack.c.l.b16 %v3983
        %v4350 = vunpack.c.h.b16 %v3983
        %v4351 = vunpack.c.l.b16 %v3984
        %v4352 = vunpack.c.h.b16 %v3984
        %v4353 = vunpack.c.l.b16 %v3985
        %v4354 = vunpack.c.h.b16 %v3985
        %v4355 = vunpack.c.l.b16 %v3986
        %v4356 = vunpack.c.h.b16 %v3986
        %v4357 = vunpack.c.l.b16 %v3987
        %v4358 = vunpack.c.h.b16 %v3987
        %v4359 = vunpack.c.l.b16 %v3988
        %v4360 = vunpack.c.h.b16 %v3988
        %v4361 = vunpack.c.l.b16 %v3989
        %v4362 = vunpack.c.h.b16 %v3989
        %v4363 = vunpack.c.l.b16 %v3990
        %v4364 = vunpack.c.h.b16 %v3990
        %v4365 = vunpack.c.l.b16 %v3991
        %v4366 = vunpack.c.h.b16 %v3991
        %v4367 = vunpack.c.l.b16 %v3992
        %v4368 = vunpack.c.h.b16 %v3992
        %v4369 = vunpack.c.l.b16 %v3993
        %v4370 = vunpack.c.h.b16 %v3993
        %v4371 = vunpack.c.l.b16 %v3994
        %v4372 = vunpack.c.h.b16 %v3994
        %v4373 = vunpack.c.l.b16 %v3995
        %v4374 = vunpack.c.h.b16 %v3995
        %v4375 = vunpack.c.l.b16 %v3996
        %v4376 = vunpack.c.h.b16 %v3996
        %v4377 = vunpack.c.l.b16 %v3997
        %v4378 = vunpack.c.h.b16 %v3997
        %v4379 = vunpack.c.l.b16 %v3998
        %v4380 = vunpack.c.h.b16 %v3998
        %v4381 = vunpack.c.l.b16 %v3999
        %v4382 = vunpack.c.h.b16 %v3999
        %v4383 = vunpack.c.l.b16 %v4000
        %v4384 = vunpack.c.h.b16 %v4000
        %v4385 = vunpack.c.l.b16 %v4001
        %v4386 = vunpack.c.h.b16 %v4001
        %v4387 = vunpack.c.l.b16 %v4002
        %v4388 = vunpack.c.h.b16 %v4002
        %v4389 = vunpack.c.l.b16 %v4003
        %v4390 = vunpack.c.h.b16 %v4003
        %v4391 = vpack.c.b16 %v4329, %v4327
        %v4392 = vpack.c.b16 %v4330, %v4328
        %v4393 = vpack.c.b16 %v4333, %v4331
        %v4394 = vpack.c.b16 %v4334, %v4332
        %v4395 = vpack.c.b16 %v4337, %v4335
        %v4396 = vpack.c.b16 %v4338, %v4336
        %v4397 = vpack.c.b16 %v4341, %v4339
        %v4398 = vpack.c.b16 %v4342, %v4340
        %v4399 = vpack.c.b16 %v4345, %v4343
        %v4400 = vpack.c.b16 %v4346, %v4344
        %v4401 = vpack.c.b16 %v4349, %v4347
        %v4402 = vpack.c.b16 %v4350, %v4348
        %v4403 = vpack.c.b16 %v4353, %v4351
        %v4404 = vpack.c.b16 %v4354, %v4352
        %v4405 = vpack.c.b16 %v4357, %v4355
        %v4406 = vpack.c.b16 %v4358, %v4356
        %v4407 = vpack.c.b16 %v4361, %v4359
        %v4408 = vpack.c.b16 %v4362, %v4360
        %v4409 = vpack.c.b16 %v4365, %v4363
        %v4410 = vpack.c.b16 %v4366, %v4364
        %v4411 = vpack.c.b16 %v4369, %v4367
        %v4412 = vpack.c.b16 %v4370, %v4368
        %v4413 = vpack.c.b16 %v4373, %v4371
        %v4414 = vpack.c.b16 %v4374, %v4372
        %v4415 = vpack.c.b16 %v4377, %v4375
        %v4416 = vpack.c.b16 %v4378, %v4376
        %v4417 = vpack.c.b16 %v4381, %v4379
        %v4418 = vpack.c.b16 %v4382, %v4380
        %v4419 = vpack.c.b16 %v4385, %v4383
        %v4420 = vpack.c.b16 %v4386, %v4384
        %v4421 = vpack.c.b16 %v4389, %v4387
        %v4422 = vpack.c.b16 %v4390, %v4388
        %4455 = vmatpush.bf16.msra.mxu0 %v4405
        %4456 = vmatpush.bf16.msra.mxu0 %v4403
        %4457 = vmatpush.bf16.msra.mxu0 %v4401
        %4458 = vmatpush.bf16.msra.mxu0 %v4399
        %4459 = vmatpush.bf16.msra.mxu0 %v4397
        %4460 = vmatpush.bf16.msra.mxu0 %v4395
        %4461 = vmatpush.bf16.msra.mxu0 %v4393
        %4462 = vmatpush.bf16.msra.mxu0 %v4391
        %4463 = vmatmul.bf16.gmra.mxu0 %v4047
        %v4464 = vpop.f32.mrf.mxu0
        %v4465 = vadd.f32 %v4261, %v4464
        %v4466 = vpop.f32.mrf.mxu0
        %v4467 = vadd.f32 %v4263, %v4466
        %4468 = vdwg.mxu0
        %4469 = vmatpush.bf16.msra.mxu0 %v4421
        %4470 = vmatpush.bf16.msra.mxu0 %v4419
        %4471 = vmatpush.bf16.msra.mxu0 %v4417
        %4472 = vmatpush.bf16.msra.mxu0 %v4415
        %4473 = vmatpush.bf16.msra.mxu0 %v4413
        %4474 = vmatpush.bf16.msra.mxu0 %v4411
        %4475 = vmatpush.bf16.msra.mxu0 %v4409
        %4476 = vmatpush.bf16.msra.mxu0 %v4407
        %4477 = vmatmul.bf16.gmra.mxu0 %v4048
        %v4478 = vpop.f32.mrf.mxu0
        %v4479 = vadd.f32 %v4465, %v4478
        %v4480 = vpop.f32.mrf.mxu0
        %v4481 = vadd.f32 %v4467, %v4480
        %4482 = vdwg.mxu0
        %4483 = vmatpush.bf16.msra.mxu0 %v4406
        %4484 = vmatpush.bf16.msra.mxu0 %v4404
        %4485 = vmatpush.bf16.msra.mxu0 %v4402
        %4486 = vmatpush.bf16.msra.mxu0 %v4400
        %4487 = vmatpush.bf16.msra.mxu0 %v4398
        %4488 = vmatpush.bf16.msra.mxu0 %v4396
        %4489 = vmatpush.bf16.msra.mxu0 %v4394
        %4490 = vmatpush.bf16.msra.mxu0 %v4392
        %4491 = vmatmul.bf16.gmra.mxu0 %v4047
        %v4492 = vpop.f32.mrf.mxu0
        %v4493 = vadd.f32 %v4289, %v4492
        %v4494 = vpop.f32.mrf.mxu0
        %v4495 = vadd.f32 %v4291, %v4494
        %4496 = vdwg.mxu0
        %4497 = vmatpush.bf16.msra.mxu0 %v4422
        %4498 = vmatpush.bf16.msra.mxu0 %v4420
        %4499 = vmatpush.bf16.msra.mxu0 %v4418
        %4500 = vmatpush.bf16.msra.mxu0 %v4416
        %4501 = vmatpush.bf16.msra.mxu0 %v4414
        %4502 = vmatpush.bf16.msra.mxu0 %v4412
        %4503 = vmatpush.bf16.msra.mxu0 %v4410
        %4504 = vmatpush.bf16.msra.mxu0 %v4408
        %4505 = vmatmul.bf16.gmra.mxu0 %v4048
        %v4506 = vpop.f32.mrf.mxu0
        %v4507 = vadd.f32 %v4493, %v4506
        %v4508 = vpop.f32.mrf.mxu0
        %v4509 = vadd.f32 %v4495, %v4508
        %4510 = vdwg.mxu0
        %v4511 = vld [vmem:[#allocation2] sm:$0xee]
        %s4512 = scalar_lea.vmem %s1, 3584
        %v4513 = vld [vmem:[%s4512] sm:$0xff]
        %v4514 = vld [vmem:[%s4512 + $0x8] sm:$0xff]
        %v4515 = vld [vmem:[%s4512 + $0x10] sm:$0xff]
        %v4516 = vld [vmem:[%s4512 + $0x18] sm:$0xff]
        %v4517 = vld [vmem:[%s4512 + $0x20] sm:$0xff]
        %v4518 = vld [vmem:[%s4512 + $0x28] sm:$0xff]
        %v4519 = vld [vmem:[%s4512 + $0x30] sm:$0xff]
        %v4520 = vld [vmem:[%s4512 + $0x38] sm:$0xff]
        %v4521 = vld [vmem:[%s4512 + $0x40] sm:$0xff]
        %v4522 = vld [vmem:[%s4512 + $0x48] sm:$0xff]
        %v4523 = vld [vmem:[%s4512 + $0x50] sm:$0xff]
        %v4524 = vld [vmem:[%s4512 + $0x58] sm:$0xff]
        %v4525 = vld [vmem:[%s4512 + $0x60] sm:$0xff]
        %v4526 = vld [vmem:[%s4512 + $0x68] sm:$0xff]
        %v4527 = vld [vmem:[%s4512 + $0x70] sm:$0xff]
        %v4528 = vld [vmem:[%s4512 + $0x78] sm:$0xff]
        %v4529 = vld [vmem:[%s4512 + $0x80] sm:$0xff]
        %v4530 = vld [vmem:[%s4512 + $0x88] sm:$0xff]
        %v4531 = vld [vmem:[%s4512 + $0x90] sm:$0xff]
        %v4532 = vld [vmem:[%s4512 + $0x98] sm:$0xff]
        %v4533 = vld [vmem:[%s4512 + $0xa0] sm:$0xff]
        %v4534 = vld [vmem:[%s4512 + $0xa8] sm:$0xff]
        %v4535 = vld [vmem:[%s4512 + $0xb0] sm:$0xff]
        %v4536 = vld [vmem:[%s4512 + $0xb8] sm:$0xff]
        %v4537 = vld [vmem:[%s4512 + $0xc0] sm:$0xff]
        %v4538 = vld [vmem:[%s4512 + $0xc8] sm:$0xff]
        %v4539 = vld [vmem:[%s4512 + $0xd0] sm:$0xff]
        %v4540 = vld [vmem:[%s4512 + $0xd8] sm:$0xff]
        %v4541 = vld [vmem:[%s4512 + $0xe0] sm:$0xff]
        %v4542 = vld [vmem:[%s4512 + $0xe8] sm:$0xff]
        %v4543 = vld [vmem:[%s4512 + $0xf0] sm:$0xff]
        %v4544 = vld [vmem:[%s4512 + $0xf8] sm:$0xff]
        %v4546 = vunpack.c.l.b16 %v4511
        %v4547 = vunpack.c.h.b16 %v4511
        %v4548 = vpack.c.b16 %v4043, %v4546
        %v4549 = vpack.c.b16 %v4044, %v4547
        %v4550 = vrot.slane %v4548, 1
        %v4551 = vrot.slane %v4049, 1
        %v4552 = vsel %vm1148, %v4550, %v4551
        %v4553 = vrot.slane %v4549, 1
        %v4554 = vrot.slane %v4050, 1
        %v4555 = vsel %vm1148, %v4553, %v4554
        %v4590 = vunpack.c.l.b16 %v4513
        %v4591 = vunpack.c.h.b16 %v4513
        %v4592 = vunpack.c.l.b16 %v4514
        %v4593 = vunpack.c.h.b16 %v4514
        %v4594 = vunpack.c.l.b16 %v4515
        %v4595 = vunpack.c.h.b16 %v4515
        %v4596 = vunpack.c.l.b16 %v4516
        %v4597 = vunpack.c.h.b16 %v4516
        %v4598 = vunpack.c.l.b16 %v4517
        %v4599 = vunpack.c.h.b16 %v4517
        %v4600 = vunpack.c.l.b16 %v4518
        %v4601 = vunpack.c.h.b16 %v4518
        %v4602 = vunpack.c.l.b16 %v4519
        %v4603 = vunpack.c.h.b16 %v4519
        %v4604 = vunpack.c.l.b16 %v4520
        %v4605 = vunpack.c.h.b16 %v4520
        %v4606 = vunpack.c.l.b16 %v4521
        %v4607 = vunpack.c.h.b16 %v4521
        %v4608 = vunpack.c.l.b16 %v4522
        %v4609 = vunpack.c.h.b16 %v4522
        %v4610 = vunpack.c.l.b16 %v4523
        %v4611 = vunpack.c.h.b16 %v4523
        %v4612 = vunpack.c.l.b16 %v4524
        %v4613 = vunpack.c.h.b16 %v4524
        %v4614 = vunpack.c.l.b16 %v4525
        %v4615 = vunpack.c.h.b16 %v4525
        %v4616 = vunpack.c.l.b16 %v4526
        %v4617 = vunpack.c.h.b16 %v4526
        %v4618 = vunpack.c.l.b16 %v4527
        %v4619 = vunpack.c.h.b16 %v4527
        %v4620 = vunpack.c.l.b16 %v4528
        %v4621 = vunpack.c.h.b16 %v4528
        %v4622 = vunpack.c.l.b16 %v4529
        %v4623 = vunpack.c.h.b16 %v4529
        %v4624 = vunpack.c.l.b16 %v4530
        %v4625 = vunpack.c.h.b16 %v4530
        %v4626 = vunpack.c.l.b16 %v4531
        %v4627 = vunpack.c.h.b16 %v4531
        %v4628 = vunpack.c.l.b16 %v4532
        %v4629 = vunpack.c.h.b16 %v4532
        %v4630 = vunpack.c.l.b16 %v4533
        %v4631 = vunpack.c.h.b16 %v4533
        %v4632 = vunpack.c.l.b16 %v4534
        %v4633 = vunpack.c.h.b16 %v4534
        %v4634 = vunpack.c.l.b16 %v4535
        %v4635 = vunpack.c.h.b16 %v4535
        %v4636 = vunpack.c.l.b16 %v4536
        %v4637 = vunpack.c.h.b16 %v4536
        %v4638 = vunpack.c.l.b16 %v4537
        %v4639 = vunpack.c.h.b16 %v4537
        %v4640 = vunpack.c.l.b16 %v4538
        %v4641 = vunpack.c.h.b16 %v4538
        %v4642 = vunpack.c.l.b16 %v4539
        %v4643 = vunpack.c.h.b16 %v4539
        %v4644 = vunpack.c.l.b16 %v4540
        %v4645 = vunpack.c.h.b16 %v4540
        %v4646 = vunpack.c.l.b16 %v4541
        %v4647 = vunpack.c.h.b16 %v4541
        %v4648 = vunpack.c.l.b16 %v4542
        %v4649 = vunpack.c.h.b16 %v4542
        %v4650 = vunpack.c.l.b16 %v4543
        %v4651 = vunpack.c.h.b16 %v4543
        %v4652 = vunpack.c.l.b16 %v4544
        %v4653 = vunpack.c.h.b16 %v4544
        %v4654 = vpack.c.b16 %v4592, %v4590
        %v4655 = vpack.c.b16 %v4593, %v4591
        %v4656 = vpack.c.b16 %v4596, %v4594
        %v4657 = vpack.c.b16 %v4597, %v4595
        %v4658 = vpack.c.b16 %v4600, %v4598
        %v4659 = vpack.c.b16 %v4601, %v4599
        %v4660 = vpack.c.b16 %v4604, %v4602
        %v4661 = vpack.c.b16 %v4605, %v4603
        %v4662 = vpack.c.b16 %v4608, %v4606
        %v4663 = vpack.c.b16 %v4609, %v4607
        %v4664 = vpack.c.b16 %v4612, %v4610
        %v4665 = vpack.c.b16 %v4613, %v4611
        %v4666 = vpack.c.b16 %v4616, %v4614
        %v4667 = vpack.c.b16 %v4617, %v4615
        %v4668 = vpack.c.b16 %v4620, %v4618
        %v4669 = vpack.c.b16 %v4621, %v4619
        %v4670 = vpack.c.b16 %v4624, %v4622
        %v4671 = vpack.c.b16 %v4625, %v4623
        %v4672 = vpack.c.b16 %v4628, %v4626
        %v4673 = vpack.c.b16 %v4629, %v4627
        %v4674 = vpack.c.b16 %v4632, %v4630
        %v4675 = vpack.c.b16 %v4633, %v4631
        %v4676 = vpack.c.b16 %v4636, %v4634
        %v4677 = vpack.c.b16 %v4637, %v4635
        %v4678 = vpack.c.b16 %v4640, %v4638
        %v4679 = vpack.c.b16 %v4641, %v4639
        %v4680 = vpack.c.b16 %v4644, %v4642
        %v4681 = vpack.c.b16 %v4645, %v4643
        %v4682 = vpack.c.b16 %v4648, %v4646
        %v4683 = vpack.c.b16 %v4649, %v4647
        %v4684 = vpack.c.b16 %v4652, %v4650
        %v4685 = vpack.c.b16 %v4653, %v4651
        %4718 = vmatpush.bf16.msra.mxu0 %v4668
        %4719 = vmatpush.bf16.msra.mxu0 %v4666
        %4720 = vmatpush.bf16.msra.mxu0 %v4664
        %4721 = vmatpush.bf16.msra.mxu0 %v4662
        %4722 = vmatpush.bf16.msra.mxu0 %v4660
        %4723 = vmatpush.bf16.msra.mxu0 %v4658
        %4724 = vmatpush.bf16.msra.mxu0 %v4656
        %4725 = vmatpush.bf16.msra.mxu0 %v4654
        %4726 = vmatmul.bf16.gmra.mxu0 %v4552
        %v4727 = vpop.f32.mrf.mxu0
        %v4728 = vadd.f32 0.0, %v4727
        %v4729 = vpop.f32.mrf.mxu0
        %v4730 = vadd.f32 0.0, %v4729
        %4731 = vdwg.mxu0
        %4732 = vmatpush.bf16.msra.mxu0 %v4684
        %4733 = vmatpush.bf16.msra.mxu0 %v4682
        %4734 = vmatpush.bf16.msra.mxu0 %v4680
        %4735 = vmatpush.bf16.msra.mxu0 %v4678
        %4736 = vmatpush.bf16.msra.mxu0 %v4676
        %4737 = vmatpush.bf16.msra.mxu0 %v4674
        %4738 = vmatpush.bf16.msra.mxu0 %v4672
        %4739 = vmatpush.bf16.msra.mxu0 %v4670
        %4740 = vmatmul.bf16.gmra.mxu0 %v4555
        %v4741 = vpop.f32.mrf.mxu0
        %v4742 = vadd.f32 %v4728, %v4741
        %v4743 = vpop.f32.mrf.mxu0
        %v4744 = vadd.f32 %v4730, %v4743
        %4745 = vdwg.mxu0
        %4746 = vmatpush.bf16.msra.mxu0 %v4669
        %4747 = vmatpush.bf16.msra.mxu0 %v4667
        %4748 = vmatpush.bf16.msra.mxu0 %v4665
        %4749 = vmatpush.bf16.msra.mxu0 %v4663
        %4750 = vmatpush.bf16.msra.mxu0 %v4661
        %4751 = vmatpush.bf16.msra.mxu0 %v4659
        %4752 = vmatpush.bf16.msra.mxu0 %v4657
        %4753 = vmatpush.bf16.msra.mxu0 %v4655
        %4754 = vmatmul.bf16.gmra.mxu0 %v4552
        %v4755 = vpop.f32.mrf.mxu0
        %v4756 = vadd.f32 0.0, %v4755
        %v4757 = vpop.f32.mrf.mxu0
        %v4758 = vadd.f32 0.0, %v4757
        %4759 = vdwg.mxu0
        %4760 = vmatpush.bf16.msra.mxu0 %v4685
        %4761 = vmatpush.bf16.msra.mxu0 %v4683
        %4762 = vmatpush.bf16.msra.mxu0 %v4681
        %4763 = vmatpush.bf16.msra.mxu0 %v4679
        %4764 = vmatpush.bf16.msra.mxu0 %v4677
        %4765 = vmatpush.bf16.msra.mxu0 %v4675
        %4766 = vmatpush.bf16.msra.mxu0 %v4673
        %4767 = vmatpush.bf16.msra.mxu0 %v4671
        %4768 = vmatmul.bf16.gmra.mxu0 %v4555
        %v4769 = vpop.f32.mrf.mxu0
        %v4770 = vadd.f32 %v4756, %v4769
        %v4771 = vpop.f32.mrf.mxu0
        %v4772 = vadd.f32 %v4758, %v4771
        %4773 = vdwg.mxu0
        %v4774 = vadd.f32 %v4479, %v4742
        %v4775 = vadd.f32 %v4507, %v4770
        %v4776 = vadd.f32 %v4481, %v4744
        %v4777 = vadd.f32 %v4509, %v4772
        %s4778 = scalar_lea.vmem %s2, 8
        %v4779 = vld [vmem:[%s4778] sm:$0x3]
        %v4781 = vperm.slane %v4779, 0
        %v4782 = vperm.slane %v4779, 1
        %v4785 = vadd.f32 %v4774, %v4781
        %v4786 = vadd.f32 %v4775, %v4782
        %v4787 = vadd.f32 %v4776, %v4781
        %v4788 = vadd.f32 %v4777, %v4782
        %v4789 = vld [vmem:[%s4] sm:$0xff]
        %v4790 = vld [vmem:[%s4 + $0x8] sm:$0xff]
        %v4791 = vld [vmem:[%s4 + $0x10] sm:$0xff]
        %v4792 = vld [vmem:[%s4 + $0x18] sm:$0xff]
        %v4793 = vld [vmem:[%s4 + $0x20] sm:$0xff]
        %v4794 = vld [vmem:[%s4 + $0x28] sm:$0xff]
        %v4795 = vld [vmem:[%s4 + $0x30] sm:$0xff]
        %v4796 = vld [vmem:[%s4 + $0x38] sm:$0xff]
        %v4797 = vld [vmem:[%s4 + $0x40] sm:$0xff]
        %v4798 = vld [vmem:[%s4 + $0x48] sm:$0xff]
        %v4799 = vld [vmem:[%s4 + $0x50] sm:$0xff]
        %v4800 = vld [vmem:[%s4 + $0x58] sm:$0xff]
        %v4801 = vld [vmem:[%s4 + $0x60] sm:$0xff]
        %v4802 = vld [vmem:[%s4 + $0x68] sm:$0xff]
        %v4803 = vld [vmem:[%s4 + $0x70] sm:$0xff]
        %v4804 = vld [vmem:[%s4 + $0x78] sm:$0xff]
        %v4805 = vld [vmem:[%s4 + $0x80] sm:$0xff]
        %v4806 = vld [vmem:[%s4 + $0x88] sm:$0xff]
        %v4807 = vld [vmem:[%s4 + $0x90] sm:$0xff]
        %v4808 = vld [vmem:[%s4 + $0x98] sm:$0xff]
        %v4809 = vld [vmem:[%s4 + $0xa0] sm:$0xff]
        %v4810 = vld [vmem:[%s4 + $0xa8] sm:$0xff]
        %v4811 = vld [vmem:[%s4 + $0xb0] sm:$0xff]
        %v4812 = vld [vmem:[%s4 + $0xb8] sm:$0xff]
        %v4813 = vld [vmem:[%s4 + $0xc0] sm:$0xff]
        %v4814 = vld [vmem:[%s4 + $0xc8] sm:$0xff]
        %v4815 = vld [vmem:[%s4 + $0xd0] sm:$0xff]
        %v4816 = vld [vmem:[%s4 + $0xd8] sm:$0xff]
        %v4817 = vld [vmem:[%s4 + $0xe0] sm:$0xff]
        %v4818 = vld [vmem:[%s4 + $0xe8] sm:$0xff]
        %v4819 = vld [vmem:[%s4 + $0xf0] sm:$0xff]
        %v4820 = vld [vmem:[%s4 + $0xf8] sm:$0xff]
        %4821 = vmatpush.msra.mxu0 %v4804
        %4822 = vmatpush.msra.mxu0 %v4803
        %4823 = vmatpush.msra.mxu0 %v4802
        %4824 = vmatpush.msra.mxu0 %v4801
        %4825 = vmatpush.msra.mxu0 %v4800
        %4826 = vmatpush.msra.mxu0 %v4799
        %4827 = vmatpush.msra.mxu0 %v4798
        %4828 = vmatpush.msra.mxu0 %v4797
        %4829 = vmatpush.msra.mxu0 %v4796
        %4830 = vmatpush.msra.mxu0 %v4795
        %4831 = vmatpush.msra.mxu0 %v4794
        %4832 = vmatpush.msra.mxu0 %v4793
        %4833 = vmatpush.msra.mxu0 %v4792
        %4834 = vmatpush.msra.mxu0 %v4791
        %4835 = vmatpush.msra.mxu0 %v4790
        %4836 = vmatpush.msra.mxu0 %v4789
        %4837 = vmatmul.f32.gmra.mxu0 %v4785
        %v4838 = vpop.f32.mrf.mxu0
        %v4839 = vadd.f32 0.0, %v4838
        %4840 = vmatmul.f32.gmra.mxu0 %v4787
        %v4841 = vpop.f32.mrf.mxu0
        %v4842 = vadd.f32 0.0, %v4841
        %4843 = vdwg.mxu0
        %4844 = vmatpush.msra.mxu0 %v4820
        %4845 = vmatpush.msra.mxu0 %v4819
        %4846 = vmatpush.msra.mxu0 %v4818
        %4847 = vmatpush.msra.mxu0 %v4817
        %4848 = vmatpush.msra.mxu0 %v4816
        %4849 = vmatpush.msra.mxu0 %v4815
        %4850 = vmatpush.msra.mxu0 %v4814
        %4851 = vmatpush.msra.mxu0 %v4813
        %4852 = vmatpush.msra.mxu0 %v4812
        %4853 = vmatpush.msra.mxu0 %v4811
        %4854 = vmatpush.msra.mxu0 %v4810
        %4855 = vmatpush.msra.mxu0 %v4809
        %4856 = vmatpush.msra.mxu0 %v4808
        %4857 = vmatpush.msra.mxu0 %v4807
        %4858 = vmatpush.msra.mxu0 %v4806
        %4859 = vmatpush.msra.mxu0 %v4805
        %4860 = vmatmul.f32.gmra.mxu0 %v4786
        %v4861 = vpop.f32.mrf.mxu0
        %v4862 = vadd.f32 %v4839, %v4861
        %4863 = vmatmul.f32.gmra.mxu0 %v4788
        %v4864 = vpop.f32.mrf.mxu0
        %v4865 = vadd.f32 %v4842, %v4864
        %4866 = vdwg.mxu0
        %vm4867 = vcmask 130048
        %4868 = vst.msk [vmem:[#allocation3 + $0x3] sm:$0xff] %vm4867, %v4862
        %4869 = vst.msk [vmem:[#allocation3 + $0xb] sm:$0xff] %vm4867, %v4865
        %v4870 = vsel %vm4867, %v4785, -inf
        %4871 = vmax.xlane.f32.xlu0 %v4870
        %v4872 = vpop.xlane.xlu0 %4871
        %v4873 = vsel %vm4867, %v4787, -inf
        %4874 = vmax.xlane.f32.xlu0 %v4873
        %v4875 = vpop.xlane.xlu0 %4874
        %vm4876 = vcmask 138368
        %4877 = vst.msk [vmem:[#allocation3 + $0x3] sm:$0xff] %vm4876, %v4872
        %4878 = vst.msk [vmem:[#allocation3 + $0xb] sm:$0xff] %vm4876, %v4875
        %vm4879 = vcmask 261248
        %v4880 = vsel %vm4879, %v4785, -inf
        %4881 = vmax.xlane.f32.xlu0 %v4880
        %v4882 = vpop.xlane.xlu0 %4881
        %v4883 = vsel %vm4879, %v4787, -inf
        %4884 = vmax.xlane.f32.xlu0 %v4883
        %v4885 = vpop.xlane.xlu0 %4884
        %vm4886 = vcmask 146568
        %4887 = vst.msk [vmem:[#allocation3 + $0x3] sm:$0xff] %vm4886, %v4882
        %4888 = vst.msk [vmem:[#allocation3 + $0xb] sm:$0xff] %vm4886, %v4885
        %vm4889 = vcmask 392448
        %v4890 = vsel %vm4889, %v4785, -inf
        %4891 = vmax.xlane.f32.xlu0 %v4890
        %v4892 = vpop.xlane.xlu0 %4891
        %v4893 = vsel %vm4889, %v4787, -inf
        %4894 = vmax.xlane.f32.xlu0 %v4893
        %v4895 = vpop.xlane.xlu0 %4894
        %vm4896 = vcmask 154768
        %4897 = vst.msk [vmem:[#allocation3 + $0x3] sm:$0xff] %vm4896, %v4892
        %4898 = vst.msk [vmem:[#allocation3 + $0xb] sm:$0xff] %vm4896, %v4895
        %vm4899 = vcmask 523648
        %v4900 = vsel %vm4899, %v4785, -inf
        %4901 = vmax.xlane.f32.xlu0 %v4900
        %v4902 = vpop.xlane.xlu0 %4901
        %v4903 = vsel %vm4899, %v4787, -inf
        %4904 = vmax.xlane.f32.xlu0 %v4903
        %v4905 = vpop.xlane.xlu0 %4904
        %vm4906 = vcmask 162968
        %4907 = vst.msk [vmem:[#allocation3 + $0x3] sm:$0xff] %vm4906, %v4902
        %4908 = vst.msk [vmem:[#allocation3 + $0xb] sm:$0xff] %vm4906, %v4905
        %vm4909 = vcmask 654848
        %v4910 = vsel %vm4909, %v4785, -inf
        %4911 = vmax.xlane.f32.xlu0 %v4910
        %v4912 = vpop.xlane.xlu0 %4911
        %v4913 = vsel %vm4909, %v4787, -inf
        %4914 = vmax.xlane.f32.xlu0 %v4913
        %v4915 = vpop.xlane.xlu0 %4914
        %vm4916 = vcmask 171168
        %4917 = vst.msk [vmem:[#allocation3 + $0x3] sm:$0xff] %vm4916, %v4912
        %4918 = vst.msk [vmem:[#allocation3 + $0xb] sm:$0xff] %vm4916, %v4915
        %vm4919 = vcmask 786048
        %v4920 = vsel %vm4919, %v4785, -inf
        %4921 = vmax.xlane.f32.xlu0 %v4920
        %v4922 = vpop.xlane.xlu0 %4921
        %v4923 = vsel %vm4919, %v4787, -inf
        %4924 = vmax.xlane.f32.xlu0 %v4923
        %v4925 = vpop.xlane.xlu0 %4924
        %vm4926 = vcmask 179368
        %4927 = vst.msk [vmem:[#allocation3 + $0x3] sm:$0xff] %vm4926, %v4922
        %4928 = vst.msk [vmem:[#allocation3 + $0xb] sm:$0xff] %vm4926, %v4925
        %vm4929 = vcmask 917248
        %v4930 = vsel %vm4929, %v4785, -inf
        %4931 = vmax.xlane.f32.xlu0 %v4930
        %v4932 = vpop.xlane.xlu0 %4931
        %v4933 = vsel %vm4929, %v4787, -inf
        %4934 = vmax.xlane.f32.xlu0 %v4933
        %v4935 = vpop.xlane.xlu0 %4934
        %vm4936 = vcmask 187568
        %4937 = vst.msk [vmem:[#allocation3 + $0x3] sm:$0xff] %vm4936, %v4932
        %4938 = vst.msk [vmem:[#allocation3 + $0xb] sm:$0xff] %vm4936, %v4935
        %vm4939 = vcmask 1048448
        %v4940 = vsel %vm4939, %v4785, -inf
        %4941 = vmax.xlane.f32.xlu0 %v4940
        %v4942 = vpop.xlane.xlu0 %4941
        %v4943 = vsel %vm4939, %v4787, -inf
        %4944 = vmax.xlane.f32.xlu0 %v4943
        %v4945 = vpop.xlane.xlu0 %4944
        %vm4946 = vcmask 195768
        %4947 = vst.msk [vmem:[#allocation3 + $0x3] sm:$0xff] %vm4946, %v4942
        %4948 = vst.msk [vmem:[#allocation3 + $0xb] sm:$0xff] %vm4946, %v4945
        %v4949 = vsel %vm4867, %v4786, -inf
        %4950 = vmax.xlane.f32.xlu0 %v4949
        %v4951 = vpop.xlane.xlu0 %4950
        %v4952 = vsel %vm4867, %v4788, -inf
        %4953 = vmax.xlane.f32.xlu0 %v4952
        %v4954 = vpop.xlane.xlu0 %4953
        %vm4955 = vcmask 203968
        %4956 = vst.msk [vmem:[#allocation3 + $0x3] sm:$0xff] %vm4955, %v4951
        %4957 = vst.msk [vmem:[#allocation3 + $0xb] sm:$0xff] %vm4955, %v4954
        %v4958 = vsel %vm4879, %v4786, -inf
        %4959 = vmax.xlane.f32.xlu0 %v4958
        %v4960 = vpop.xlane.xlu0 %4959
        %v4961 = vsel %vm4879, %v4788, -inf
        %4962 = vmax.xlane.f32.xlu0 %v4961
        %v4963 = vpop.xlane.xlu0 %4962
        %vm4964 = vcmask 212168
        %4965 = vst.msk [vmem:[#allocation3 + $0x3] sm:$0xff] %vm4964, %v4960
        %4966 = vst.msk [vmem:[#allocation3 + $0xb] sm:$0xff] %vm4964, %v4963
        %v4967 = vsel %vm4889, %v4786, -inf
        %4968 = vmax.xlane.f32.xlu0 %v4967
        %v4969 = vpop.xlane.xlu0 %4968
        %v4970 = vsel %vm4889, %v4788, -inf
        %4971 = vmax.xlane.f32.xlu0 %v4970
        %v4972 = vpop.xlane.xlu0 %4971
        %vm4973 = vcmask 220368
        %4974 = vst.msk [vmem:[#allocation3 + $0x3] sm:$0xff] %vm4973, %v4969
        %4975 = vst.msk [vmem:[#allocation3 + $0xb] sm:$0xff] %vm4973, %v4972
        %v4976 = vsel %vm4899, %v4786, -inf
        %4977 = vmax.xlane.f32.xlu0 %v4976
        %v4978 = vpop.xlane.xlu0 %4977
        %v4979 = vsel %vm4899, %v4788, -inf
        %4980 = vmax.xlane.f32.xlu0 %v4979
        %v4981 = vpop.xlane.xlu0 %4980
        %vm4982 = vcmask 228568
        %4983 = vst.msk [vmem:[#allocation3 + $0x3] sm:$0xff] %vm4982, %v4978
        %4984 = vst.msk [vmem:[#allocation3 + $0xb] sm:$0xff] %vm4982, %v4981
        %v4985 = vsel %vm4909, %v4786, -inf
        %4986 = vmax.xlane.f32.xlu0 %v4985
        %v4987 = vpop.xlane.xlu0 %4986
        %v4988 = vsel %vm4909, %v4788, -inf
        %4989 = vmax.xlane.f32.xlu0 %v4988
        %v4990 = vpop.xlane.xlu0 %4989
        %vm4991 = vcmask 236768
        %4992 = vst.msk [vmem:[#allocation3 + $0x3] sm:$0xff] %vm4991, %v4987
        %4993 = vst.msk [vmem:[#allocation3 + $0xb] sm:$0xff] %vm4991, %v4990
        %v4994 = vsel %vm4919, %v4786, -inf
        %4995 = vmax.xlane.f32.xlu0 %v4994
        %v4996 = vpop.xlane.xlu0 %4995
        %v4997 = vsel %vm4919, %v4788, -inf
        %4998 = vmax.xlane.f32.xlu0 %v4997
        %v4999 = vpop.xlane.xlu0 %4998
        %vm5000 = vcmask 244968
        %5001 = vst.msk [vmem:[#allocation3 + $0x3] sm:$0xff] %vm5000, %v4996
        %5002 = vst.msk [vmem:[#allocation3 + $0xb] sm:$0xff] %vm5000, %v4999
        %v5003 = vsel %vm4929, %v4786, -inf
        %5004 = vmax.xlane.f32.xlu0 %v5003
        %v5005 = vpop.xlane.xlu0 %5004
        %v5006 = vsel %vm4929, %v4788, -inf
        %5007 = vmax.xlane.f32.xlu0 %v5006
        %v5008 = vpop.xlane.xlu0 %5007
        %vm5009 = vcmask 253168
        %5010 = vst.msk [vmem:[#allocation3 + $0x3] sm:$0xff] %vm5009, %v5005
        %5011 = vst.msk [vmem:[#allocation3 + $0xb] sm:$0xff] %vm5009, %v5008
        %v5012 = vsel %vm4939, %v4786, -inf
        %5013 = vmax.xlane.f32.xlu0 %v5012
        %v5014 = vpop.xlane.xlu0 %5013
        %v5015 = vsel %vm4939, %v4788, -inf
        %5016 = vmax.xlane.f32.xlu0 %v5015
        %v5017 = vpop.xlane.xlu0 %5016
        %vm5018 = vcmask 261368
        %5019 = vst.msk [vmem:[#allocation3 + $0x3] sm:$0xff] %vm5018, %v5014
        %5020 = vst.msk [vmem:[#allocation3 + $0xb] sm:$0xff] %vm5018, %v5017
        %v5021 = vld [vmem:[#allocation3] sm:$0xff]
        %v5022 = vld [vmem:[#allocation3 + $0x8] sm:$0xff]
        %v5023 = vld [vmem:[%s3] sm:$0xff]
        %v5024 = vld [vmem:[%s3 + $0x8] sm:$0xff]
        %v5025 = vld [vmem:[%s3 + $0x10] sm:$0xff]
        %v5026 = vld [vmem:[%s3 + $0x18] sm:$0xff]
        %v5027 = vld [vmem:[#allocation3 + $0x1] sm:$0xff]
        %v5028 = vld [vmem:[#allocation3 + $0x9] sm:$0xff]
        %s5029 = scalar_lea.vmem %s3, 32
        %v5030 = vld [vmem:[%s5029] sm:$0xff]
        %v5031 = vld [vmem:[%s5029 + $0x8] sm:$0xff]
        %v5032 = vld [vmem:[%s5029 + $0x10] sm:$0xff]
        %v5033 = vld [vmem:[%s5029 + $0x18] sm:$0xff]
        %v5035 = vsel %vm513, %v5027, 0
        %v5038 = vsel %vm513, %v5028, 0
        %5040 = vmatpush.msra.mxu0 0.0
        %5041 = vmatpush.msra.mxu0 0.0
        %5042 = vmatpush.msra.mxu0 0.0
        %5043 = vmatpush.msra.mxu0 0.0
        %5044 = vmatpush.msra.mxu0 0.0
        %5045 = vmatpush.msra.mxu0 0.0
        %5046 = vmatpush.msra.mxu0 0.0
        %5047 = vmatpush.msra.mxu0 0.0
        %5048 = vmatpush.msra.mxu0 0.0
        %5049 = vmatpush.msra.mxu0 0.0
        %5050 = vmatpush.msra.mxu0 0.0
        %5051 = vmatpush.msra.mxu0 0.0
        %5052 = vmatpush.msra.mxu0 %v5033
        %5053 = vmatpush.msra.mxu0 %v5032
        %5054 = vmatpush.msra.mxu0 %v5031
        %5055 = vmatpush.msra.mxu0 %v5030
        %5056 = vmatmul.f32.gmra.mxu0 %v5035
        %v5057 = vpop.f32.mrf.mxu0
        %v5058 = vadd.f32 0.0, %v5057
        %5059 = vmatmul.f32.gmra.mxu0 %v5038
        %v5060 = vpop.f32.mrf.mxu0
        %v5061 = vadd.f32 0.0, %v5060
        %5062 = vdwg.mxu0
        %v5064 = vsel %vm513, %v5021, 0
        %v5067 = vsel %vm513, %v5022, 0
        %5069 = vmatpush.msra.mxu0 0.0
        %5070 = vmatpush.msra.mxu0 0.0
        %5071 = vmatpush.msra.mxu0 0.0
        %5072 = vmatpush.msra.mxu0 0.0
        %5073 = vmatpush.msra.mxu0 0.0
        %5074 = vmatpush.msra.mxu0 0.0
        %5075 = vmatpush.msra.mxu0 0.0
        %5076 = vmatpush.msra.mxu0 0.0
        %5077 = vmatpush.msra.mxu0 0.0
        %5078 = vmatpush.msra.mxu0 0.0
        %5079 = vmatpush.msra.mxu0 0.0
        %5080 = vmatpush.msra.mxu0 0.0
        %5081 = vmatpush.msra.mxu0 %v5026
        %5082 = vmatpush.msra.mxu0 %v5025
        %5083 = vmatpush.msra.mxu0 %v5024
        %5084 = vmatpush.msra.mxu0 %v5023
        %5085 = vmatmul.f32.gmra.mxu0 %v5064
        %v5086 = vpop.f32.mrf.mxu0
        %v5087 = vadd.f32 %v5058, %v5086
        %5088 = vmatmul.f32.gmra.mxu0 %v5067
        %v5089 = vpop.f32.mrf.mxu0
        %v5090 = vadd.f32 %v5061, %v5089
        %5091 = vdwg.mxu0
        %v5092 = vld [vmem:[#allocation3 + $0x2] sm:$0xff]
        %v5093 = vld [vmem:[#allocation3 + $0xa] sm:$0xff]
        %s5094 = scalar_lea.vmem %s3, 64
        %v5095 = vld [vmem:[%s5094] sm:$0xff]
        %v5096 = vld [vmem:[%s5094 + $0x8] sm:$0xff]
        %v5097 = vld [vmem:[%s5094 + $0x10] sm:$0xff]
        %v5098 = vld [vmem:[%s5094 + $0x18] sm:$0xff]
        %v5100 = vsel %vm513, %v5092, 0
        %v5103 = vsel %vm513, %v5093, 0
        %5105 = vmatpush.msra.mxu0 0.0
        %5106 = vmatpush.msra.mxu0 0.0
        %5107 = vmatpush.msra.mxu0 0.0
        %5108 = vmatpush.msra.mxu0 0.0
        %5109 = vmatpush.msra.mxu0 0.0
        %5110 = vmatpush.msra.mxu0 0.0
        %5111 = vmatpush.msra.mxu0 0.0
        %5112 = vmatpush.msra.mxu0 0.0
        %5113 = vmatpush.msra.mxu0 0.0
        %5114 = vmatpush.msra.mxu0 0.0
        %5115 = vmatpush.msra.mxu0 0.0
        %5116 = vmatpush.msra.mxu0 0.0
        %5117 = vmatpush.msra.mxu0 %v5098
        %5118 = vmatpush.msra.mxu0 %v5097
        %5119 = vmatpush.msra.mxu0 %v5096
        %5120 = vmatpush.msra.mxu0 %v5095
        %5121 = vmatmul.f32.gmra.mxu0 %v5100
        %v5122 = vpop.f32.mrf.mxu0
        %v5123 = vadd.f32 0.0, %v5122
        %5124 = vmatmul.f32.gmra.mxu0 %v5103
        %v5125 = vpop.f32.mrf.mxu0
        %v5126 = vadd.f32 0.0, %v5125
        %5127 = vdwg.mxu0
        %v5128 = vadd.f32 %v5087, %v5123
        %v5129 = vadd.f32 %v5090, %v5126
        %v5130 = vld [vmem:[#allocation3 + $0x3] sm:$0xff]
        %v5131 = vld [vmem:[#allocation3 + $0xb] sm:$0xff]
        %s5132 = scalar_lea.vmem %s3, 96
        %v5133 = vld [vmem:[%s5132] sm:$0xff]
        %v5134 = vld [vmem:[%s5132 + $0x8] sm:$0xff]
        %v5135 = vld [vmem:[%s5132 + $0x10] sm:$0xff]
        %v5136 = vld [vmem:[%s5132 + $0x18] sm:$0xff]
        %v5138 = vsel %vm513, %v5130, 0
        %v5141 = vsel %vm513, %v5131, 0
        %5143 = vmatpush.msra.mxu0 0.0
        %5144 = vmatpush.msra.mxu0 0.0
        %5145 = vmatpush.msra.mxu0 0.0
        %5146 = vmatpush.msra.mxu0 0.0
        %5147 = vmatpush.msra.mxu0 0.0
        %5148 = vmatpush.msra.mxu0 0.0
        %5149 = vmatpush.msra.mxu0 0.0
        %5150 = vmatpush.msra.mxu0 0.0
        %5151 = vmatpush.msra.mxu0 0.0
        %5152 = vmatpush.msra.mxu0 0.0
        %5153 = vmatpush.msra.mxu0 0.0
        %5154 = vmatpush.msra.mxu0 0.0
        %5155 = vmatpush.msra.mxu0 %v5136
        %5156 = vmatpush.msra.mxu0 %v5135
        %5157 = vmatpush.msra.mxu0 %v5134
        %5158 = vmatpush.msra.mxu0 %v5133
        %5159 = vmatmul.f32.gmra.mxu0 %v5138
        %v5160 = vpop.f32.mrf.mxu0
        %v5161 = vadd.f32 0.0, %v5160
        %5162 = vmatmul.f32.gmra.mxu0 %v5141
        %v5163 = vpop.f32.mrf.mxu0
        %v5164 = vadd.f32 0.0, %v5163
        %5165 = vdwg.mxu0
        %v5166 = vadd.f32 %v5128, %v5161
        %v5167 = vadd.f32 %v5129, %v5164
        %v5168 = vld [vmem:[#allocation3 + $0x4] sm:$0xff]
        %v5169 = vld [vmem:[#allocation3 + $0xc] sm:$0xff]
        %s5170 = scalar_lea.vmem %s3, 128
        %v5171 = vld [vmem:[%s5170] sm:$0xff]
        %v5172 = vld [vmem:[%s5170 + $0x8] sm:$0xff]
        %v5173 = vld [vmem:[%s5170 + $0x10] sm:$0xff]
        %v5174 = vld [vmem:[%s5170 + $0x18] sm:$0xff]
        %v5176 = vsel %vm513, %v5168, 0
        %v5179 = vsel %vm513, %v5169, 0
        %5181 = vmatpush.msra.mxu0 0.0
        %5182 = vmatpush.msra.mxu0 0.0
        %5183 = vmatpush.msra.mxu0 0.0
        %5184 = vmatpush.msra.mxu0 0.0
        %5185 = vmatpush.msra.mxu0 0.0
        %5186 = vmatpush.msra.mxu0 0.0
        %5187 = vmatpush.msra.mxu0 0.0
        %5188 = vmatpush.msra.mxu0 0.0
        %5189 = vmatpush.msra.mxu0 0.0
        %5190 = vmatpush.msra.mxu0 0.0
        %5191 = vmatpush.msra.mxu0 0.0
        %5192 = vmatpush.msra.mxu0 0.0
        %5193 = vmatpush.msra.mxu0 %v5174
        %5194 = vmatpush.msra.mxu0 %v5173
        %5195 = vmatpush.msra.mxu0 %v5172
        %5196 = vmatpush.msra.mxu0 %v5171
        %5197 = vmatmul.f32.gmra.mxu0 %v5176
        %v5198 = vpop.f32.mrf.mxu0
        %v5199 = vadd.f32 0.0, %v5198
        %5200 = vmatmul.f32.gmra.mxu0 %v5179
        %v5201 = vpop.f32.mrf.mxu0
        %v5202 = vadd.f32 0.0, %v5201
        %5203 = vdwg.mxu0
        %v5204 = vadd.f32 %v5166, %v5199
        %v5205 = vadd.f32 %v5167, %v5202
        %v5206 = vld [vmem:[#allocation3 + $0x5] sm:$0xff]
        %v5207 = vld [vmem:[#allocation3 + $0xd] sm:$0xff]
        %s5208 = scalar_lea.vmem %s3, 160
        %v5209 = vld [vmem:[%s5208] sm:$0xff]
        %v5210 = vld [vmem:[%s5208 + $0x8] sm:$0xff]
        %v5211 = vld [vmem:[%s5208 + $0x10] sm:$0xff]
        %v5212 = vld [vmem:[%s5208 + $0x18] sm:$0xff]
        %v5214 = vsel %vm513, %v5206, 0
        %v5217 = vsel %vm513, %v5207, 0
        %5219 = vmatpush.msra.mxu0 0.0
        %5220 = vmatpush.msra.mxu0 0.0
        %5221 = vmatpush.msra.mxu0 0.0
        %5222 = vmatpush.msra.mxu0 0.0
        %5223 = vmatpush.msra.mxu0 0.0
        %5224 = vmatpush.msra.mxu0 0.0
        %5225 = vmatpush.msra.mxu0 0.0
        %5226 = vmatpush.msra.mxu0 0.0
        %5227 = vmatpush.msra.mxu0 0.0
        %5228 = vmatpush.msra.mxu0 0.0
        %5229 = vmatpush.msra.mxu0 0.0
        %5230 = vmatpush.msra.mxu0 0.0
        %5231 = vmatpush.msra.mxu0 %v5212
        %5232 = vmatpush.msra.mxu0 %v5211
        %5233 = vmatpush.msra.mxu0 %v5210
        %5234 = vmatpush.msra.mxu0 %v5209
        %5235 = vmatmul.f32.gmra.mxu0 %v5214
        %v5236 = vpop.f32.mrf.mxu0
        %v5237 = vadd.f32 0.0, %v5236
        %5238 = vmatmul.f32.gmra.mxu0 %v5217
        %v5239 = vpop.f32.mrf.mxu0
        %v5240 = vadd.f32 0.0, %v5239
        %5241 = vdwg.mxu0
        %v5242 = vadd.f32 %v5204, %v5237
        %v5243 = vadd.f32 %v5205, %v5240
        %v5244 = vld [vmem:[#allocation3 + $0x6] sm:$0xff]
        %v5245 = vld [vmem:[#allocation3 + $0xe] sm:$0xff]
        %s5246 = scalar_lea.vmem %s3, 192
        %v5247 = vld [vmem:[%s5246] sm:$0xff]
        %v5248 = vld [vmem:[%s5246 + $0x8] sm:$0xff]
        %v5249 = vld [vmem:[%s5246 + $0x10] sm:$0xff]
        %v5250 = vld [vmem:[%s5246 + $0x18] sm:$0xff]
        %v5252 = vsel %vm513, %v5244, 0
        %v5255 = vsel %vm513, %v5245, 0
        %5257 = vmatpush.msra.mxu0 0.0
        %5258 = vmatpush.msra.mxu0 0.0
        %5259 = vmatpush.msra.mxu0 0.0
        %5260 = vmatpush.msra.mxu0 0.0
        %5261 = vmatpush.msra.mxu0 0.0
        %5262 = vmatpush.msra.mxu0 0.0
        %5263 = vmatpush.msra.mxu0 0.0
        %5264 = vmatpush.msra.mxu0 0.0
        %5265 = vmatpush.msra.mxu0 0.0
        %5266 = vmatpush.msra.mxu0 0.0
        %5267 = vmatpush.msra.mxu0 0.0
        %5268 = vmatpush.msra.mxu0 0.0
        %5269 = vmatpush.msra.mxu0 %v5250
        %5270 = vmatpush.msra.mxu0 %v5249
        %5271 = vmatpush.msra.mxu0 %v5248
        %5272 = vmatpush.msra.mxu0 %v5247
        %5273 = vmatmul.f32.gmra.mxu0 %v5252
        %v5274 = vpop.f32.mrf.mxu0
        %v5275 = vadd.f32 0.0, %v5274
        %5276 = vmatmul.f32.gmra.mxu0 %v5255
        %v5277 = vpop.f32.mrf.mxu0
        %v5278 = vadd.f32 0.0, %v5277
        %5279 = vdwg.mxu0
        %v5280 = vadd.f32 %v5242, %v5275
        %v5281 = vadd.f32 %v5243, %v5278
        %v5282 = vxor.u32 %v5280, 2147483648
        %v5283 = vxor.u32 %v5281, 2147483648
        %v5284 = vmul.f32 %v5282, 1.442695
        %v5285 = vpow.pop %v5284
        %v5286 = vmul.f32 %v5283, 1.442695
        %v5287 = vpow.pop %v5286
        %v5288 = vadd.f32 %v5285, 1.0
        %v5289 = vadd.f32 %v5287, 1.0
        %v5290 = vrcp.pop %v5288
        %v5291 = vmul.f32 %v5288, %v5290
        %v5292 = vsub.f32 1.0, %v5291
        %v5293 = vmul.f32 %v5290, %v5292
        %v5294 = vadd.f32 %v5290, %v5293
        %vm5295 = vweird.f32 %v5288
        %vm5296 = vweird.f32 %v5290
        %vm5297 = vmor %vm5295, %vm5296
        %v5298 = vsel %vm5297, %v5290, %v5294
        %v5299 = vand.u32 2147483647, %v5288
        %vm5300 = vcmp.eq.f32.partialorder %v5299, 8.507059e+37
        %v5301 = vand.u32 %v5288, 2147483648
        %v5302 = vor.u32 1.1754944e-38, %v5301
        %v5303 = vsel %vm5300, %v5302, %v5298
        %v5304 = vmul.f32 1.0, %v5303
        %v5305 = vrcp.pop %v5289
        %v5306 = vmul.f32 %v5289, %v5305
        %v5307 = vsub.f32 1.0, %v5306
        %v5308 = vmul.f32 %v5305, %v5307
        %v5309 = vadd.f32 %v5305, %v5308
        %vm5310 = vweird.f32 %v5289
        %vm5311 = vweird.f32 %v5305
        %vm5312 = vmor %vm5310, %vm5311
        %v5313 = vsel %vm5312, %v5305, %v5309
        %v5314 = vand.u32 2147483647, %v5289
        %vm5315 = vcmp.eq.f32.partialorder %v5314, 8.507059e+37
        %v5316 = vand.u32 %v5289, 2147483648
        %v5317 = vor.u32 1.1754944e-38, %v5316
        %v5318 = vsel %vm5315, %v5317, %v5313
        %v5319 = vmul.f32 1.0, %v5318
        %v5320 = vld [vmem:[%s5] sm:$0xff]
        %v5321 = vld [vmem:[%s5 + $0x8] sm:$0xff]
        %v5322 = vld [vmem:[%s5 + $0x10] sm:$0xff]
        %v5323 = vld [vmem:[%s5 + $0x18] sm:$0xff]
        %v5325 = vsel %vm4867, %v5304, 0
        %v5328 = vsel %vm4867, %v5319, 0
        %5330 = vmatpush.msra.mxu0 0.0
        %5331 = vmatpush.msra.mxu0 0.0
        %5332 = vmatpush.msra.mxu0 0.0
        %5333 = vmatpush.msra.mxu0 0.0
        %5334 = vmatpush.msra.mxu0 0.0
        %5335 = vmatpush.msra.mxu0 0.0
        %5336 = vmatpush.msra.mxu0 0.0
        %5337 = vmatpush.msra.mxu0 0.0
        %5338 = vmatpush.msra.mxu0 0.0
        %5339 = vmatpush.msra.mxu0 0.0
        %5340 = vmatpush.msra.mxu0 0.0
        %5341 = vmatpush.msra.mxu0 0.0
        %5342 = vmatpush.msra.mxu0 0.0
        %5343 = vmatpush.msra.mxu0 0.0
        %5344 = vmatpush.msra.mxu0 %v5322
        %5345 = vmatpush.msra.mxu0 %v5320
        %5346 = vmatmul.f32.gmra.mxu0 %v5325
        %v5347 = vpop.f32.mrf.mxu0
        %v5348 = vadd.f32 0.0, %v5347
        %5349 = vmatmul.f32.gmra.mxu0 %v5328
        %v5350 = vpop.f32.mrf.mxu0
        %v5351 = vadd.f32 0.0, %v5350
        %5352 = vdwg.mxu0
        %5353 = vmatpush.msra.mxu0 0.0
        %5354 = vmatpush.msra.mxu0 0.0
        %5355 = vmatpush.msra.mxu0 0.0
        %5356 = vmatpush.msra.mxu0 0.0
        %5357 = vmatpush.msra.mxu0 0.0
        %5358 = vmatpush.msra.mxu0 0.0
        %5359 = vmatpush.msra.mxu0 0.0
        %5360 = vmatpush.msra.mxu0 0.0
        %5361 = vmatpush.msra.mxu0 0.0
        %5362 = vmatpush.msra.mxu0 0.0
        %5363 = vmatpush.msra.mxu0 0.0
        %5364 = vmatpush.msra.mxu0 0.0
        %5365 = vmatpush.msra.mxu0 0.0
        %5366 = vmatpush.msra.mxu0 0.0
        %5367 = vmatpush.msra.mxu0 %v5323
        %5368 = vmatpush.msra.mxu0 %v5321
        %5369 = vmatmul.f32.gmra.mxu0 %v5325
        %v5370 = vpop.f32.mrf.mxu0
        %v5371 = vadd.f32 0.0, %v5370
        %5372 = vmatmul.f32.gmra.mxu0 %v5328
        %v5373 = vpop.f32.mrf.mxu0
        %v5374 = vadd.f32 0.0, %v5373
        %5375 = vdwg.mxu0
        %v5376 = vmul.f32 %v4785, %v5348
        %v5377 = vmul.f32 %v4786, %v5371
        %v5378 = vmul.f32 %v4787, %v5351
        %v5379 = vmul.f32 %v4788, %v5374
        %v5380 = vadd.f32 %v3959, %v5376
        %v5381 = vadd.f32 %v3960, %v5377
        %v5382 = vadd.f32 %v3961, %v5378
        %v5383 = vadd.f32 %v3962, %v5379
        %v5384 = vadd.f32 %v5380, %v5382
        %v5385 = vrot.slane %v5384, 4
        %v5386 = vadd.f32 %v5384, %v5385
        %v5387 = vrot.slane %v5386, 2
        %v5388 = vadd.f32 %v5386, %v5387
        %v5389 = vrot.slane %v5388, 1
        %v5390 = vadd.f32 %v5388, %v5389
        %v5391 = vadd.f32 %v5381, %v5383
        %v5392 = vrot.slane %v5391, 4
        %v5393 = vadd.f32 %v5391, %v5392
        %v5394 = vrot.slane %v5393, 2
        %v5395 = vadd.f32 %v5393, %v5394
        %v5396 = vrot.slane %v5395, 1
        %v5397 = vadd.f32 %v5395, %v5396
        %v5398 = vld [vmem:[%s6] sm:$0xff]
        %v5399 = vld [vmem:[%s6 + $0x8] sm:$0xff]
        %v5400 = vld [vmem:[%s6 + $0x10] sm:$0xff]
        %v5401 = vld [vmem:[%s6 + $0x18] sm:$0xff]
        %v5402 = vld [vmem:[%s6 + $0x20] sm:$0xff]
        %v5403 = vld [vmem:[%s6 + $0x28] sm:$0xff]
        %v5404 = vld [vmem:[%s6 + $0x30] sm:$0xff]
        %v5405 = vld [vmem:[%s6 + $0x38] sm:$0xff]
        %v5406 = vld [vmem:[%s6 + $0x40] sm:$0xff]
        %v5407 = vld [vmem:[%s6 + $0x48] sm:$0xff]
        %v5408 = vld [vmem:[%s6 + $0x50] sm:$0xff]
        %v5409 = vld [vmem:[%s6 + $0x58] sm:$0xff]
        %v5410 = vld [vmem:[%s6 + $0x60] sm:$0xff]
        %v5411 = vld [vmem:[%s6 + $0x68] sm:$0xff]
        %v5412 = vld [vmem:[%s6 + $0x70] sm:$0xff]
        %v5413 = vld [vmem:[%s6 + $0x78] sm:$0xff]
        %v5414 = vld [vmem:[%s6 + $0x80] sm:$0xff]
        %v5415 = vld [vmem:[%s6 + $0x88] sm:$0xff]
        %v5416 = vld [vmem:[%s6 + $0x90] sm:$0xff]
        %v5417 = vld [vmem:[%s6 + $0x98] sm:$0xff]
        %v5418 = vld [vmem:[%s6 + $0xa0] sm:$0xff]
        %v5419 = vld [vmem:[%s6 + $0xa8] sm:$0xff]
        %v5420 = vld [vmem:[%s6 + $0xb0] sm:$0xff]
        %v5421 = vld [vmem:[%s6 + $0xb8] sm:$0xff]
        %v5422 = vld [vmem:[%s6 + $0xc0] sm:$0xff]
        %v5423 = vld [vmem:[%s6 + $0xc8] sm:$0xff]
        %v5424 = vld [vmem:[%s6 + $0xd0] sm:$0xff]
        %v5425 = vld [vmem:[%s6 + $0xd8] sm:$0xff]
        %v5426 = vld [vmem:[%s6 + $0xe0] sm:$0xff]
        %v5427 = vld [vmem:[%s6 + $0xe8] sm:$0xff]
        %v5428 = vld [vmem:[%s6 + $0xf0] sm:$0xff]
        %v5429 = vld [vmem:[%s6 + $0xf8] sm:$0xff]
        %5430 = vmatpush.msra.mxu0 %v5413
        %5431 = vmatpush.msra.mxu0 %v5412
        %5432 = vmatpush.msra.mxu0 %v5411
        %5433 = vmatpush.msra.mxu0 %v5410
        %5434 = vmatpush.msra.mxu0 %v5409
        %5435 = vmatpush.msra.mxu0 %v5408
        %5436 = vmatpush.msra.mxu0 %v5407
        %5437 = vmatpush.msra.mxu0 %v5406
        %5438 = vmatpush.msra.mxu0 %v5405
        %5439 = vmatpush.msra.mxu0 %v5404
        %5440 = vmatpush.msra.mxu0 %v5403
        %5441 = vmatpush.msra.mxu0 %v5402
        %5442 = vmatpush.msra.mxu0 %v5401
        %5443 = vmatpush.msra.mxu0 %v5400
        %5444 = vmatpush.msra.mxu0 %v5399
        %5445 = vmatpush.msra.mxu0 %v5398
        %5446 = vmatmul.f32.gmra.mxu0 %v5390
        %v5447 = vpop.f32.mrf.mxu0
        %v5448 = vadd.f32 0.0, %v5447
        %5449 = vdwg.mxu0
        %5450 = vmatpush.msra.mxu0 %v5429
        %5451 = vmatpush.msra.mxu0 %v5428
        %5452 = vmatpush.msra.mxu0 %v5427
        %5453 = vmatpush.msra.mxu0 %v5426
        %5454 = vmatpush.msra.mxu0 %v5425
        %5455 = vmatpush.msra.mxu0 %v5424
        %5456 = vmatpush.msra.mxu0 %v5423
        %5457 = vmatpush.msra.mxu0 %v5422
        %5458 = vmatpush.msra.mxu0 %v5421
        %5459 = vmatpush.msra.mxu0 %v5420
        %5460 = vmatpush.msra.mxu0 %v5419
        %5461 = vmatpush.msra.mxu0 %v5418
        %5462 = vmatpush.msra.mxu0 %v5417
        %5463 = vmatpush.msra.mxu0 %v5416
        %5464 = vmatpush.msra.mxu0 %v5415
        %5465 = vmatpush.msra.mxu0 %v5414
        %5466 = vmatmul.f32.gmra.mxu0 %v5397
        %v5467 = vpop.f32.mrf.mxu0
        %v5468 = vadd.f32 %v5448, %v5467
        %5469 = vdwg.mxu0
        %v5470 = vmul.f32 %v5468, 0.00390625
        %v5471 = vld [vmem:[%s8] sm:$0xff]
        %v5472 = vld [vmem:[%s8 + $0x8] sm:$0xff]
        %v5473 = vld [vmem:[%s9] sm:$0x1]
        %v5475 = vsel %vm4867, %v5470, 0
        %5477 = vmatpush.msra.mxu0 0.0
        %5478 = vmatpush.msra.mxu0 0.0
        %5479 = vmatpush.msra.mxu0 0.0
        %5480 = vmatpush.msra.mxu0 0.0
        %5481 = vmatpush.msra.mxu0 0.0
        %5482 = vmatpush.msra.mxu0 0.0
        %5483 = vmatpush.msra.mxu0 0.0
        %5484 = vmatpush.msra.mxu0 0.0
        %5485 = vmatpush.msra.mxu0 0.0
        %5486 = vmatpush.msra.mxu0 0.0
        %5487 = vmatpush.msra.mxu0 0.0
        %5488 = vmatpush.msra.mxu0 0.0
        %5489 = vmatpush.msra.mxu0 0.0
        %5490 = vmatpush.msra.mxu0 0.0
        %5491 = vmatpush.msra.mxu0 %v5472
        %5492 = vmatpush.msra.mxu0 %v5471
        %5493 = vmatmul.f32.gmra.mxu0 %v5475
        %v5494 = vpop.f32.mrf.mxu0
        %v5495 = vadd.f32 %v5473, %v5494
        %5496 = vdwg.mxu0
        %v5497 = vld [vmem:[%s10] sm:$0xff]
        %v5498 = vld [vmem:[%s10 + $0x8] sm:$0xff]
        %v5499 = vld [vmem:[%s10 + $0x10] sm:$0xff]
        %v5500 = vld [vmem:[%s10 + $0x18] sm:$0xff]
        %v5501 = vld [vmem:[%s11] sm:$0x1]
        %v5503 = vsel %vm513, %v5495, 0
        %5505 = vmatpush.msra.mxu0 0.0
        %5506 = vmatpush.msra.mxu0 0.0
        %5507 = vmatpush.msra.mxu0 0.0
        %5508 = vmatpush.msra.mxu0 0.0
        %5509 = vmatpush.msra.mxu0 0.0
        %5510 = vmatpush.msra.mxu0 0.0
        %5511 = vmatpush.msra.mxu0 0.0
        %5512 = vmatpush.msra.mxu0 0.0
        %5513 = vmatpush.msra.mxu0 0.0
        %5514 = vmatpush.msra.mxu0 0.0
        %5515 = vmatpush.msra.mxu0 0.0
        %5516 = vmatpush.msra.mxu0 0.0
        %5517 = vmatpush.msra.mxu0 %v5500
        %5518 = vmatpush.msra.mxu0 %v5499
        %5519 = vmatpush.msra.mxu0 %v5498
        %5520 = vmatpush.msra.mxu0 %v5497
        %5521 = vmatmul.f32.gmra.mxu0 %v5503
        %v5522 = vpop.f32.mrf.mxu0
        %v5523 = vadd.f32 %v5501, %v5522
        %5524 = vdwg.mxu0
        %v5525 = vld [vmem:[%s12] sm:$0xff]
        %v5526 = vld [vmem:[%s12 + $0x8] sm:$0xff]
        %v5527 = vld [vmem:[%s12 + $0x10] sm:$0xff]
        %v5528 = vld [vmem:[%s12 + $0x18] sm:$0xff]
        %v5529 = vld [vmem:[%s13] sm:$0x1]
        %5530 = vmatpush.msra.mxu0 0.0
        %5531 = vmatpush.msra.mxu0 0.0
        %5532 = vmatpush.msra.mxu0 0.0
        %5533 = vmatpush.msra.mxu0 0.0
        %5534 = vmatpush.msra.mxu0 0.0
        %5535 = vmatpush.msra.mxu0 0.0
        %5536 = vmatpush.msra.mxu0 0.0
        %5537 = vmatpush.msra.mxu0 0.0
        %5538 = vmatpush.msra.mxu0 0.0
        %5539 = vmatpush.msra.mxu0 0.0
        %5540 = vmatpush.msra.mxu0 0.0
        %5541 = vmatpush.msra.mxu0 0.0
        %5542 = vmatpush.msra.mxu0 %v5528
        %5543 = vmatpush.msra.mxu0 %v5527
        %5544 = vmatpush.msra.mxu0 %v5526
        %5545 = vmatpush.msra.mxu0 %v5525
        %5546 = vmatmul.f32.gmra.mxu0 %v5503
        %v5547 = vpop.f32.mrf.mxu0
        %v5548 = vadd.f32 %v5529, %v5547
        %5549 = vdwg.mxu0
        %v5550 = vmax.f32 %v5523, %v5548
        %v5551 = vsub.f32 %v5523, %v5550
        %v5552 = vmul.f32 %v5551, 1.442695
        %v5553 = vpow.pop %v5552
        %v5554 = vsub.f32 %v5548, %v5550
        %v5555 = vmul.f32 %v5554, 1.442695
        %v5556 = vpow.pop %v5555
        %v5557 = vadd.f32 %v5553, %v5556
        %v5558 = vrcp.pop %v5557
        %v5559 = vmul.f32 %v5553, %v5558
        %v5560 = vld [vmem:[%s7] sm:$0xff]
        %v5561 = vld [vmem:[%s7 + $0x8] sm:$0xff]
        %v5562 = vld [vmem:[%s7 + $0x10] sm:$0xff]
        %v5563 = vld [vmem:[%s7 + $0x18] sm:$0xff]
        %v5565 = vsel %vm4867, %v5559, 0
        %5567 = vmatpush.msra.mxu0 0.0
        %5568 = vmatpush.msra.mxu0 0.0
        %5569 = vmatpush.msra.mxu0 0.0
        %5570 = vmatpush.msra.mxu0 0.0
        %5571 = vmatpush.msra.mxu0 0.0
        %5572 = vmatpush.msra.mxu0 0.0
        %5573 = vmatpush.msra.mxu0 0.0
        %5574 = vmatpush.msra.mxu0 0.0
        %5575 = vmatpush.msra.mxu0 0.0
        %5576 = vmatpush.msra.mxu0 0.0
        %5577 = vmatpush.msra.mxu0 0.0
        %5578 = vmatpush.msra.mxu0 0.0
        %5579 = vmatpush.msra.mxu0 0.0
        %5580 = vmatpush.msra.mxu0 0.0
        %5581 = vmatpush.msra.mxu0 %v5562
        %5582 = vmatpush.msra.mxu0 %v5560
        %5583 = vmatmul.f32.gmra.mxu0 %v5565
        %v5584 = vpop.f32.mrf.mxu0
        %v5585 = vadd.f32 0.0, %v5584
        %5586 = vdwg.mxu0
        %5587 = vmatpush.msra.mxu0 0.0
        %5588 = vmatpush.msra.mxu0 0.0
        %5589 = vmatpush.msra.mxu0 0.0
        %5590 = vmatpush.msra.mxu0 0.0
        %5591 = vmatpush.msra.mxu0 0.0
        %5592 = vmatpush.msra.mxu0 0.0
        %5593 = vmatpush.msra.mxu0 0.0
        %5594 = vmatpush.msra.mxu0 0.0
        %5595 = vmatpush.msra.mxu0 0.0
        %5596 = vmatpush.msra.mxu0 0.0
        %5597 = vmatpush.msra.mxu0 0.0
        %5598 = vmatpush.msra.mxu0 0.0
        %5599 = vmatpush.msra.mxu0 0.0
        %5600 = vmatpush.msra.mxu0 0.0
        %5601 = vmatpush.msra.mxu0 %v5563
        %5602 = vmatpush.msra.mxu0 %v5561
        %5603 = vmatmul.f32.gmra.mxu0 %v5565
        %v5604 = vpop.f32.mrf.mxu0
        %v5605 = vadd.f32 0.0, %v5604
        %5606 = vdwg.mxu0
        %v5607 = vmul.f32 %v5556, %v5558
        %v5609 = vsel %vm4867, %v5607, 0
        %5611 = vmatpush.msra.mxu0 0.0
        %5612 = vmatpush.msra.mxu0 0.0
        %5613 = vmatpush.msra.mxu0 0.0
        %5614 = vmatpush.msra.mxu0 0.0
        %5615 = vmatpush.msra.mxu0 0.0
        %5616 = vmatpush.msra.mxu0 0.0
        %5617 = vmatpush.msra.mxu0 0.0
        %5618 = vmatpush.msra.mxu0 0.0
        %5619 = vmatpush.msra.mxu0 0.0
        %5620 = vmatpush.msra.mxu0 0.0
        %5621 = vmatpush.msra.mxu0 0.0
        %5622 = vmatpush.msra.mxu0 0.0
        %5623 = vmatpush.msra.mxu0 0.0
        %5624 = vmatpush.msra.mxu0 0.0
        %5625 = vmatpush.msra.mxu0 %v5562
        %5626 = vmatpush.msra.mxu0 %v5560
        %5627 = vmatmul.f32.gmra.mxu0 %v5609
        %v5628 = vpop.f32.mrf.mxu0
        %v5629 = vadd.f32 0.0, %v5628
        %5630 = vdwg.mxu0
        %5631 = vmatpush.msra.mxu0 0.0
        %5632 = vmatpush.msra.mxu0 0.0
        %5633 = vmatpush.msra.mxu0 0.0
        %5634 = vmatpush.msra.mxu0 0.0
        %5635 = vmatpush.msra.mxu0 0.0
        %5636 = vmatpush.msra.mxu0 0.0
        %5637 = vmatpush.msra.mxu0 0.0
        %5638 = vmatpush.msra.mxu0 0.0
        %5639 = vmatpush.msra.mxu0 0.0
        %5640 = vmatpush.msra.mxu0 0.0
        %5641 = vmatpush.msra.mxu0 0.0
        %5642 = vmatpush.msra.mxu0 0.0
        %5643 = vmatpush.msra.mxu0 0.0
        %5644 = vmatpush.msra.mxu0 0.0
        %5645 = vmatpush.msra.mxu0 %v5563
        %5646 = vmatpush.msra.mxu0 %v5561
        %5647 = vmatmul.f32.gmra.mxu0 %v5609
        %v5648 = vpop.f32.mrf.mxu0
        %v5649 = vadd.f32 0.0, %v5648
        %5650 = vdwg.mxu0
        %v5651 = vperm.slane %v5585, 0
        %v5652 = vperm.slane %v5605, 0
        %v5653 = vmul.f32 %v3959, %v5651
        %v5654 = vmul.f32 %v3960, %v5652
        %v5655 = vmul.f32 %v3961, %v5651
        %v5656 = vmul.f32 %v3962, %v5652
        %v5657 = vperm.slane %v5629, 0
        %v5658 = vperm.slane %v5649, 0
        %v5659 = vmul.f32 %v5376, %v5657
        %v5660 = vmul.f32 %v5377, %v5658
        %v5661 = vmul.f32 %v5378, %v5657
        %v5662 = vmul.f32 %v5379, %v5658
        %v5663 = vadd.f32 %v5653, %v5659
        %v5664 = vadd.f32 %v5654, %v5660
        %v5665 = vadd.f32 %v5655, %v5661
        %v5666 = vadd.f32 %v5656, %v5662
        %v5667 = vadd.f32 %v5663, %v518
        %v5668 = vadd.f32 %v5664, %v519
        %v5669 = vadd.f32 %v5665, %v520
        %v5670 = vadd.f32 %v5666, %v521
        %5671 = vst [vmem:[%s508] sm:$0xff] %v5667
        %5672 = vst [vmem:[%s508 + $0x8] sm:$0xff] %v5668
        %5673 = vst [vmem:[%s508 + $0x10] sm:$0xff] %v5669
        %5674 = vst [vmem:[%s508 + $0x18] sm:$0xff] %v5670
        %p5675 = scmp.lt.s32.totalorder %s27, 1
        %s5676 = scalar_select %p5675, %s27, 1
        %s5677 = smul.addr %s5676, 4
        %s5678 = smul.addr %s5677, 8
        %s5679 = scalar_lea.vmem %s15, %s5678
        // Predicated region
        $region85: #{egrab_forward.1} parent=79 // pred_check
          %p5680 = pneg %p365
        $region86: #{egrab_forward.1} parent=79 // pred_check_branch
          %5682 = sbr.rel (%p5680) target = $region88
        $region87: #{egrab_forward.1} parent=79 // pred_region
          _
        $region88: #{egrab_forward.1} parent=79 // pred_fallthru
          _
      $region80: #{egrab_forward.1} parent=5 // pred_fallthru
        _
      %p5683 = scmp.le.s32.totalorder 2, %s22
      // Predicated region
      $region89: #{egrab_forward.1} parent=5 // pred_check
        %p5684 = pneg %p5683
      $region90: #{egrab_forward.1} parent=5 // pred_check_branch
        %5686 = sbr.rel (%p5684) target = $region92
      $region91: #{egrab_forward.1} parent=5 // pred_region
        %s5687 = ssub.s32 %s22, 2
        // Predicated region
        $region93: #{egrab_forward.1} parent=91 // pred_check
          %p5688 = pneg %p371
        $region94: #{egrab_forward.1} parent=91 // pred_check_branch
          %5690 = sbr.rel (%p5688) target = $region96
        $region95: #{egrab_forward.1} parent=91 // pred_region
          %p5691 = scmp.lt.s32.totalorder %s28, 1
          %s5692 = scalar_select %p5691, %s28, 1
          %s5693 = smul.addr %s5692, 4
          %s5694 = smul.addr %s5693, 8
          %s5695 = scalar_lea.vmem %s15, %s5694
        $region96: #{egrab_forward.1} parent=91 // pred_fallthru
          _
      $region92: #{egrab_forward.1} parent=5 // pred_fallthru
        _
    $region6: #{egrab_forward.1} parent=1 // loop_footer
      %s26 = sadd.s32 1, %s22
    $region7: #{egrab_forward.1} parent=1 // loop_footer_branch
      %21 = sbr.rel target = $region3
    $region8: #{egrab_forward.1} parent=1 // loop_exit
      _
    %5696 = vsyncpa [#allocation5], 1
    %s5697 = scalar_lea.sflag [#allocation5], 1
    %5698 = vsyncpa %s5697, 1

</llo_original>
